<compile_context>
chip_gen: v7x
topology: tpu7x:2x2x1
jax: 0.10.0
libtpu: 0.0.40
codegen_flags: <defaults>
</compile_context>

<pallas_src>
import functools

import jax
import jax.numpy as jnp
from jax.experimental import pallas as pl
from jax.experimental.pallas import tpu as pltpu

# ---------------------------------------------------------------------------
# Model hyper-parameters (small, consistent with the module defaults' roles)
# ---------------------------------------------------------------------------
NODE_FEAT = 8      # node_feat_size
EDGE_FEAT = 6      # edge_feat_size
GRAPH_FEAT = 32    # graph_feat_size
NUM_LAYERS = 2
NUM_TIMESTEPS = 2
N_TASKS = 1
# dropout = 0.0  -> identity (no-op)

LEAKY_SLOPE = 0.01  # nn.LeakyReLU default
_SUBLANE = 8
_LANE = 128


def _round_up(x, m):
    return (x + m - 1) // m * m


# ---------------------------------------------------------------------------
# In-kernel math helpers
# ---------------------------------------------------------------------------
def _dot(a, b):
    return jnp.dot(a, b, preferred_element_type=jnp.float32)


def _dotT(a, b):
    """Contract over the LEADING axis of `a` (a: (K, M), b: (K, N) -> (M, N)).
    Avoids materializing / passing explicit transposes of the incidence matrices."""
    return jax.lax.dot_general(a, b, (((0,), (0,)), ((), ())),
                               preferred_element_type=jnp.float32)


def _leaky_relu(x):
    return jnp.where(x > 0, x, LEAKY_SLOPE * x)


def _elu(x):
    # clamp the exp argument so the (discarded) positive branch cannot overflow
    return jnp.where(x > 0, x, jnp.exp(jnp.minimum(x, 0.0)) - 1.0)


# ---------------------------------------------------------------------------
# The single fused forward kernel
# ---------------------------------------------------------------------------
def _forward_kernel(node_ref, edge_ref, src_ref, dst_ref, gm_ref, w_ref, out_ref,
                    *, layout, num_layers, num_timesteps):
    gf = GRAPH_FEAT

    def P(name):
        off, r, c = layout[name]           # static Python ints -> static ref view
        return w_ref[off:off + r, :c]

    def linear(x, name, act=False):
        y = _dot(x, P(name + ".w")) + P(name + ".b")
        return _leaky_relu(y) if act else y

    def cat_linear(a, b, name, act=False):
        # Linear over concat([a, b], dim=1) as ONE matmul (weights stacked along K).
        return linear(jnp.concatenate([a, b], axis=1), name, act)

    def gru(x, h, name):
        # nn.GRUCell with packed weight (D+H, 4H): columns = [r | z | n_in | n_hid].
        g = _dot(jnp.concatenate([x, h], axis=1), P(name + ".w")) + P(name + ".b")
        r = jax.nn.sigmoid(g[:, :gf])
        z = jax.nn.sigmoid(g[:, gf:2 * gf])
        n = jnp.tanh(g[:, 2 * gf:3 * gf] + r * g[:, 3 * gf:4 * gf])
        return (1.0 - z) * n + z * h

    nf = node_ref[...]        # (Vp, NODE_FEAT)
    ef = edge_ref[...]        # (Ep, EDGE_FEAT)
    src1h = src_ref[...]      # (Ep, Vp)  one-hot: edge -> source node
    dst1h = dst_ref[...]      # (Ep, Vp)  one-hot: edge -> destination node
    gmask = gm_ref[...]       # (Gp, Vp)  one-hot: graph -> member nodes

    def edge_softmax_ctx(logits, vals):
        """DGL edge_softmax over incoming edges + weighted scatter-add, then ELU.
        Global-max shift (softmax is shift invariant; LeakyReLU-bounded logits),
        denominator applied AFTER the scatter -> no broadcast-back matmul."""
        m = jnp.max(logits, axis=0, keepdims=True)            # (1, 1)
        p = jnp.exp(logits - m)                                # (E, 1)
        num = _dotT(dst1h, p * vals)                           # (V, F)
        den = _dotT(dst1h, p)                                  # (V, 1)
        inv = pl.reciprocal(jnp.where(den > 0.0, den, 1.0), approx=True)
        return _elu(num * inv)

    def graph_softmax_ctx(logits, vals):
        """dgl.softmax_nodes per graph + weighted dgl.sum_nodes, then ELU."""
        m = jnp.max(logits, axis=0, keepdims=True)             # (1, 1)
        p = jnp.exp(logits - m)                                 # (V, 1)
        num = _dot(gmask, p * vals)                             # (G, F)
        den = _dot(gmask, p)                                    # (G, 1)
        inv = pl.reciprocal(jnp.where(den > 0.0, den, 1.0), approx=True)
        return _elu(num * inv)

    # ---- AttentiveFPGNN.GetContext -----------------------------------------
    hv_new = linear(nf, "init.proj_node", act=True)                       # (V, GF)
    src_hv = _dot(src1h, nf)                                              # (E, NF)
    he1 = cat_linear(src_hv, ef, "init.proj_edge1", act=True)             # (E, GF)
    dst_hv_new = _dot(dst1h, hv_new)                                      # (E, GF)
    logits = cat_linear(dst_hv_new, he1, "init.proj_edge2", act=True)     # (E, 1)
    evals = linear(he1, "init.edge_transform")                            # (E, GF)
    ctx = edge_softmax_ctx(logits, evals)                                 # (V, GF)
    node_h = jnp.maximum(gru(ctx, hv_new, "init.gru"), 0.0)               # (V, GF)

    # ---- AttentiveFPGNN: remaining GNN layers ------------------------------
    for l in range(num_layers - 1):
        pre = "layer%d." % l
        src_h = _dot(src1h, node_h)                                       # (E, GF)
        dst_h = _dot(dst1h, node_h)                                       # (E, GF)
        logits = cat_linear(dst_h, src_h, pre + "proj_edge", act=True)    # (E, 1)
        hv_proj = linear(node_h, pre + "proj_node")                       # (V, GF)
        src_hv_proj = _dot(src1h, hv_proj)                                # (E, GF)
        ctx = edge_softmax_ctx(logits, src_hv_proj)                       # (V, GF)
        node_h = jnp.maximum(gru(ctx, node_h, pre + "gru"), 0.0)          # (V, GF)

    # ---- AttentiveFPReadout -------------------------------------------------
    g_feats = _dot(gmask, node_h)                                         # (G, GF)
    for t in range(num_timesteps):
        pre = "read%d." % t
        bfeat = _dotT(gmask, jnp.maximum(g_feats, 0.0))                   # (V, GF)
        z = cat_linear(bfeat, node_h, pre + "logit", act=True)            # (V, 1)
        hv_p = linear(node_h, pre + "proj")                               # (V, GF)
        context = graph_softmax_ctx(z, hv_p)                              # (G, GF)
        # DGL order: g_feats = ReLU(GRUCell(ELU(pooled), g_feats))
        g_feats = jnp.maximum(gru(context, g_feats, pre + "gru"), 0.0)

    # ---- predict head (Dropout(0) is identity) ------------------------------
    out_ref[...] = linear(g_feats, "predict")


# ---------------------------------------------------------------------------
# Wrapper: pad to sublane multiples, pack params into one slab, one pallas_call
# ---------------------------------------------------------------------------
def _pack_params(params):
    """Pack every parameter tensor into one (rows, 128) f32 slab (one DMA, one
    double-buffered VMEM allocation) and record static (offset, rows, cols) views."""
    layout = {}
    blocks = []
    off = 0
    for name, arr in params.items():
        r, c = arr.shape
        rp = _round_up(r, _SUBLANE)
        blocks.append(jnp.zeros((rp, _LANE), jnp.float32).at[:r, :c].set(
            arr.astype(jnp.float32)))
        layout[name] = (off, r, c)
        off += rp
    return jnp.concatenate(blocks, axis=0), layout


def attentivefp_forward(params, node_feats, edge_feats, src1h, dst1h, gmask):
    num_graphs = gmask.shape[0]
    v, e = node_feats.shape[0], edge_feats.shape[0]
    vp = _round_up(v, _SUBLANE)
    ep = _round_up(e, _SUBLANE)
    gp = _round_up(num_graphs, _SUBLANE)

    # Zero-padding is semantically inert: padded rows/cols of the one-hot
    # incidence / membership matrices are zero, so padded nodes/edges/graphs
    # never influence real ones (the `den > 0` exact-zero guards rely on this).
    node_feats = jnp.pad(node_feats, ((0, vp - v), (0, 0)))
    edge_feats = jnp.pad(edge_feats, ((0, ep - e), (0, 0)))
    src1h = jnp.pad(src1h, ((0, ep - e), (0, vp - v)))
    dst1h = jnp.pad(dst1h, ((0, ep - e), (0, vp - v)))
    gmask = jnp.pad(gmask, ((0, gp - num_graphs), (0, vp - v)))

    slab, layout = _pack_params(params)

    args = (node_feats, edge_feats, src1h, dst1h, gmask, slab)
    kernel = functools.partial(_forward_kernel, layout=layout,
                               num_layers=NUM_LAYERS, num_timesteps=NUM_TIMESTEPS)
    in_specs = [pl.BlockSpec(a.shape, lambda i: (0, 0)) for a in args]

    out = pl.pallas_call(
        kernel,
        grid=(1,),
        in_specs=in_specs,
        out_specs=pl.BlockSpec((gp, N_TASKS), lambda i: (0, 0)),
        out_shape=jax.ShapeDtypeStruct((gp, N_TASKS), jnp.float32),
        compiler_params=pltpu.CompilerParams(dimension_semantics=("arbitrary",)),
    )(*args)
    return out[:num_graphs]


# ---------------------------------------------------------------------------
# Deterministic parameter initialization (synthetic weights, torch-default dist)
# ---------------------------------------------------------------------------
class _KeyGen:
    def __init__(self, key):
        self._key = key

    def __call__(self):
        self._key, sub = jax.random.split(self._key)
        return sub


def _uniform(kg, shape, fan_in):
    bound = 1.0 / jnp.sqrt(jnp.float32(fan_in))
    return jax.random.uniform(kg(), shape, jnp.float32, -bound, bound)


def _linear_p(kg, d_in, d_out, name, out):
    # nn.Linear(d_in, d_out); for concat-inputs the weight is already stacked
    # along K so the kernel does a single matmul over the lane-concatenated input.
    out[name + ".w"] = _uniform(kg, (d_in, d_out), d_in)
    out[name + ".b"] = _uniform(kg, (1, d_out), d_in)


def _gru_p(kg, d_in, hidden, name, out):
    """nn.GRUCell repacked into ONE (d_in+H, 4H) matmul: columns [r | z | n_in | n_hid]
    so the n-gate hidden half can still be gated by r (exact PyTorch semantics)."""
    h = hidden
    wi = _uniform(kg, (d_in, 3 * h), h)
    wh = _uniform(kg, (h, 3 * h), h)
    bi = _uniform(kg, (1, 3 * h), h)
    bh = _uniform(kg, (1, 3 * h), h)
    w = jnp.zeros((d_in + h, 4 * h), jnp.float32)
    w = w.at[:d_in, :2 * h].set(wi[:, :2 * h])        # input  r,z
    w = w.at[d_in:, :2 * h].set(wh[:, :2 * h])        # hidden r,z
    w = w.at[:d_in, 2 * h:3 * h].set(wi[:, 2 * h:])   # input  n
    w = w.at[d_in:, 3 * h:].set(wh[:, 2 * h:])        # hidden n
    b = jnp.concatenate([bi[:, :2 * h] + bh[:, :2 * h], bi[:, 2 * h:], bh[:, 2 * h:]],
                        axis=1)
    out[name + ".w"] = w
    out[name + ".b"] = b


def init_params(key):
    kg = _KeyGen(key)
    gf = GRAPH_FEAT
    p = {}
    _linear_p(kg, NODE_FEAT, gf, "init.proj_node", p)
    _linear_p(kg, NODE_FEAT + EDGE_FEAT, gf, "init.proj_edge1", p)
    _linear_p(kg, 2 * gf, 1, "init.proj_edge2", p)
    _linear_p(kg, gf, gf, "init.edge_transform", p)
    _gru_p(kg, gf, gf, "init.gru", p)
    for l in range(NUM_LAYERS - 1):
        _linear_p(kg, 2 * gf, 1, "layer%d.proj_edge" % l, p)
        _linear_p(kg, gf, gf, "layer%d.proj_node" % l, p)
        _gru_p(kg, gf, gf, "layer%d.gru" % l, p)
    for t in range(NUM_TIMESTEPS):
        _linear_p(kg, 2 * gf, 1, "read%d.logit" % t, p)
        _linear_p(kg, gf, gf, "read%d.proj" % t, p)
        _gru_p(kg, gf, gf, "read%d.gru" % t, p)
    _linear_p(kg, gf, N_TASKS, "predict", p)
    return p


# ---------------------------------------------------------------------------
# Example graph + run
# ---------------------------------------------------------------------------
def build_example_graph():
    # 2 graphs: graph 0 = nodes 0..5 (directed cycle both ways),
    #           graph 1 = nodes 6..9 (directed cycle both ways).
    graph_ids = [0] * 6 + [1] * 4
    src, dst = [], []
    for i in range(6):
        a, b = i, (i + 1) % 6
        src += [a, b]
        dst += [b, a]
    for i in range(4):
        a, b = 6 + i, 6 + (i + 1) % 4
        src += [a, b]
        dst += [b, a]
    num_nodes, num_graphs = 10, 2
    src = jnp.asarray(src, dtype=jnp.int32)
    dst = jnp.asarray(dst, dtype=jnp.int32)
    src1h = jax.nn.one_hot(src, num_nodes, dtype=jnp.float32)   # (E, V)
    dst1h = jax.nn.one_hot(dst, num_nodes, dtype=jnp.float32)   # (E, V)
    gmask = jax.nn.one_hot(jnp.asarray(graph_ids, jnp.int32),
                           num_graphs, dtype=jnp.float32).T     # (G, V)
    return num_nodes, int(src.shape[0]), num_graphs, src1h, dst1h, gmask


if __name__ == "__main__":
    key = jax.random.PRNGKey(0)
    k_params, k_node, k_edge = jax.random.split(key, 3)

    params = init_params(k_params)
    num_nodes, num_edges, num_graphs, src1h, dst1h, gmask = build_example_graph()

    node_feats = jax.random.normal(k_node, (num_nodes, NODE_FEAT), jnp.float32)
    edge_feats = jax.random.normal(k_edge, (num_edges, EDGE_FEAT), jnp.float32)

    fwd = jax.jit(attentivefp_forward)
    out = jax.block_until_ready(fwd(params, node_feats, edge_feats, src1h, dst1h, gmask))

    assert out.shape == (num_graphs, N_TASKS)
    assert bool(jnp.all(jnp.isfinite(out)))
    print("KERNEL_OK")
</pallas_src>

<mosaic_0001>
module attributes {stable_mosaic.version = 11 : i64} {
  func.func @_forward_kernel(%arg0: i32, %arg1: memref<16x8xf32, #tpu.memory_space<vmem>>, %arg2: memref<24x6xf32, #tpu.memory_space<vmem>>, %arg3: memref<24x16xf32, #tpu.memory_space<vmem>>, %arg4: memref<24x16xf32, #tpu.memory_space<vmem>>, %arg5: memref<8x16xf32, #tpu.memory_space<vmem>>, %arg6: memref<816x128xf32, #tpu.memory_space<vmem>>, %arg7: memref<8x1xf32, #tpu.memory_space<vmem>>) attributes {dimension_semantics = [#tpu.dimension_semantics<arbitrary>], iteration_bounds = array<i64: 1>, scalar_prefetch = 0 : i64, scratch_operands = 0 : i64, tpu.core_type = #tpu.core_type<tc>, window_params = [{pipeline_mode = #tpu.pipeline_mode<synchronous>, transform_indices = @transform_0, window_bounds = array<i64: 16, 8>}, {pipeline_mode = #tpu.pipeline_mode<synchronous>, transform_indices = @transform_1, window_bounds = array<i64: 24, 6>}, {pipeline_mode = #tpu.pipeline_mode<synchronous>, transform_indices = @transform_2, window_bounds = array<i64: 24, 16>}, {pipeline_mode = #tpu.pipeline_mode<synchronous>, transform_indices = @transform_3, window_bounds = array<i64: 24, 16>}, {pipeline_mode = #tpu.pipeline_mode<synchronous>, transform_indices = @transform_4, window_bounds = array<i64: 8, 16>}, {pipeline_mode = #tpu.pipeline_mode<synchronous>, transform_indices = @transform_5, window_bounds = array<i64: 816, 128>}, {pipeline_mode = #tpu.pipeline_mode<synchronous>, transform_indices = @transform_6, window_bounds = array<i64: 8, 1>}]} {
    %c0 = arith.constant 0 : index
    %c0_0 = arith.constant 0 : index
    %0 = vector.load %arg1[%c0, %c0_0] : memref<16x8xf32, #tpu.memory_space<vmem>>, vector<16x8xf32>
    %c0_1 = arith.constant 0 : index
    %c0_2 = arith.constant 0 : index
    %1 = vector.load %arg2[%c0_1, %c0_2] : memref<24x6xf32, #tpu.memory_space<vmem>>, vector<24x6xf32>
    %c0_3 = arith.constant 0 : index
    %c0_4 = arith.constant 0 : index
    %2 = vector.load %arg3[%c0_3, %c0_4] : memref<24x16xf32, #tpu.memory_space<vmem>>, vector<24x16xf32>
    %c0_5 = arith.constant 0 : index
    %c0_6 = arith.constant 0 : index
    %3 = vector.load %arg4[%c0_5, %c0_6] : memref<24x16xf32, #tpu.memory_space<vmem>>, vector<24x16xf32>
    %c0_7 = arith.constant 0 : index
    %c0_8 = arith.constant 0 : index
    %4 = vector.load %arg5[%c0_7, %c0_8] : memref<8x16xf32, #tpu.memory_space<vmem>>, vector<8x16xf32>
    %c216 = arith.constant 216 : index
    %c0_9 = arith.constant 0 : index
    %5 = vector.load %arg6[%c216, %c0_9] : memref<816x128xf32, #tpu.memory_space<vmem>>, vector<8x32xf32>
    %cst = arith.constant dense<0.000000e+00> : vector<16x32xf32>
    %6 = tpu.matmul %0, %5, %cst {dimension_numbers = #tpu.dot_dimension_numbers<[1], [0], [0], [1], [0, 0, 1, 1], [], []>} : vector<16x8xf32>, vector<8x32xf32>, vector<16x32xf32> -> vector<16x32xf32>
    %c208 = arith.constant 208 : index
    %c0_10 = arith.constant 0 : index
    %7 = vector.load %arg6[%c208, %c0_10] : memref<816x128xf32, #tpu.memory_space<vmem>>, vector<1x32xf32>
    %8 = vector.broadcast %7 : vector<1x32xf32> to vector<16x32xf32>
    %9 = arith.addf %6, %8 : vector<16x32xf32>
    %cst_11 = arith.constant 0.000000e+00 : f32
    %10 = vector.broadcast %cst_11 : f32 to vector<16x32xf32>
    %11 = arith.cmpf ogt, %9, %10 : vector<16x32xf32>
    %cst_12 = arith.constant 0.00999999977 : f32
    %12 = vector.broadcast %cst_12 : f32 to vector<16x32xf32>
    %13 = arith.mulf %12, %9 : vector<16x32xf32>
    %14 = arith.select %11, %9, %13 : vector<16x32xi1>, vector<16x32xf32>
    %cst_13 = arith.constant dense<0.000000e+00> : vector<24x8xf32>
    %15 = tpu.matmul %2, %0, %cst_13 {dimension_numbers = #tpu.dot_dimension_numbers<[1], [0], [0], [1], [0, 0, 1, 1], [], []>} : vector<24x16xf32>, vector<16x8xf32>, vector<24x8xf32> -> vector<24x8xf32>
    %16 = tpu.concatenate %15, %1 in 1 : vector<24x8xf32>, vector<24x6xf32> -> vector<24x14xf32>
    %c120 = arith.constant 120 : index
    %c0_14 = arith.constant 0 : index
    %17 = vector.load %arg6[%c120, %c0_14] : memref<816x128xf32, #tpu.memory_space<vmem>>, vector<14x32xf32>
    %cst_15 = arith.constant dense<0.000000e+00> : vector<24x32xf32>
    %18 = tpu.matmul %16, %17, %cst_15 {dimension_numbers = #tpu.dot_dimension_numbers<[1], [0], [0], [1], [0, 0, 1, 1], [], []>} : vector<24x14xf32>, vector<14x32xf32>, vector<24x32xf32> -> vector<24x32xf32>
    %c112 = arith.constant 112 : index
    %c0_16 = arith.constant 0 : index
    %19 = vector.load %arg6[%c112, %c0_16] : memref<816x128xf32, #tpu.memory_space<vmem>>, vector<1x32xf32>
    %20 = vector.broadcast %19 : vector<1x32xf32> to vector<24x32xf32>
    %21 = arith.addf %18, %20 : vector<24x32xf32>
    %cst_17 = arith.constant 0.000000e+00 : f32
    %22 = vector.broadcast %cst_17 : f32 to vector<24x32xf32>
    %23 = arith.cmpf ogt, %21, %22 : vector<24x32xf32>
    %cst_18 = arith.constant 0.00999999977 : f32
    %24 = vector.broadcast %cst_18 : f32 to vector<24x32xf32>
    %25 = arith.mulf %24, %21 : vector<24x32xf32>
    %26 = arith.select %23, %21, %25 : vector<24x32xi1>, vector<24x32xf32>
    %cst_19 = arith.constant dense<0.000000e+00> : vector<24x32xf32>
    %27 = tpu.matmul %3, %14, %cst_19 {dimension_numbers = #tpu.dot_dimension_numbers<[1], [0], [0], [1], [0, 0, 1, 1], [], []>} : vector<24x16xf32>, vector<16x32xf32>, vector<24x32xf32> -> vector<24x32xf32>
    %28 = tpu.concatenate %27, %26 in 1 : vector<24x32xf32>, vector<24x32xf32> -> vector<24x64xf32>
    %c144 = arith.constant 144 : index
    %c0_20 = arith.constant 0 : index
    %29 = vector.load %arg6[%c144, %c0_20] : memref<816x128xf32, #tpu.memory_space<vmem>>, vector<64x1xf32>
    %cst_21 = arith.constant dense<0.000000e+00> : vector<24x1xf32>
    %30 = tpu.matmul %28, %29, %cst_21 {dimension_numbers = #tpu.dot_dimension_numbers<[1], [0], [0], [1], [0, 0, 1, 1], [], []>} : vector<24x64xf32>, vector<64x1xf32>, vector<24x1xf32> -> vector<24x1xf32>
    %c136 = arith.constant 136 : index
    %c0_22 = arith.constant 0 : index
    %31 = vector.load %arg6[%c136, %c0_22] : memref<816x128xf32, #tpu.memory_space<vmem>>, vector<1x1xf32>
    %32 = vector.broadcast %31 : vector<1x1xf32> to vector<24x1xf32>
    %33 = arith.addf %30, %32 : vector<24x1xf32>
    %cst_23 = arith.constant 0.000000e+00 : f32
    %34 = vector.broadcast %cst_23 : f32 to vector<24x1xf32>
    %35 = arith.cmpf ogt, %33, %34 : vector<24x1xf32>
    %cst_24 = arith.constant 0.00999999977 : f32
    %36 = vector.broadcast %cst_24 : f32 to vector<24x1xf32>
    %37 = arith.mulf %36, %33 : vector<24x1xf32>
    %38 = arith.select %35, %33, %37 : vector<24x1xi1>, vector<24x1xf32>
    %c8 = arith.constant 8 : index
    %c0_25 = arith.constant 0 : index
    %39 = vector.load %arg6[%c8, %c0_25] : memref<816x128xf32, #tpu.memory_space<vmem>>, vector<32x32xf32>
    %cst_26 = arith.constant dense<0.000000e+00> : vector<24x32xf32>
    %40 = tpu.matmul %26, %39, %cst_26 {dimension_numbers = #tpu.dot_dimension_numbers<[1], [0], [0], [1], [0, 0, 1, 1], [], []>} : vector<24x32xf32>, vector<32x32xf32>, vector<24x32xf32> -> vector<24x32xf32>
    %c0_27 = arith.constant 0 : index
    %c0_28 = arith.constant 0 : index
    %41 = vector.load %arg6[%c0_27, %c0_28] : memref<816x128xf32, #tpu.memory_space<vmem>>, vector<1x32xf32>
    %42 = vector.broadcast %41 : vector<1x32xf32> to vector<24x32xf32>
    %43 = arith.addf %40, %42 : vector<24x32xf32>
    %cst_29 = arith.constant dense<0xFF800000> : vector<1xf32>
    %44 = vector.multi_reduction <maximumf>, %38, %cst_29 [0] : vector<24x1xf32> to vector<1xf32>
    %45 = vector.shape_cast %44 : vector<1xf32> to vector<1x1xf32>
    %46 = vector.broadcast %45 : vector<1x1xf32> to vector<24x1xf32>
    %47 = arith.subf %38, %46 : vector<24x1xf32>
    %48 = math.exp %47 : vector<24x1xf32>
    %49 = vector.broadcast %48 : vector<24x1xf32> to vector<24x32xf32>
    %50 = arith.mulf %49, %43 : vector<24x32xf32>
    %cst_30 = arith.constant dense<0.000000e+00> : vector<16x32xf32>
    %51 = tpu.matmul %3, %50, %cst_30 {dimension_numbers = #tpu.dot_dimension_numbers<[0], [0], [1], [1], [0, 1, 1, 1], [], []>} : vector<24x16xf32>, vector<24x32xf32>, vector<16x32xf32> -> vector<16x32xf32>
    %cst_31 = arith.constant dense<0.000000e+00> : vector<16x1xf32>
    %52 = tpu.matmul %3, %48, %cst_31 {dimension_numbers = #tpu.dot_dimension_numbers<[0], [0], [1], [1], [0, 1, 1, 1], [], []>} : vector<24x16xf32>, vector<24x1xf32>, vector<16x1xf32> -> vector<16x1xf32>
    %cst_32 = arith.constant 0.000000e+00 : f32
    %53 = vector.broadcast %cst_32 : f32 to vector<16x1xf32>
    %54 = arith.cmpf ogt, %52, %53 : vector<16x1xf32>
    %cst_33 = arith.constant 1.000000e+00 : f32
    %55 = vector.broadcast %cst_33 : f32 to vector<16x1xf32>
    %56 = arith.select %54, %52, %55 : vector<16x1xi1>, vector<16x1xf32>
    %57 = tpu.reciprocal %56 {approx = true} : vector<16x1xf32> -> vector<16x1xf32>
    %58 = vector.broadcast %57 : vector<16x1xf32> to vector<16x32xf32>
    %59 = arith.mulf %51, %58 : vector<16x32xf32>
    %cst_34 = arith.constant 0.000000e+00 : f32
    %60 = vector.broadcast %cst_34 : f32 to vector<16x32xf32>
    %61 = arith.cmpf ogt, %59, %60 : vector<16x32xf32>
    %cst_35 = arith.constant 0.000000e+00 : f32
    %62 = vector.broadcast %cst_35 : f32 to vector<16x32xf32>
    %63 = arith.minimumf %59, %62 : vector<16x32xf32>
    %64 = math.exp %63 : vector<16x32xf32>
    %cst_36 = arith.constant 1.000000e+00 : f32
    %65 = vector.broadcast %cst_36 : f32 to vector<16x32xf32>
    %66 = arith.subf %64, %65 : vector<16x32xf32>
    %67 = arith.select %61, %59, %66 : vector<16x32xi1>, vector<16x32xf32>
    %68 = tpu.concatenate %67, %14 in 1 : vector<16x32xf32>, vector<16x32xf32> -> vector<16x64xf32>
    %c48 = arith.constant 48 : index
    %c0_37 = arith.constant 0 : index
    %69 = vector.load %arg6[%c48, %c0_37] : memref<816x128xf32, #tpu.memory_space<vmem>>, vector<64x128xf32>
    %cst_38 = arith.constant dense<0.000000e+00> : vector<16x128xf32>
    %70 = tpu.matmul %68, %69, %cst_38 {dimension_numbers = #tpu.dot_dimension_numbers<[1], [0], [0], [1], [0, 0, 1, 1], [], []>} : vector<16x64xf32>, vector<64x128xf32>, vector<16x128xf32> -> vector<16x128xf32>
    %c40 = arith.constant 40 : index
    %c0_39 = arith.constant 0 : index
    %71 = vector.load %arg6[%c40, %c0_39] : memref<816x128xf32, #tpu.memory_space<vmem>>, vector<1x128xf32>
    %72 = vector.broadcast %71 : vector<1x128xf32> to vector<16x128xf32>
    %73 = arith.addf %70, %72 : vector<16x128xf32>
    %74 = vector.extract_strided_slice %73 {offsets = [0, 0], sizes = [16, 32], strides = [1, 1]} : vector<16x128xf32> to vector<16x32xf32>
    %75 = arith.negf %74 : vector<16x32xf32>
    %76 = math.exp %75 : vector<16x32xf32>
    %cst_40 = arith.constant 1.000000e+00 : f32
    %77 = vector.broadcast %cst_40 : f32 to vector<16x32xf32>
    %78 = arith.addf %77, %76 : vector<16x32xf32>
    %79 = arith.divf %77, %78 : vector<16x32xf32>
    %80 = vector.extract_strided_slice %73 {offsets = [0, 32], sizes = [16, 32], strides = [1, 1]} : vector<16x128xf32> to vector<16x32xf32>
    %81 = arith.negf %80 : vector<16x32xf32>
    %82 = math.exp %81 : vector<16x32xf32>
    %cst_41 = arith.constant 1.000000e+00 : f32
    %83 = vector.broadcast %cst_41 : f32 to vector<16x32xf32>
    %84 = arith.addf %83, %82 : vector<16x32xf32>
    %85 = arith.divf %83, %84 : vector<16x32xf32>
    %86 = vector.extract_strided_slice %73 {offsets = [0, 64], sizes = [16, 32], strides = [1, 1]} : vector<16x128xf32> to vector<16x32xf32>
    %87 = vector.extract_strided_slice %73 {offsets = [0, 96], sizes = [16, 32], strides = [1, 1]} : vector<16x128xf32> to vector<16x32xf32>
    %88 = arith.mulf %79, %87 : vector<16x32xf32>
    %89 = arith.addf %86, %88 : vector<16x32xf32>
    %90 = math.tanh %89 : vector<16x32xf32>
    %cst_42 = arith.constant 1.000000e+00 : f32
    %91 = vector.broadcast %cst_42 : f32 to vector<16x32xf32>
    %92 = arith.subf %91, %85 : vector<16x32xf32>
    %93 = arith.mulf %92, %90 : vector<16x32xf32>
    %94 = arith.mulf %85, %14 : vector<16x32xf32>
    %95 = arith.addf %93, %94 : vector<16x32xf32>
    %cst_43 = arith.constant 0.000000e+00 : f32
    %96 = vector.broadcast %cst_43 : f32 to vector<16x32xf32>
    %97 = arith.maximumf %95, %96 : vector<16x32xf32>
    %cst_44 = arith.constant dense<0.000000e+00> : vector<24x32xf32>
    %98 = tpu.matmul %2, %97, %cst_44 {dimension_numbers = #tpu.dot_dimension_numbers<[1], [0], [0], [1], [0, 0, 1, 1], [], []>} : vector<24x16xf32>, vector<16x32xf32>, vector<24x32xf32> -> vector<24x32xf32>
    %cst_45 = arith.constant dense<0.000000e+00> : vector<24x32xf32>
    %99 = tpu.matmul %3, %97, %cst_45 {dimension_numbers = #tpu.dot_dimension_numbers<[1], [0], [0], [1], [0, 0, 1, 1], [], []>} : vector<24x16xf32>, vector<16x32xf32>, vector<24x32xf32> -> vector<24x32xf32>
    %100 = tpu.concatenate %99, %98 in 1 : vector<24x32xf32>, vector<24x32xf32> -> vector<24x64xf32>
    %c304 = arith.constant 304 : index
    %c0_46 = arith.constant 0 : index
    %101 = vector.load %arg6[%c304, %c0_46] : memref<816x128xf32, #tpu.memory_space<vmem>>, vector<64x1xf32>
    %cst_47 = arith.constant dense<0.000000e+00> : vector<24x1xf32>
    %102 = tpu.matmul %100, %101, %cst_47 {dimension_numbers = #tpu.dot_dimension_numbers<[1], [0], [0], [1], [0, 0, 1, 1], [], []>} : vector<24x64xf32>, vector<64x1xf32>, vector<24x1xf32> -> vector<24x1xf32>
    %c296 = arith.constant 296 : index
    %c0_48 = arith.constant 0 : index
    %103 = vector.load %arg6[%c296, %c0_48] : memref<816x128xf32, #tpu.memory_space<vmem>>, vector<1x1xf32>
    %104 = vector.broadcast %103 : vector<1x1xf32> to vector<24x1xf32>
    %105 = arith.addf %102, %104 : vector<24x1xf32>
    %cst_49 = arith.constant 0.000000e+00 : f32
    %106 = vector.broadcast %cst_49 : f32 to vector<24x1xf32>
    %107 = arith.cmpf ogt, %105, %106 : vector<24x1xf32>
    %cst_50 = arith.constant 0.00999999977 : f32
    %108 = vector.broadcast %cst_50 : f32 to vector<24x1xf32>
    %109 = arith.mulf %108, %105 : vector<24x1xf32>
    %110 = arith.select %107, %105, %109 : vector<24x1xi1>, vector<24x1xf32>
    %c376 = arith.constant 376 : index
    %c0_51 = arith.constant 0 : index
    %111 = vector.load %arg6[%c376, %c0_51] : memref<816x128xf32, #tpu.memory_space<vmem>>, vector<32x32xf32>
    %cst_52 = arith.constant dense<0.000000e+00> : vector<16x32xf32>
    %112 = tpu.matmul %97, %111, %cst_52 {dimension_numbers = #tpu.dot_dimension_numbers<[1], [0], [0], [1], [0, 0, 1, 1], [], []>} : vector<16x32xf32>, vector<32x32xf32>, vector<16x32xf32> -> vector<16x32xf32>
    %c368 = arith.constant 368 : index
    %c0_53 = arith.constant 0 : index
    %113 = vector.load %arg6[%c368, %c0_53] : memref<816x128xf32, #tpu.memory_space<vmem>>, vector<1x32xf32>
    %114 = vector.broadcast %113 : vector<1x32xf32> to vector<16x32xf32>
    %115 = arith.addf %112, %114 : vector<16x32xf32>
    %cst_54 = arith.constant dense<0.000000e+00> : vector<24x32xf32>
    %116 = tpu.matmul %2, %115, %cst_54 {dimension_numbers = #tpu.dot_dimension_numbers<[1], [0], [0], [1], [0, 0, 1, 1], [], []>} : vector<24x16xf32>, vector<16x32xf32>, vector<24x32xf32> -> vector<24x32xf32>
    %cst_55 = arith.constant dense<0xFF800000> : vector<1xf32>
    %117 = vector.multi_reduction <maximumf>, %110, %cst_55 [0] : vector<24x1xf32> to vector<1xf32>
    %118 = vector.shape_cast %117 : vector<1xf32> to vector<1x1xf32>
    %119 = vector.broadcast %118 : vector<1x1xf32> to vector<24x1xf32>
    %120 = arith.subf %110, %119 : vector<24x1xf32>
    %121 = math.exp %120 : vector<24x1xf32>
    %122 = vector.broadcast %121 : vector<24x1xf32> to vector<24x32xf32>
    %123 = arith.mulf %122, %116 : vector<24x32xf32>
    %cst_56 = arith.constant dense<0.000000e+00> : vector<16x32xf32>
    %124 = tpu.matmul %3, %123, %cst_56 {dimension_numbers = #tpu.dot_dimension_numbers<[0], [0], [1], [1], [0, 1, 1, 1], [], []>} : vector<24x16xf32>, vector<24x32xf32>, vector<16x32xf32> -> vector<16x32xf32>
    %cst_57 = arith.constant dense<0.000000e+00> : vector<16x1xf32>
    %125 = tpu.matmul %3, %121, %cst_57 {dimension_numbers = #tpu.dot_dimension_numbers<[0], [0], [1], [1], [0, 1, 1, 1], [], []>} : vector<24x16xf32>, vector<24x1xf32>, vector<16x1xf32> -> vector<16x1xf32>
    %cst_58 = arith.constant 0.000000e+00 : f32
    %126 = vector.broadcast %cst_58 : f32 to vector<16x1xf32>
    %127 = arith.cmpf ogt, %125, %126 : vector<16x1xf32>
    %cst_59 = arith.constant 1.000000e+00 : f32
    %128 = vector.broadcast %cst_59 : f32 to vector<16x1xf32>
    %129 = arith.select %127, %125, %128 : vector<16x1xi1>, vector<16x1xf32>
    %130 = tpu.reciprocal %129 {approx = true} : vector<16x1xf32> -> vector<16x1xf32>
    %131 = vector.broadcast %130 : vector<16x1xf32> to vector<16x32xf32>
    %132 = arith.mulf %124, %131 : vector<16x32xf32>
    %cst_60 = arith.constant 0.000000e+00 : f32
    %133 = vector.broadcast %cst_60 : f32 to vector<16x32xf32>
    %134 = arith.cmpf ogt, %132, %133 : vector<16x32xf32>
    %cst_61 = arith.constant 0.000000e+00 : f32
    %135 = vector.broadcast %cst_61 : f32 to vector<16x32xf32>
    %136 = arith.minimumf %132, %135 : vector<16x32xf32>
    %137 = math.exp %136 : vector<16x32xf32>
    %cst_62 = arith.constant 1.000000e+00 : f32
    %138 = vector.broadcast %cst_62 : f32 to vector<16x32xf32>
    %139 = arith.subf %137, %138 : vector<16x32xf32>
    %140 = arith.select %134, %132, %139 : vector<16x32xi1>, vector<16x32xf32>
    %141 = tpu.concatenate %140, %97 in 1 : vector<16x32xf32>, vector<16x32xf32> -> vector<16x64xf32>
    %c232 = arith.constant 232 : index
    %c0_63 = arith.constant 0 : index
    %142 = vector.load %arg6[%c232, %c0_63] : memref<816x128xf32, #tpu.memory_space<vmem>>, vector<64x128xf32>
    %cst_64 = arith.constant dense<0.000000e+00> : vector<16x128xf32>
    %143 = tpu.matmul %141, %142, %cst_64 {dimension_numbers = #tpu.dot_dimension_numbers<[1], [0], [0], [1], [0, 0, 1, 1], [], []>} : vector<16x64xf32>, vector<64x128xf32>, vector<16x128xf32> -> vector<16x128xf32>
    %c224 = arith.constant 224 : index
    %c0_65 = arith.constant 0 : index
    %144 = vector.load %arg6[%c224, %c0_65] : memref<816x128xf32, #tpu.memory_space<vmem>>, vector<1x128xf32>
    %145 = vector.broadcast %144 : vector<1x128xf32> to vector<16x128xf32>
    %146 = arith.addf %143, %145 : vector<16x128xf32>
    %147 = vector.extract_strided_slice %146 {offsets = [0, 0], sizes = [16, 32], strides = [1, 1]} : vector<16x128xf32> to vector<16x32xf32>
    %148 = arith.negf %147 : vector<16x32xf32>
    %149 = math.exp %148 : vector<16x32xf32>
    %cst_66 = arith.constant 1.000000e+00 : f32
    %150 = vector.broadcast %cst_66 : f32 to vector<16x32xf32>
    %151 = arith.addf %150, %149 : vector<16x32xf32>
    %152 = arith.divf %150, %151 : vector<16x32xf32>
    %153 = vector.extract_strided_slice %146 {offsets = [0, 32], sizes = [16, 32], strides = [1, 1]} : vector<16x128xf32> to vector<16x32xf32>
    %154 = arith.negf %153 : vector<16x32xf32>
    %155 = math.exp %154 : vector<16x32xf32>
    %cst_67 = arith.constant 1.000000e+00 : f32
    %156 = vector.broadcast %cst_67 : f32 to vector<16x32xf32>
    %157 = arith.addf %156, %155 : vector<16x32xf32>
    %158 = arith.divf %156, %157 : vector<16x32xf32>
    %159 = vector.extract_strided_slice %146 {offsets = [0, 64], sizes = [16, 32], strides = [1, 1]} : vector<16x128xf32> to vector<16x32xf32>
    %160 = vector.extract_strided_slice %146 {offsets = [0, 96], sizes = [16, 32], strides = [1, 1]} : vector<16x128xf32> to vector<16x32xf32>
    %161 = arith.mulf %152, %160 : vector<16x32xf32>
    %162 = arith.addf %159, %161 : vector<16x32xf32>
    %163 = math.tanh %162 : vector<16x32xf32>
    %cst_68 = arith.constant 1.000000e+00 : f32
    %164 = vector.broadcast %cst_68 : f32 to vector<16x32xf32>
    %165 = arith.subf %164, %158 : vector<16x32xf32>
    %166 = arith.mulf %165, %163 : vector<16x32xf32>
    %167 = arith.mulf %158, %97 : vector<16x32xf32>
    %168 = arith.addf %166, %167 : vector<16x32xf32>
    %cst_69 = arith.constant 0.000000e+00 : f32
    %169 = vector.broadcast %cst_69 : f32 to vector<16x32xf32>
    %170 = arith.maximumf %168, %169 : vector<16x32xf32>
    %cst_70 = arith.constant dense<0.000000e+00> : vector<8x32xf32>
    %171 = tpu.matmul %4, %170, %cst_70 {dimension_numbers = #tpu.dot_dimension_numbers<[1], [0], [0], [1], [0, 0, 1, 1], [], []>} : vector<8x16xf32>, vector<16x32xf32>, vector<8x32xf32> -> vector<8x32xf32>
    %cst_71 = arith.constant 0.000000e+00 : f32
    %172 = vector.broadcast %cst_71 : f32 to vector<8x32xf32>
    %173 = arith.maximumf %171, %172 : vector<8x32xf32>
    %cst_72 = arith.constant dense<0.000000e+00> : vector<16x32xf32>
    %174 = tpu.matmul %4, %173, %cst_72 {dimension_numbers = #tpu.dot_dimension_numbers<[0], [0], [1], [1], [0, 1, 1, 1], [], []>} : vector<8x16xf32>, vector<8x32xf32>, vector<16x32xf32> -> vector<16x32xf32>
    %175 = tpu.concatenate %174, %170 in 1 : vector<16x32xf32>, vector<16x32xf32> -> vector<16x64xf32>
    %c528 = arith.constant 528 : index
    %c0_73 = arith.constant 0 : index
    %176 = vector.load %arg6[%c528, %c0_73] : memref<816x128xf32, #tpu.memory_space<vmem>>, vector<64x1xf32>
    %cst_74 = arith.constant dense<0.000000e+00> : vector<16x1xf32>
    %177 = tpu.matmul %175, %176, %cst_74 {dimension_numbers = #tpu.dot_dimension_numbers<[1], [0], [0], [1], [0, 0, 1, 1], [], []>} : vector<16x64xf32>, vector<64x1xf32>, vector<16x1xf32> -> vector<16x1xf32>
    %c520 = arith.constant 520 : index
    %c0_75 = arith.constant 0 : index
    %178 = vector.load %arg6[%c520, %c0_75] : memref<816x128xf32, #tpu.memory_space<vmem>>, vector<1x1xf32>
    %179 = vector.broadcast %178 : vector<1x1xf32> to vector<16x1xf32>
    %180 = arith.addf %177, %179 : vector<16x1xf32>
    %cst_76 = arith.constant 0.000000e+00 : f32
    %181 = vector.broadcast %cst_76 : f32 to vector<16x1xf32>
    %182 = arith.cmpf ogt, %180, %181 : vector<16x1xf32>
    %cst_77 = arith.constant 0.00999999977 : f32
    %183 = vector.broadcast %cst_77 : f32 to vector<16x1xf32>
    %184 = arith.mulf %183, %180 : vector<16x1xf32>
    %185 = arith.select %182, %180, %184 : vector<16x1xi1>, vector<16x1xf32>
    %c600 = arith.constant 600 : index
    %c0_78 = arith.constant 0 : index
    %186 = vector.load %arg6[%c600, %c0_78] : memref<816x128xf32, #tpu.memory_space<vmem>>, vector<32x32xf32>
    %cst_79 = arith.constant dense<0.000000e+00> : vector<16x32xf32>
    %187 = tpu.matmul %170, %186, %cst_79 {dimension_numbers = #tpu.dot_dimension_numbers<[1], [0], [0], [1], [0, 0, 1, 1], [], []>} : vector<16x32xf32>, vector<32x32xf32>, vector<16x32xf32> -> vector<16x32xf32>
    %c592 = arith.constant 592 : index
    %c0_80 = arith.constant 0 : index
    %188 = vector.load %arg6[%c592, %c0_80] : memref<816x128xf32, #tpu.memory_space<vmem>>, vector<1x32xf32>
    %189 = vector.broadcast %188 : vector<1x32xf32> to vector<16x32xf32>
    %190 = arith.addf %187, %189 : vector<16x32xf32>
    %cst_81 = arith.constant dense<0xFF800000> : vector<1xf32>
    %191 = vector.multi_reduction <maximumf>, %185, %cst_81 [0] : vector<16x1xf32> to vector<1xf32>
    %192 = vector.shape_cast %191 : vector<1xf32> to vector<1x1xf32>
    %193 = vector.broadcast %192 : vector<1x1xf32> to vector<16x1xf32>
    %194 = arith.subf %185, %193 : vector<16x1xf32>
    %195 = math.exp %194 : vector<16x1xf32>
    %196 = vector.broadcast %195 : vector<16x1xf32> to vector<16x32xf32>
    %197 = arith.mulf %196, %190 : vector<16x32xf32>
    %cst_82 = arith.constant dense<0.000000e+00> : vector<8x32xf32>
    %198 = tpu.matmul %4, %197, %cst_82 {dimension_numbers = #tpu.dot_dimension_numbers<[1], [0], [0], [1], [0, 0, 1, 1], [], []>} : vector<8x16xf32>, vector<16x32xf32>, vector<8x32xf32> -> vector<8x32xf32>
    %cst_83 = arith.constant dense<0.000000e+00> : vector<8x1xf32>
    %199 = tpu.matmul %4, %195, %cst_83 {dimension_numbers = #tpu.dot_dimension_numbers<[1], [0], [0], [1], [0, 0, 1, 1], [], []>} : vector<8x16xf32>, vector<16x1xf32>, vector<8x1xf32> -> vector<8x1xf32>
    %cst_84 = arith.constant 0.000000e+00 : f32
    %200 = vector.broadcast %cst_84 : f32 to vector<8x1xf32>
    %201 = arith.cmpf ogt, %199, %200 : vector<8x1xf32>
    %cst_85 = arith.constant 1.000000e+00 : f32
    %202 = vector.broadcast %cst_85 : f32 to vector<8x1xf32>
    %203 = arith.select %201, %199, %202 : vector<8x1xi1>, vector<8x1xf32>
    %204 = tpu.reciprocal %203 {approx = true} : vector<8x1xf32> -> vector<8x1xf32>
    %205 = vector.broadcast %204 : vector<8x1xf32> to vector<8x32xf32>
    %206 = arith.mulf %198, %205 : vector<8x32xf32>
    %cst_86 = arith.constant 0.000000e+00 : f32
    %207 = vector.broadcast %cst_86 : f32 to vector<8x32xf32>
    %208 = arith.cmpf ogt, %206, %207 : vector<8x32xf32>
    %cst_87 = arith.constant 0.000000e+00 : f32
    %209 = vector.broadcast %cst_87 : f32 to vector<8x32xf32>
    %210 = arith.minimumf %206, %209 : vector<8x32xf32>
    %211 = math.exp %210 : vector<8x32xf32>
    %cst_88 = arith.constant 1.000000e+00 : f32
    %212 = vector.broadcast %cst_88 : f32 to vector<8x32xf32>
    %213 = arith.subf %211, %212 : vector<8x32xf32>
    %214 = arith.select %208, %206, %213 : vector<8x32xi1>, vector<8x32xf32>
    %215 = tpu.concatenate %214, %171 in 1 : vector<8x32xf32>, vector<8x32xf32> -> vector<8x64xf32>
    %c456 = arith.constant 456 : index
    %c0_89 = arith.constant 0 : index
    %216 = vector.load %arg6[%c456, %c0_89] : memref<816x128xf32, #tpu.memory_space<vmem>>, vector<64x128xf32>
    %cst_90 = arith.constant dense<0.000000e+00> : vector<8x128xf32>
    %217 = tpu.matmul %215, %216, %cst_90 {dimension_numbers = #tpu.dot_dimension_numbers<[1], [0], [0], [1], [0, 0, 1, 1], [], []>} : vector<8x64xf32>, vector<64x128xf32>, vector<8x128xf32> -> vector<8x128xf32>
    %c448 = arith.constant 448 : index
    %c0_91 = arith.constant 0 : index
    %218 = vector.load %arg6[%c448, %c0_91] : memref<816x128xf32, #tpu.memory_space<vmem>>, vector<1x128xf32>
    %219 = vector.broadcast %218 : vector<1x128xf32> to vector<8x128xf32>
    %220 = arith.addf %217, %219 : vector<8x128xf32>
    %221 = vector.extract_strided_slice %220 {offsets = [0, 0], sizes = [8, 32], strides = [1, 1]} : vector<8x128xf32> to vector<8x32xf32>
    %222 = arith.negf %221 : vector<8x32xf32>
    %223 = math.exp %222 : vector<8x32xf32>
    %cst_92 = arith.constant 1.000000e+00 : f32
    %224 = vector.broadcast %cst_92 : f32 to vector<8x32xf32>
    %225 = arith.addf %224, %223 : vector<8x32xf32>
    %226 = arith.divf %224, %225 : vector<8x32xf32>
    %227 = vector.extract_strided_slice %220 {offsets = [0, 32], sizes = [8, 32], strides = [1, 1]} : vector<8x128xf32> to vector<8x32xf32>
    %228 = arith.negf %227 : vector<8x32xf32>
    %229 = math.exp %228 : vector<8x32xf32>
    %cst_93 = arith.constant 1.000000e+00 : f32
    %230 = vector.broadcast %cst_93 : f32 to vector<8x32xf32>
    %231 = arith.addf %230, %229 : vector<8x32xf32>
    %232 = arith.divf %230, %231 : vector<8x32xf32>
    %233 = vector.extract_strided_slice %220 {offsets = [0, 64], sizes = [8, 32], strides = [1, 1]} : vector<8x128xf32> to vector<8x32xf32>
    %234 = vector.extract_strided_slice %220 {offsets = [0, 96], sizes = [8, 32], strides = [1, 1]} : vector<8x128xf32> to vector<8x32xf32>
    %235 = arith.mulf %226, %234 : vector<8x32xf32>
    %236 = arith.addf %233, %235 : vector<8x32xf32>
    %237 = math.tanh %236 : vector<8x32xf32>
    %cst_94 = arith.constant 1.000000e+00 : f32
    %238 = vector.broadcast %cst_94 : f32 to vector<8x32xf32>
    %239 = arith.subf %238, %232 : vector<8x32xf32>
    %240 = arith.mulf %239, %237 : vector<8x32xf32>
    %241 = arith.mulf %232, %171 : vector<8x32xf32>
    %242 = arith.addf %240, %241 : vector<8x32xf32>
    %cst_95 = arith.constant 0.000000e+00 : f32
    %243 = vector.broadcast %cst_95 : f32 to vector<8x32xf32>
    %244 = arith.maximumf %242, %243 : vector<8x32xf32>
    %cst_96 = arith.constant 0.000000e+00 : f32
    %245 = vector.broadcast %cst_96 : f32 to vector<8x32xf32>
    %246 = arith.maximumf %244, %245 : vector<8x32xf32>
    %cst_97 = arith.constant dense<0.000000e+00> : vector<16x32xf32>
    %247 = tpu.matmul %4, %246, %cst_97 {dimension_numbers = #tpu.dot_dimension_numbers<[0], [0], [1], [1], [0, 1, 1, 1], [], []>} : vector<8x16xf32>, vector<8x32xf32>, vector<16x32xf32> -> vector<16x32xf32>
    %248 = tpu.concatenate %247, %170 in 1 : vector<16x32xf32>, vector<16x32xf32> -> vector<16x64xf32>
    %c712 = arith.constant 712 : index
    %c0_98 = arith.constant 0 : index
    %249 = vector.load %arg6[%c712, %c0_98] : memref<816x128xf32, #tpu.memory_space<vmem>>, vector<64x1xf32>
    %cst_99 = arith.constant dense<0.000000e+00> : vector<16x1xf32>
    %250 = tpu.matmul %248, %249, %cst_99 {dimension_numbers = #tpu.dot_dimension_numbers<[1], [0], [0], [1], [0, 0, 1, 1], [], []>} : vector<16x64xf32>, vector<64x1xf32>, vector<16x1xf32> -> vector<16x1xf32>
    %c704 = arith.constant 704 : index
    %c0_100 = arith.constant 0 : index
    %251 = vector.load %arg6[%c704, %c0_100] : memref<816x128xf32, #tpu.memory_space<vmem>>, vector<1x1xf32>
    %252 = vector.broadcast %251 : vector<1x1xf32> to vector<16x1xf32>
    %253 = arith.addf %250, %252 : vector<16x1xf32>
    %cst_101 = arith.constant 0.000000e+00 : f32
    %254 = vector.broadcast %cst_101 : f32 to vector<16x1xf32>
    %255 = arith.cmpf ogt, %253, %254 : vector<16x1xf32>
    %cst_102 = arith.constant 0.00999999977 : f32
    %256 = vector.broadcast %cst_102 : f32 to vector<16x1xf32>
    %257 = arith.mulf %256, %253 : vector<16x1xf32>
    %258 = arith.select %255, %253, %257 : vector<16x1xi1>, vector<16x1xf32>
    %c784 = arith.constant 784 : index
    %c0_103 = arith.constant 0 : index
    %259 = vector.load %arg6[%c784, %c0_103] : memref<816x128xf32, #tpu.memory_space<vmem>>, vector<32x32xf32>
    %cst_104 = arith.constant dense<0.000000e+00> : vector<16x32xf32>
    %260 = tpu.matmul %170, %259, %cst_104 {dimension_numbers = #tpu.dot_dimension_numbers<[1], [0], [0], [1], [0, 0, 1, 1], [], []>} : vector<16x32xf32>, vector<32x32xf32>, vector<16x32xf32> -> vector<16x32xf32>
    %c776 = arith.constant 776 : index
    %c0_105 = arith.constant 0 : index
    %261 = vector.load %arg6[%c776, %c0_105] : memref<816x128xf32, #tpu.memory_space<vmem>>, vector<1x32xf32>
    %262 = vector.broadcast %261 : vector<1x32xf32> to vector<16x32xf32>
    %263 = arith.addf %260, %262 : vector<16x32xf32>
    %cst_106 = arith.constant dense<0xFF800000> : vector<1xf32>
    %264 = vector.multi_reduction <maximumf>, %258, %cst_106 [0] : vector<16x1xf32> to vector<1xf32>
    %265 = vector.shape_cast %264 : vector<1xf32> to vector<1x1xf32>
    %266 = vector.broadcast %265 : vector<1x1xf32> to vector<16x1xf32>
    %267 = arith.subf %258, %266 : vector<16x1xf32>
    %268 = math.exp %267 : vector<16x1xf32>
    %269 = vector.broadcast %268 : vector<16x1xf32> to vector<16x32xf32>
    %270 = arith.mulf %269, %263 : vector<16x32xf32>
    %cst_107 = arith.constant dense<0.000000e+00> : vector<8x32xf32>
    %271 = tpu.matmul %4, %270, %cst_107 {dimension_numbers = #tpu.dot_dimension_numbers<[1], [0], [0], [1], [0, 0, 1, 1], [], []>} : vector<8x16xf32>, vector<16x32xf32>, vector<8x32xf32> -> vector<8x32xf32>
    %cst_108 = arith.constant dense<0.000000e+00> : vector<8x1xf32>
    %272 = tpu.matmul %4, %268, %cst_108 {dimension_numbers = #tpu.dot_dimension_numbers<[1], [0], [0], [1], [0, 0, 1, 1], [], []>} : vector<8x16xf32>, vector<16x1xf32>, vector<8x1xf32> -> vector<8x1xf32>
    %cst_109 = arith.constant 0.000000e+00 : f32
    %273 = vector.broadcast %cst_109 : f32 to vector<8x1xf32>
    %274 = arith.cmpf ogt, %272, %273 : vector<8x1xf32>
    %cst_110 = arith.constant 1.000000e+00 : f32
    %275 = vector.broadcast %cst_110 : f32 to vector<8x1xf32>
    %276 = arith.select %274, %272, %275 : vector<8x1xi1>, vector<8x1xf32>
    %277 = tpu.reciprocal %276 {approx = true} : vector<8x1xf32> -> vector<8x1xf32>
    %278 = vector.broadcast %277 : vector<8x1xf32> to vector<8x32xf32>
    %279 = arith.mulf %271, %278 : vector<8x32xf32>
    %cst_111 = arith.constant 0.000000e+00 : f32
    %280 = vector.broadcast %cst_111 : f32 to vector<8x32xf32>
    %281 = arith.cmpf ogt, %279, %280 : vector<8x32xf32>
    %cst_112 = arith.constant 0.000000e+00 : f32
    %282 = vector.broadcast %cst_112 : f32 to vector<8x32xf32>
    %283 = arith.minimumf %279, %282 : vector<8x32xf32>
    %284 = math.exp %283 : vector<8x32xf32>
    %cst_113 = arith.constant 1.000000e+00 : f32
    %285 = vector.broadcast %cst_113 : f32 to vector<8x32xf32>
    %286 = arith.subf %284, %285 : vector<8x32xf32>
    %287 = arith.select %281, %279, %286 : vector<8x32xi1>, vector<8x32xf32>
    %288 = tpu.concatenate %287, %244 in 1 : vector<8x32xf32>, vector<8x32xf32> -> vector<8x64xf32>
    %c640 = arith.constant 640 : index
    %c0_114 = arith.constant 0 : index
    %289 = vector.load %arg6[%c640, %c0_114] : memref<816x128xf32, #tpu.memory_space<vmem>>, vector<64x128xf32>
    %cst_115 = arith.constant dense<0.000000e+00> : vector<8x128xf32>
    %290 = tpu.matmul %288, %289, %cst_115 {dimension_numbers = #tpu.dot_dimension_numbers<[1], [0], [0], [1], [0, 0, 1, 1], [], []>} : vector<8x64xf32>, vector<64x128xf32>, vector<8x128xf32> -> vector<8x128xf32>
    %c632 = arith.constant 632 : index
    %c0_116 = arith.constant 0 : index
    %291 = vector.load %arg6[%c632, %c0_116] : memref<816x128xf32, #tpu.memory_space<vmem>>, vector<1x128xf32>
    %292 = vector.broadcast %291 : vector<1x128xf32> to vector<8x128xf32>
    %293 = arith.addf %290, %292 : vector<8x128xf32>
    %294 = vector.extract_strided_slice %293 {offsets = [0, 0], sizes = [8, 32], strides = [1, 1]} : vector<8x128xf32> to vector<8x32xf32>
    %295 = arith.negf %294 : vector<8x32xf32>
    %296 = math.exp %295 : vector<8x32xf32>
    %cst_117 = arith.constant 1.000000e+00 : f32
    %297 = vector.broadcast %cst_117 : f32 to vector<8x32xf32>
    %298 = arith.addf %297, %296 : vector<8x32xf32>
    %299 = arith.divf %297, %298 : vector<8x32xf32>
    %300 = vector.extract_strided_slice %293 {offsets = [0, 32], sizes = [8, 32], strides = [1, 1]} : vector<8x128xf32> to vector<8x32xf32>
    %301 = arith.negf %300 : vector<8x32xf32>
    %302 = math.exp %301 : vector<8x32xf32>
    %cst_118 = arith.constant 1.000000e+00 : f32
    %303 = vector.broadcast %cst_118 : f32 to vector<8x32xf32>
    %304 = arith.addf %303, %302 : vector<8x32xf32>
    %305 = arith.divf %303, %304 : vector<8x32xf32>
    %306 = vector.extract_strided_slice %293 {offsets = [0, 64], sizes = [8, 32], strides = [1, 1]} : vector<8x128xf32> to vector<8x32xf32>
    %307 = vector.extract_strided_slice %293 {offsets = [0, 96], sizes = [8, 32], strides = [1, 1]} : vector<8x128xf32> to vector<8x32xf32>
    %308 = arith.mulf %299, %307 : vector<8x32xf32>
    %309 = arith.addf %306, %308 : vector<8x32xf32>
    %310 = math.tanh %309 : vector<8x32xf32>
    %cst_119 = arith.constant 1.000000e+00 : f32
    %311 = vector.broadcast %cst_119 : f32 to vector<8x32xf32>
    %312 = arith.subf %311, %305 : vector<8x32xf32>
    %313 = arith.mulf %312, %310 : vector<8x32xf32>
    %314 = arith.mulf %305, %244 : vector<8x32xf32>
    %315 = arith.addf %313, %314 : vector<8x32xf32>
    %cst_120 = arith.constant 0.000000e+00 : f32
    %316 = vector.broadcast %cst_120 : f32 to vector<8x32xf32>
    %317 = arith.maximumf %315, %316 : vector<8x32xf32>
    %c416 = arith.constant 416 : index
    %c0_121 = arith.constant 0 : index
    %318 = vector.load %arg6[%c416, %c0_121] : memref<816x128xf32, #tpu.memory_space<vmem>>, vector<32x1xf32>
    %cst_122 = arith.constant dense<0.000000e+00> : vector<8x1xf32>
    %319 = tpu.matmul %317, %318, %cst_122 {dimension_numbers = #tpu.dot_dimension_numbers<[1], [0], [0], [1], [0, 0, 1, 1], [], []>} : vector<8x32xf32>, vector<32x1xf32>, vector<8x1xf32> -> vector<8x1xf32>
    %c408 = arith.constant 408 : index
    %c0_123 = arith.constant 0 : index
    %320 = vector.load %arg6[%c408, %c0_123] : memref<816x128xf32, #tpu.memory_space<vmem>>, vector<1x1xf32>
    %321 = vector.broadcast %320 : vector<1x1xf32> to vector<8x1xf32>
    %322 = arith.addf %319, %321 : vector<8x1xf32>
    %c0_124 = arith.constant 0 : index
    %c0_125 = arith.constant 0 : index
    %323 = vector.load %arg7[%c0_124, %c0_125] : memref<8x1xf32, #tpu.memory_space<vmem>>, vector<8x1xf32>
    tpu.vector_store %arg7[%c0_124, %c0_125], %322 {strides = array<i32>} : memref<8x1xf32, #tpu.memory_space<vmem>>, vector<8x1xf32>,
    return
  }
  func.func @transform_0(%arg0: i32) -> (i32, i32) {
    %c0_i32 = arith.constant 0 : i32
    %c0_i32_0 = arith.constant 0 : i32
    %c0_i32_1 = arith.constant 0 : i32
    return %c0_i32, %c0_i32_0 : i32, i32
  }
  func.func @transform_1(%arg0: i32) -> (i32, i32) {
    %c0_i32 = arith.constant 0 : i32
    %c0_i32_0 = arith.constant 0 : i32
    %c0_i32_1 = arith.constant 0 : i32
    return %c0_i32, %c0_i32_0 : i32, i32
  }
  func.func @transform_2(%arg0: i32) -> (i32, i32) {
    %c0_i32 = arith.constant 0 : i32
    %c0_i32_0 = arith.constant 0 : i32
    %c0_i32_1 = arith.constant 0 : i32
    return %c0_i32, %c0_i32_0 : i32, i32
  }
  func.func @transform_3(%arg0: i32) -> (i32, i32) {
    %c0_i32 = arith.constant 0 : i32
    %c0_i32_0 = arith.constant 0 : i32
    %c0_i32_1 = arith.constant 0 : i32
    return %c0_i32, %c0_i32_0 : i32, i32
  }
  func.func @transform_4(%arg0: i32) -> (i32, i32) {
    %c0_i32 = arith.constant 0 : i32
    %c0_i32_0 = arith.constant 0 : i32
    %c0_i32_1 = arith.constant 0 : i32
    return %c0_i32, %c0_i32_0 : i32, i32
  }
  func.func @transform_5(%arg0: i32) -> (i32, i32) {
    %c0_i32 = arith.constant 0 : i32
    %c0_i32_0 = arith.constant 0 : i32
    %c0_i32_1 = arith.constant 0 : i32
    return %c0_i32, %c0_i32_0 : i32, i32
  }
  func.func @transform_6(%arg0: i32) -> (i32, i32) {
    %c0_i32 = arith.constant 0 : i32
    %c0_i32_0 = arith.constant 0 : i32
    %c0_i32_1 = arith.constant 0 : i32
    return %c0_i32, %c0_i32_0 : i32, i32
  }
}

</mosaic_0001>

<llo_original>
// kernel: attentivefp_forward.1
$region0: #{attentivefp_forward.1}
  #allocation0 [shape = 'u32[]', space=smem, size = 0x4, offset = 0x4, fixed_abs, tag = 'smem constant byte address 0x4 - core index']
  #allocation1 [shape = 'u32[144,128]{1,0:T(1,128)}', space=vmem, size = 0x12000, scoped, tag = 'internal scratch']
  %s0 = inlined_call_operand.vmem [shape: f32[16,8], index: 0, kind: input, shape index: {}]
  %s1 = inlined_call_operand.vmem [shape: f32[24,6], index: 1, kind: input, shape index: {}]
  %s2 = inlined_call_operand.vmem [shape: f32[24,16], index: 2, kind: input, shape index: {}]
  %s3 = inlined_call_operand.vmem [shape: f32[24,16], index: 3, kind: input, shape index: {}]
  %s4 = inlined_call_operand.vmem [shape: f32[8,16], index: 4, kind: input, shape index: {}]
  %s5 = inlined_call_operand.vmem [shape: f32[816,128], index: 5, kind: input, shape index: {}]
  %s6 = inlined_call_operand.vmem [shape: f32[8,1], index: 6, kind: output, shape index: {}]
  %s7 = sld [smem:[#allocation0]]
  $region34: #{attentivefp_forward.1} parent=0
    _
  %s9 = ssub.s32 1, %s7
  %s10 = scalar_select 0, %s9, %s7
  // Predicated region
  $region2: #{attentivefp_forward.1} parent=0 // pred_check
    _
  $region3: #{attentivefp_forward.1} parent=0 // pred_check_branch
    %12 = sbr.rel (0) target = $region5
  $region4: #{attentivefp_forward.1} parent=0 // pred_region
    _
  $region5: #{attentivefp_forward.1} parent=0 // pred_fallthru
    _
  // Predicated region
  $region6: #{attentivefp_forward.1} parent=0 // pred_check
    _
  $region7: #{attentivefp_forward.1} parent=0 // pred_check_branch
    %14 = sbr.rel (0) target = $region9
  $region8: #{attentivefp_forward.1} parent=0 // pred_region
    _
  $region9: #{attentivefp_forward.1} parent=0 // pred_fallthru
    _
  // Predicated region
  $region10: #{attentivefp_forward.1} parent=0 // pred_check
    _
  $region11: #{attentivefp_forward.1} parent=0 // pred_check_branch
    %16 = sbr.rel (0) target = $region13
  $region12: #{attentivefp_forward.1} parent=0 // pred_region
    _
  $region13: #{attentivefp_forward.1} parent=0 // pred_fallthru
    _
  // Predicated region
  $region14: #{attentivefp_forward.1} parent=0 // pred_check
    _
  $region15: #{attentivefp_forward.1} parent=0 // pred_check_branch
    %18 = sbr.rel (0) target = $region17
  $region16: #{attentivefp_forward.1} parent=0 // pred_region
    _
  $region17: #{attentivefp_forward.1} parent=0 // pred_fallthru
    _
  // Predicated region
  $region18: #{attentivefp_forward.1} parent=0 // pred_check
    _
  $region19: #{attentivefp_forward.1} parent=0 // pred_check_branch
    %20 = sbr.rel (0) target = $region21
  $region20: #{attentivefp_forward.1} parent=0 // pred_region
    _
  $region21: #{attentivefp_forward.1} parent=0 // pred_fallthru
    _
  // Predicated region
  $region22: #{attentivefp_forward.1} parent=0 // pred_check
    _
  $region23: #{attentivefp_forward.1} parent=0 // pred_check_branch
    %22 = sbr.rel (0) target = $region25
  $region24: #{attentivefp_forward.1} parent=0 // pred_region
    _
  $region25: #{attentivefp_forward.1} parent=0 // pred_fallthru
    _
  %v23 = vld [vmem:[%s0] sm:$0xff]
  %v24 = vld [vmem:[%s0 + $0x8] sm:$0xff]
  %v25 = vld [vmem:[%s1] sm:$0xff]
  %v26 = vld [vmem:[%s1 + $0x8] sm:$0xff]
  %v27 = vld [vmem:[%s1 + $0x10] sm:$0xff]
  %v28 = vld [vmem:[%s2] sm:$0xff]
  %v29 = vld [vmem:[%s2 + $0x8] sm:$0xff]
  %v30 = vld [vmem:[%s2 + $0x10] sm:$0xff]
  %v31 = vld [vmem:[%s3] sm:$0xff]
  %v32 = vld [vmem:[%s3 + $0x8] sm:$0xff]
  %v33 = vld [vmem:[%s3 + $0x10] sm:$0xff]
  %v34 = vld [vmem:[%s4] sm:$0xff]
  %v35 = vld [vmem:[%s5 + $0xd8] sm:$0xff]
  %v36 = vld [vmem:[%s5 + $0xd0] sm:$0x1]
  %v37 = vlaneseq
  %v38 = vshrl.u32 %v37, 7
  %v39 = vsub.s32 0, %v38
  %v40 = vrot.slane %v36, %v39
  %vm41 = vcmask 64512
  %v43 = vsel %vm41, %v23, 0
  %v46 = vsel %vm41, %v24, 0
  %48 = vmatprep.subr.mxu0 0.0
  %49 = vmatpush1.msra.mxu0 %v35
  %50 = vmatprep.subr.mxu0 0.0
  %51 = vmatpush1.msra.mxu0 0.0
  %52 = vmatprep.subr.mxu0 0.0
  %53 = vmatpush1.msra.mxu0 0.0
  %54 = vmatprep.subr.mxu0 0.0
  %55 = vmatpush1.msra.mxu0 0.0
  %56 = vmatprep.subr.mxu0 0.0
  %57 = vmatpush1.msra.mxu0 0.0
  %58 = vmatprep.subr.mxu0 0.0
  %59 = vmatpush1.msra.mxu0 0.0
  %60 = vmatprep.subr.mxu0 0.0
  %61 = vmatpush1.msra.mxu0 0.0
  %62 = vmatprep.subr.mxu0 0.0
  %63 = vmatpush1.msra.mxu0 0.0
  %64 = vmatprep.subr.mxu0 0.0
  %65 = vmatpush1.msra.mxu0 0.0
  %66 = vmatprep.subr.mxu0 0.0
  %67 = vmatpush1.msra.mxu0 0.0
  %68 = vmatprep.subr.mxu0 0.0
  %69 = vmatpush1.msra.mxu0 0.0
  %70 = vmatprep.subr.mxu0 0.0
  %71 = vmatpush1.msra.mxu0 0.0
  %72 = vmatprep.subr.mxu0 0.0
  %73 = vmatpush1.msra.mxu0 0.0
  %74 = vmatprep.subr.mxu0 0.0
  %75 = vmatpush1.msra.mxu0 0.0
  %76 = vmatprep.subr.mxu0 0.0
  %77 = vmatpush1.msra.mxu0 0.0
  %78 = vmatprep.subr.mxu0 0.0
  %79 = vmatpush1.msra.mxu0 0.0
  %80 = vmatprep.subr.mxu0 0.0
  %81 = vmatpush1.msra.mxu0 0.0
  %82 = vmatprep.subr.mxu0 0.0
  %83 = vmatpush1.msra.mxu0 0.0
  %84 = vmatprep.subr.mxu0 0.0
  %85 = vmatpush1.msra.mxu0 0.0
  %86 = vmatprep.subr.mxu0 0.0
  %87 = vmatpush1.msra.mxu0 0.0
  %88 = vmatprep.subr.mxu0 0.0
  %89 = vmatpush1.msra.mxu0 0.0
  %90 = vmatprep.subr.mxu0 0.0
  %91 = vmatpush1.msra.mxu0 0.0
  %92 = vmatprep.subr.mxu0 0.0
  %93 = vmatpush1.msra.mxu0 0.0
  %94 = vmatprep.subr.mxu0 0.0
  %95 = vmatpush1.msra.mxu0 0.0
  %96 = vmatprep.subr.mxu0 0.0
  %97 = vmatpush1.msra.mxu0 0.0
  %98 = vmatprep.subr.mxu0 0.0
  %99 = vmatpush1.msra.mxu0 0.0
  %100 = vmatprep.subr.mxu0 0.0
  %101 = vmatpush1.msra.mxu0 0.0
  %102 = vmatprep.subr.mxu0 0.0
  %103 = vmatpush1.msra.mxu0 0.0
  %104 = vmatprep.subr.mxu0 0.0
  %105 = vmatpush1.msra.mxu0 0.0
  %106 = vmatprep.subr.mxu0 0.0
  %107 = vmatpush1.msra.mxu0 0.0
  %108 = vmatprep.subr.mxu0 0.0
  %109 = vmatpush1.msra.mxu0 0.0
  %110 = vmatprep.subr.mxu0 0.0
  %111 = vmatpush1.msra.mxu0 0.0
  %112 = vmatprep.mubr.f32.mxu0 0.0
  %113 = vmatmul.mubr.f32.gmra.mrb[0].mxu0 %v43
  %v114 = vpop.f32.mrb[0].mxu0
  %v115 = vadd.f32 %v40, %v114
  %v116 = vpop.f32.mrb[0].mxu0
  %117 = vmatprep.mubr.f32.mxu0 0.0
  %118 = vmatmul.mubr.f32.gmra.mrb[0].mxu0 %v46
  %v119 = vpop.f32.mrb[0].mxu0
  %v120 = vadd.f32 %v40, %v119
  %v121 = vpop.f32.mrb[0].mxu0
  %122 = vdwg.mxu0
  %vm123 = vcmp.gt.f32.partialorder %v115, 0.0
  %vm124 = vcmp.gt.f32.partialorder %v120, 0.0
  %v125 = vmul.f32 %v115, 0.01
  %v126 = vmul.f32 %v120, 0.01
  %v127 = vsel %vm123, %v115, %v125
  %v128 = vsel %vm124, %v120, %v126
  %vm129 = vcmask 130048
  %v131 = vsel %vm129, %v28, 0
  %v134 = vsel %vm129, %v29, 0
  %v137 = vsel %vm129, %v30, 0
  %139 = vmatprep.subr.mxu0 0.0
  %140 = vmatpush1.msra.mxu0 %v23
  %141 = vmatprep.subr.mxu0 0.0
  %142 = vmatpush1.msra.mxu0 %v24
  %143 = vmatprep.subr.mxu0 0.0
  %144 = vmatpush1.msra.mxu0 0.0
  %145 = vmatprep.subr.mxu0 0.0
  %146 = vmatpush1.msra.mxu0 0.0
  %147 = vmatprep.subr.mxu0 0.0
  %148 = vmatpush1.msra.mxu0 0.0
  %149 = vmatprep.subr.mxu0 0.0
  %150 = vmatpush1.msra.mxu0 0.0
  %151 = vmatprep.subr.mxu0 0.0
  %152 = vmatpush1.msra.mxu0 0.0
  %153 = vmatprep.subr.mxu0 0.0
  %154 = vmatpush1.msra.mxu0 0.0
  %155 = vmatprep.subr.mxu0 0.0
  %156 = vmatpush1.msra.mxu0 0.0
  %157 = vmatprep.subr.mxu0 0.0
  %158 = vmatpush1.msra.mxu0 0.0
  %159 = vmatprep.subr.mxu0 0.0
  %160 = vmatpush1.msra.mxu0 0.0
  %161 = vmatprep.subr.mxu0 0.0
  %162 = vmatpush1.msra.mxu0 0.0
  %163 = vmatprep.subr.mxu0 0.0
  %164 = vmatpush1.msra.mxu0 0.0
  %165 = vmatprep.subr.mxu0 0.0
  %166 = vmatpush1.msra.mxu0 0.0
  %167 = vmatprep.subr.mxu0 0.0
  %168 = vmatpush1.msra.mxu0 0.0
  %169 = vmatprep.subr.mxu0 0.0
  %170 = vmatpush1.msra.mxu0 0.0
  %171 = vmatprep.subr.mxu0 0.0
  %172 = vmatpush1.msra.mxu0 0.0
  %173 = vmatprep.subr.mxu0 0.0
  %174 = vmatpush1.msra.mxu0 0.0
  %175 = vmatprep.subr.mxu0 0.0
  %176 = vmatpush1.msra.mxu0 0.0
  %177 = vmatprep.subr.mxu0 0.0
  %178 = vmatpush1.msra.mxu0 0.0
  %179 = vmatprep.subr.mxu0 0.0
  %180 = vmatpush1.msra.mxu0 0.0
  %181 = vmatprep.subr.mxu0 0.0
  %182 = vmatpush1.msra.mxu0 0.0
  %183 = vmatprep.subr.mxu0 0.0
  %184 = vmatpush1.msra.mxu0 0.0
  %185 = vmatprep.subr.mxu0 0.0
  %186 = vmatpush1.msra.mxu0 0.0
  %187 = vmatprep.subr.mxu0 0.0
  %188 = vmatpush1.msra.mxu0 0.0
  %189 = vmatprep.subr.mxu0 0.0
  %190 = vmatpush1.msra.mxu0 0.0
  %191 = vmatprep.subr.mxu0 0.0
  %192 = vmatpush1.msra.mxu0 0.0
  %193 = vmatprep.subr.mxu0 0.0
  %194 = vmatpush1.msra.mxu0 0.0
  %195 = vmatprep.subr.mxu0 0.0
  %196 = vmatpush1.msra.mxu0 0.0
  %197 = vmatprep.subr.mxu0 0.0
  %198 = vmatpush1.msra.mxu0 0.0
  %199 = vmatprep.subr.mxu0 0.0
  %200 = vmatpush1.msra.mxu0 0.0
  %201 = vmatprep.subr.mxu0 0.0
  %202 = vmatpush1.msra.mxu0 0.0
  %203 = vmatprep.mubr.f32.mxu0 0.0
  %204 = vmatmul.mubr.f32.gmra.mrb[0].mxu0 %v131
  %v205 = vpop.f32.mrb[0].mxu0
  %v206 = vadd.f32 0.0, %v205
  %v207 = vpop.f32.mrb[0].mxu0
  %208 = vmatprep.mubr.f32.mxu0 0.0
  %209 = vmatmul.mubr.f32.gmra.mrb[0].mxu0 %v134
  %v210 = vpop.f32.mrb[0].mxu0
  %v211 = vadd.f32 0.0, %v210
  %v212 = vpop.f32.mrb[0].mxu0
  %213 = vmatprep.mubr.f32.mxu0 0.0
  %214 = vmatmul.mubr.f32.gmra.mrb[0].mxu0 %v137
  %v215 = vpop.f32.mrb[0].mxu0
  %v216 = vadd.f32 0.0, %v215
  %v217 = vpop.f32.mrb[0].mxu0
  %218 = vdwg.mxu0
  %222 = vrot.lane.b32.xlu0 %v25, 8
  %v223 = vpop.permute.xlu0 %222
  %224 = vrot.lane.b32.xlu0 %v26, 8
  %v225 = vpop.permute.xlu0 %224
  %226 = vrot.lane.b32.xlu0 %v27, 8
  %v227 = vpop.permute.xlu0 %226
  %v231 = vsel %vm41, %v206, %v223
  %v232 = vsel %vm41, %v211, %v225
  %v233 = vsel %vm41, %v216, %v227
  %v234 = vld [vmem:[%s5 + $0x78] sm:$0xff]
  %v235 = vld [vmem:[%s5 + $0x80] sm:$0x3f]
  %v236 = vld [vmem:[%s5 + $0x70] sm:$0x1]
  %v237 = vlaneseq
  %v238 = vshrl.u32 %v237, 7
  %v239 = vsub.s32 0, %v238
  %v240 = vrot.slane %v236, %v239
  %vm241 = vcmask 113664
  %v243 = vsel %vm241, %v231, 0
  %v246 = vsel %vm241, %v232, 0
  %v249 = vsel %vm241, %v233, 0
  %vm251 = vcmask 1045504
  %v253 = vsel %vm251, %v235, 0
  %255 = vmatprep.subr.mxu0 0.0
  %256 = vmatpush1.msra.mxu0 %v234
  %257 = vmatprep.subr.mxu0 0.0
  %258 = vmatpush1.msra.mxu0 %v253
  %259 = vmatprep.subr.mxu0 0.0
  %260 = vmatpush1.msra.mxu0 0.0
  %261 = vmatprep.subr.mxu0 0.0
  %262 = vmatpush1.msra.mxu0 0.0
  %263 = vmatprep.subr.mxu0 0.0
  %264 = vmatpush1.msra.mxu0 0.0
  %265 = vmatprep.subr.mxu0 0.0
  %266 = vmatpush1.msra.mxu0 0.0
  %267 = vmatprep.subr.mxu0 0.0
  %268 = vmatpush1.msra.mxu0 0.0
  %269 = vmatprep.subr.mxu0 0.0
  %270 = vmatpush1.msra.mxu0 0.0
  %271 = vmatprep.subr.mxu0 0.0
  %272 = vmatpush1.msra.mxu0 0.0
  %273 = vmatprep.subr.mxu0 0.0
  %274 = vmatpush1.msra.mxu0 0.0
  %275 = vmatprep.subr.mxu0 0.0
  %276 = vmatpush1.msra.mxu0 0.0
  %277 = vmatprep.subr.mxu0 0.0
  %278 = vmatpush1.msra.mxu0 0.0
  %279 = vmatprep.subr.mxu0 0.0
  %280 = vmatpush1.msra.mxu0 0.0
  %281 = vmatprep.subr.mxu0 0.0
  %282 = vmatpush1.msra.mxu0 0.0
  %283 = vmatprep.subr.mxu0 0.0
  %284 = vmatpush1.msra.mxu0 0.0
  %285 = vmatprep.subr.mxu0 0.0
  %286 = vmatpush1.msra.mxu0 0.0
  %287 = vmatprep.subr.mxu0 0.0
  %288 = vmatpush1.msra.mxu0 0.0
  %289 = vmatprep.subr.mxu0 0.0
  %290 = vmatpush1.msra.mxu0 0.0
  %291 = vmatprep.subr.mxu0 0.0
  %292 = vmatpush1.msra.mxu0 0.0
  %293 = vmatprep.subr.mxu0 0.0
  %294 = vmatpush1.msra.mxu0 0.0
  %295 = vmatprep.subr.mxu0 0.0
  %296 = vmatpush1.msra.mxu0 0.0
  %297 = vmatprep.subr.mxu0 0.0
  %298 = vmatpush1.msra.mxu0 0.0
  %299 = vmatprep.subr.mxu0 0.0
  %300 = vmatpush1.msra.mxu0 0.0
  %301 = vmatprep.subr.mxu0 0.0
  %302 = vmatpush1.msra.mxu0 0.0
  %303 = vmatprep.subr.mxu0 0.0
  %304 = vmatpush1.msra.mxu0 0.0
  %305 = vmatprep.subr.mxu0 0.0
  %306 = vmatpush1.msra.mxu0 0.0
  %307 = vmatprep.subr.mxu0 0.0
  %308 = vmatpush1.msra.mxu0 0.0
  %309 = vmatprep.subr.mxu0 0.0
  %310 = vmatpush1.msra.mxu0 0.0
  %311 = vmatprep.subr.mxu0 0.0
  %312 = vmatpush1.msra.mxu0 0.0
  %313 = vmatprep.subr.mxu0 0.0
  %314 = vmatpush1.msra.mxu0 0.0
  %315 = vmatprep.subr.mxu0 0.0
  %316 = vmatpush1.msra.mxu0 0.0
  %317 = vmatprep.subr.mxu0 0.0
  %318 = vmatpush1.msra.mxu0 0.0
  %319 = vmatprep.mubr.f32.mxu0 0.0
  %320 = vmatmul.mubr.f32.gmra.mrb[0].mxu0 %v243
  %v321 = vpop.f32.mrb[0].mxu0
  %v322 = vadd.f32 %v240, %v321
  %v323 = vpop.f32.mrb[0].mxu0
  %324 = vmatprep.mubr.f32.mxu0 0.0
  %325 = vmatmul.mubr.f32.gmra.mrb[0].mxu0 %v246
  %v326 = vpop.f32.mrb[0].mxu0
  %v327 = vadd.f32 %v240, %v326
  %v328 = vpop.f32.mrb[0].mxu0
  %329 = vmatprep.mubr.f32.mxu0 0.0
  %330 = vmatmul.mubr.f32.gmra.mrb[0].mxu0 %v249
  %v331 = vpop.f32.mrb[0].mxu0
  %v332 = vadd.f32 %v240, %v331
  %v333 = vpop.f32.mrb[0].mxu0
  %334 = vdwg.mxu0
  %vm335 = vcmp.gt.f32.partialorder %v322, 0.0
  %vm336 = vcmp.gt.f32.partialorder %v327, 0.0
  %vm337 = vcmp.gt.f32.partialorder %v332, 0.0
  %v338 = vmul.f32 %v322, 0.01
  %v339 = vmul.f32 %v327, 0.01
  %v340 = vmul.f32 %v332, 0.01
  %v341 = vsel %vm335, %v322, %v338
  %v342 = vsel %vm336, %v327, %v339
  %v343 = vsel %vm337, %v332, %v340
  %v345 = vsel %vm129, %v31, 0
  %v348 = vsel %vm129, %v32, 0
  %v351 = vsel %vm129, %v33, 0
  %353 = vmatprep.subr.mxu0 0.0
  %354 = vmatpush1.msra.mxu0 %v127
  %355 = vmatprep.subr.mxu0 0.0
  %356 = vmatpush1.msra.mxu0 %v128
  %357 = vmatprep.subr.mxu0 0.0
  %358 = vmatpush1.msra.mxu0 0.0
  %359 = vmatprep.subr.mxu0 0.0
  %360 = vmatpush1.msra.mxu0 0.0
  %361 = vmatprep.subr.mxu0 0.0
  %362 = vmatpush1.msra.mxu0 0.0
  %363 = vmatprep.subr.mxu0 0.0
  %364 = vmatpush1.msra.mxu0 0.0
  %365 = vmatprep.subr.mxu0 0.0
  %366 = vmatpush1.msra.mxu0 0.0
  %367 = vmatprep.subr.mxu0 0.0
  %368 = vmatpush1.msra.mxu0 0.0
  %369 = vmatprep.subr.mxu0 0.0
  %370 = vmatpush1.msra.mxu0 0.0
  %371 = vmatprep.subr.mxu0 0.0
  %372 = vmatpush1.msra.mxu0 0.0
  %373 = vmatprep.subr.mxu0 0.0
  %374 = vmatpush1.msra.mxu0 0.0
  %375 = vmatprep.subr.mxu0 0.0
  %376 = vmatpush1.msra.mxu0 0.0
  %377 = vmatprep.subr.mxu0 0.0
  %378 = vmatpush1.msra.mxu0 0.0
  %379 = vmatprep.subr.mxu0 0.0
  %380 = vmatpush1.msra.mxu0 0.0
  %381 = vmatprep.subr.mxu0 0.0
  %382 = vmatpush1.msra.mxu0 0.0
  %383 = vmatprep.subr.mxu0 0.0
  %384 = vmatpush1.msra.mxu0 0.0
  %385 = vmatprep.subr.mxu0 0.0
  %386 = vmatpush1.msra.mxu0 0.0
  %387 = vmatprep.subr.mxu0 0.0
  %388 = vmatpush1.msra.mxu0 0.0
  %389 = vmatprep.subr.mxu0 0.0
  %390 = vmatpush1.msra.mxu0 0.0
  %391 = vmatprep.subr.mxu0 0.0
  %392 = vmatpush1.msra.mxu0 0.0
  %393 = vmatprep.subr.mxu0 0.0
  %394 = vmatpush1.msra.mxu0 0.0
  %395 = vmatprep.subr.mxu0 0.0
  %396 = vmatpush1.msra.mxu0 0.0
  %397 = vmatprep.subr.mxu0 0.0
  %398 = vmatpush1.msra.mxu0 0.0
  %399 = vmatprep.subr.mxu0 0.0
  %400 = vmatpush1.msra.mxu0 0.0
  %401 = vmatprep.subr.mxu0 0.0
  %402 = vmatpush1.msra.mxu0 0.0
  %403 = vmatprep.subr.mxu0 0.0
  %404 = vmatpush1.msra.mxu0 0.0
  %405 = vmatprep.subr.mxu0 0.0
  %406 = vmatpush1.msra.mxu0 0.0
  %407 = vmatprep.subr.mxu0 0.0
  %408 = vmatpush1.msra.mxu0 0.0
  %409 = vmatprep.subr.mxu0 0.0
  %410 = vmatpush1.msra.mxu0 0.0
  %411 = vmatprep.subr.mxu0 0.0
  %412 = vmatpush1.msra.mxu0 0.0
  %413 = vmatprep.subr.mxu0 0.0
  %414 = vmatpush1.msra.mxu0 0.0
  %415 = vmatprep.subr.mxu0 0.0
  %416 = vmatpush1.msra.mxu0 0.0
  %417 = vmatprep.mubr.f32.mxu0 0.0
  %418 = vmatmul.mubr.f32.gmra.mrb[0].mxu0 %v345
  %v419 = vpop.f32.mrb[0].mxu0
  %v420 = vadd.f32 0.0, %v419
  %v421 = vpop.f32.mrb[0].mxu0
  %422 = vmatprep.mubr.f32.mxu0 0.0
  %423 = vmatmul.mubr.f32.gmra.mrb[0].mxu0 %v348
  %v424 = vpop.f32.mrb[0].mxu0
  %v425 = vadd.f32 0.0, %v424
  %v426 = vpop.f32.mrb[0].mxu0
  %427 = vmatprep.mubr.f32.mxu0 0.0
  %428 = vmatmul.mubr.f32.gmra.mrb[0].mxu0 %v351
  %v429 = vpop.f32.mrb[0].mxu0
  %v430 = vadd.f32 0.0, %v429
  %v431 = vpop.f32.mrb[0].mxu0
  %432 = vdwg.mxu0
  %436 = vrot.lane.b32.xlu0 %v341, 32
  %v437 = vpop.permute.xlu0 %436
  %438 = vrot.lane.b32.xlu0 %v342, 32
  %v439 = vpop.permute.xlu0 %438
  %440 = vrot.lane.b32.xlu0 %v343, 32
  %v441 = vpop.permute.xlu0 %440
  %vm445 = vcmask 261120
  %v446 = vsel %vm445, %v420, %v437
  %v447 = vsel %vm445, %v425, %v439
  %v448 = vsel %vm445, %v430, %v441
  %v449 = vld [vmem:[%s5 + $0x90] sm:$0xff]
  %v450 = vld [vmem:[%s5 + $0x98] sm:$0xff]
  %v451 = vld [vmem:[%s5 + $0xa0] sm:$0xff]
  %v452 = vld [vmem:[%s5 + $0xa8] sm:$0xff]
  %v453 = vld [vmem:[%s5 + $0xb0] sm:$0xff]
  %v454 = vld [vmem:[%s5 + $0xb8] sm:$0xff]
  %v455 = vld [vmem:[%s5 + $0xc0] sm:$0xff]
  %v456 = vld [vmem:[%s5 + $0xc8] sm:$0xff]
  %v457 = vld [vmem:[%s5 + $0x88] sm:$0x1]
  %v458 = vlaneseq
  %v459 = vshrl.u32 %v458, 7
  %v460 = vsub.s32 0, %v459
  %v461 = vrot.slane %v457, %v460
  %vm462 = vcmask 523264
  %v464 = vsel %vm462, %v446, 0
  %v467 = vsel %vm462, %v447, 0
  %v470 = vsel %vm462, %v448, 0
  %472 = vmatprep.subr.mxu0 0.0
  %473 = vmatpush1.msra.mxu0 %v449
  %474 = vmatprep.subr.mxu0 0.0
  %475 = vmatpush1.msra.mxu0 %v450
  %476 = vmatprep.subr.mxu0 0.0
  %477 = vmatpush1.msra.mxu0 %v451
  %478 = vmatprep.subr.mxu0 0.0
  %479 = vmatpush1.msra.mxu0 %v452
  %480 = vmatprep.subr.mxu0 0.0
  %481 = vmatpush1.msra.mxu0 %v453
  %482 = vmatprep.subr.mxu0 0.0
  %483 = vmatpush1.msra.mxu0 %v454
  %484 = vmatprep.subr.mxu0 0.0
  %485 = vmatpush1.msra.mxu0 %v455
  %486 = vmatprep.subr.mxu0 0.0
  %487 = vmatpush1.msra.mxu0 %v456
  %488 = vmatprep.subr.mxu0 0.0
  %489 = vmatpush1.msra.mxu0 0.0
  %490 = vmatprep.subr.mxu0 0.0
  %491 = vmatpush1.msra.mxu0 0.0
  %492 = vmatprep.subr.mxu0 0.0
  %493 = vmatpush1.msra.mxu0 0.0
  %494 = vmatprep.subr.mxu0 0.0
  %495 = vmatpush1.msra.mxu0 0.0
  %496 = vmatprep.subr.mxu0 0.0
  %497 = vmatpush1.msra.mxu0 0.0
  %498 = vmatprep.subr.mxu0 0.0
  %499 = vmatpush1.msra.mxu0 0.0
  %500 = vmatprep.subr.mxu0 0.0
  %501 = vmatpush1.msra.mxu0 0.0
  %502 = vmatprep.subr.mxu0 0.0
  %503 = vmatpush1.msra.mxu0 0.0
  %504 = vmatprep.subr.mxu0 0.0
  %505 = vmatpush1.msra.mxu0 0.0
  %506 = vmatprep.subr.mxu0 0.0
  %507 = vmatpush1.msra.mxu0 0.0
  %508 = vmatprep.subr.mxu0 0.0
  %509 = vmatpush1.msra.mxu0 0.0
  %510 = vmatprep.subr.mxu0 0.0
  %511 = vmatpush1.msra.mxu0 0.0
  %512 = vmatprep.subr.mxu0 0.0
  %513 = vmatpush1.msra.mxu0 0.0
  %514 = vmatprep.subr.mxu0 0.0
  %515 = vmatpush1.msra.mxu0 0.0
  %516 = vmatprep.subr.mxu0 0.0
  %517 = vmatpush1.msra.mxu0 0.0
  %518 = vmatprep.subr.mxu0 0.0
  %519 = vmatpush1.msra.mxu0 0.0
  %520 = vmatprep.subr.mxu0 0.0
  %521 = vmatpush1.msra.mxu0 0.0
  %522 = vmatprep.subr.mxu0 0.0
  %523 = vmatpush1.msra.mxu0 0.0
  %524 = vmatprep.subr.mxu0 0.0
  %525 = vmatpush1.msra.mxu0 0.0
  %526 = vmatprep.subr.mxu0 0.0
  %527 = vmatpush1.msra.mxu0 0.0
  %528 = vmatprep.subr.mxu0 0.0
  %529 = vmatpush1.msra.mxu0 0.0
  %530 = vmatprep.subr.mxu0 0.0
  %531 = vmatpush1.msra.mxu0 0.0
  %532 = vmatprep.subr.mxu0 0.0
  %533 = vmatpush1.msra.mxu0 0.0
  %534 = vmatprep.subr.mxu0 0.0
  %535 = vmatpush1.msra.mxu0 0.0
  %536 = vmatprep.mubr.f32.mxu0 0.0
  %537 = vmatmul.mubr.f32.gmra.mrb[0].mxu0 %v464
  %v538 = vpop.f32.mrb[0].mxu0
  %v539 = vadd.f32 %v461, %v538
  %v540 = vpop.f32.mrb[0].mxu0
  %541 = vmatprep.mubr.f32.mxu0 0.0
  %542 = vmatmul.mubr.f32.gmra.mrb[0].mxu0 %v467
  %v543 = vpop.f32.mrb[0].mxu0
  %v544 = vadd.f32 %v461, %v543
  %v545 = vpop.f32.mrb[0].mxu0
  %546 = vmatprep.mubr.f32.mxu0 0.0
  %547 = vmatmul.mubr.f32.gmra.mrb[0].mxu0 %v470
  %v548 = vpop.f32.mrb[0].mxu0
  %v549 = vadd.f32 %v461, %v548
  %v550 = vpop.f32.mrb[0].mxu0
  %551 = vdwg.mxu0
  %vm552 = vcmp.gt.f32.partialorder %v539, 0.0
  %vm553 = vcmp.gt.f32.partialorder %v544, 0.0
  %vm554 = vcmp.gt.f32.partialorder %v549, 0.0
  %v555 = vmul.f32 %v539, 0.01
  %v556 = vmul.f32 %v544, 0.01
  %v557 = vmul.f32 %v549, 0.01
  %v558 = vsel %vm552, %v539, %v555
  %v559 = vsel %vm553, %v544, %v556
  %v560 = vsel %vm554, %v549, %v557
  %v561 = vld [vmem:[%s5 + $0x8] sm:$0xff]
  %v562 = vld [vmem:[%s5 + $0x10] sm:$0xff]
  %v563 = vld [vmem:[%s5 + $0x18] sm:$0xff]
  %v564 = vld [vmem:[%s5 + $0x20] sm:$0xff]
  %v565 = vld [vmem:[%s5] sm:$0x1]
  %v566 = vlaneseq
  %v567 = vshrl.u32 %v566, 7
  %v568 = vsub.s32 0, %v567
  %v569 = vrot.slane %v565, %v568
  %v570 = vsel %vm445, %v341, 0
  %v572 = vsel %vm445, %v342, 0
  %v574 = vsel %vm445, %v343, 0
  %576 = vmatprep.subr.mxu0 0.0
  %577 = vmatpush1.msra.mxu0 %v561
  %578 = vmatprep.subr.mxu0 0.0
  %579 = vmatpush1.msra.mxu0 %v562
  %580 = vmatprep.subr.mxu0 0.0
  %581 = vmatpush1.msra.mxu0 %v563
  %582 = vmatprep.subr.mxu0 0.0
  %583 = vmatpush1.msra.mxu0 %v564
  %584 = vmatprep.subr.mxu0 0.0
  %585 = vmatpush1.msra.mxu0 0.0
  %586 = vmatprep.subr.mxu0 0.0
  %587 = vmatpush1.msra.mxu0 0.0
  %588 = vmatprep.subr.mxu0 0.0
  %589 = vmatpush1.msra.mxu0 0.0
  %590 = vmatprep.subr.mxu0 0.0
  %591 = vmatpush1.msra.mxu0 0.0
  %592 = vmatprep.subr.mxu0 0.0
  %593 = vmatpush1.msra.mxu0 0.0
  %594 = vmatprep.subr.mxu0 0.0
  %595 = vmatpush1.msra.mxu0 0.0
  %596 = vmatprep.subr.mxu0 0.0
  %597 = vmatpush1.msra.mxu0 0.0
  %598 = vmatprep.subr.mxu0 0.0
  %599 = vmatpush1.msra.mxu0 0.0
  %600 = vmatprep.subr.mxu0 0.0
  %601 = vmatpush1.msra.mxu0 0.0
  %602 = vmatprep.subr.mxu0 0.0
  %603 = vmatpush1.msra.mxu0 0.0
  %604 = vmatprep.subr.mxu0 0.0
  %605 = vmatpush1.msra.mxu0 0.0
  %606 = vmatprep.subr.mxu0 0.0
  %607 = vmatpush1.msra.mxu0 0.0
  %608 = vmatprep.subr.mxu0 0.0
  %609 = vmatpush1.msra.mxu0 0.0
  %610 = vmatprep.subr.mxu0 0.0
  %611 = vmatpush1.msra.mxu0 0.0
  %612 = vmatprep.subr.mxu0 0.0
  %613 = vmatpush1.msra.mxu0 0.0
  %614 = vmatprep.subr.mxu0 0.0
  %615 = vmatpush1.msra.mxu0 0.0
  %616 = vmatprep.subr.mxu0 0.0
  %617 = vmatpush1.msra.mxu0 0.0
  %618 = vmatprep.subr.mxu0 0.0
  %619 = vmatpush1.msra.mxu0 0.0
  %620 = vmatprep.subr.mxu0 0.0
  %621 = vmatpush1.msra.mxu0 0.0
  %622 = vmatprep.subr.mxu0 0.0
  %623 = vmatpush1.msra.mxu0 0.0
  %624 = vmatprep.subr.mxu0 0.0
  %625 = vmatpush1.msra.mxu0 0.0
  %626 = vmatprep.subr.mxu0 0.0
  %627 = vmatpush1.msra.mxu0 0.0
  %628 = vmatprep.subr.mxu0 0.0
  %629 = vmatpush1.msra.mxu0 0.0
  %630 = vmatprep.subr.mxu0 0.0
  %631 = vmatpush1.msra.mxu0 0.0
  %632 = vmatprep.subr.mxu0 0.0
  %633 = vmatpush1.msra.mxu0 0.0
  %634 = vmatprep.subr.mxu0 0.0
  %635 = vmatpush1.msra.mxu0 0.0
  %636 = vmatprep.subr.mxu0 0.0
  %637 = vmatpush1.msra.mxu0 0.0
  %638 = vmatprep.subr.mxu0 0.0
  %639 = vmatpush1.msra.mxu0 0.0
  %640 = vmatprep.mubr.f32.mxu0 0.0
  %641 = vmatmul.mubr.f32.gmra.mrb[0].mxu0 %v570
  %v642 = vpop.f32.mrb[0].mxu0
  %v643 = vadd.f32 %v569, %v642
  %v644 = vpop.f32.mrb[0].mxu0
  %645 = vmatprep.mubr.f32.mxu0 0.0
  %646 = vmatmul.mubr.f32.gmra.mrb[0].mxu0 %v572
  %v647 = vpop.f32.mrb[0].mxu0
  %v648 = vadd.f32 %v569, %v647
  %v649 = vpop.f32.mrb[0].mxu0
  %650 = vmatprep.mubr.f32.mxu0 0.0
  %651 = vmatmul.mubr.f32.gmra.mrb[0].mxu0 %v574
  %v652 = vpop.f32.mrb[0].mxu0
  %v653 = vadd.f32 %v569, %v652
  %v654 = vpop.f32.mrb[0].mxu0
  %655 = vdwg.mxu0
  %vm656 = vcmask 7168
  %v657 = vsel %vm656, %v558, -inf
  %v658 = vsel %vm656, %v559, -inf
  %v659 = vsel %vm656, %v560, -inf
  %v660 = vmax.f32 %v657, %v658
  %v661 = vmax.f32 %v660, %v659
  %v662 = vrot.slane %v661, 4
  %v663 = vmax.f32 %v661, %v662
  %v664 = vrot.slane %v663, 2
  %v665 = vmax.f32 %v663, %v664
  %v666 = vrot.slane %v665, 1
  %v667 = vmax.f32 %v665, %v666
  %v668 = vsub.f32 %v558, %v667
  %v669 = vsub.f32 %v559, %v667
  %v670 = vsub.f32 %v560, %v667
  %v671 = vmul.f32 %v668, 1.442695
  %v672 = vpow.pop %v671
  %v673 = vmul.f32 %v669, 1.442695
  %v674 = vpow.pop %v673
  %v675 = vmul.f32 %v670, 1.442695
  %v676 = vpow.pop %v675
  %678 = vset.pattern.permute.xlu0 0
  %679 = vperm.xlu0 %678, %v672
  %v680 = vpop.permute.xlu0 %679
  %683 = vset.pattern.permute.xlu0 0
  %684 = vperm.xlu0 %683, %v674
  %v685 = vpop.permute.xlu0 %684
  %688 = vset.pattern.permute.xlu0 0
  %689 = vperm.xlu0 %688, %v676
  %v690 = vpop.permute.xlu0 %689
  %v692 = vmul.f32 %v680, %v643
  %v693 = vmul.f32 %v685, %v648
  %v694 = vmul.f32 %v690, %v653
  %695 = vxpose.xlu0.b32.start [1/16] %v31, 128
  %696 = vxpose.xlu0.b32.cont [2/16] %v32, 128
  %697 = vxpose.xlu0.b32.cont [3/16] %v33, 128
  %698 = vxpose.xlu0.b32.cont [4/16] 0.0, 128
  %699 = vxpose.xlu0.b32.cont [5/16] 0.0, 128
  %700 = vxpose.xlu0.b32.cont [6/16] 0.0, 128
  %701 = vxpose.xlu0.b32.cont [7/16] 0.0, 128
  %702 = vxpose.xlu0.b32.cont [8/16] 0.0, 128
  %703 = vxpose.xlu0.b32.cont [9/16] 0.0, 128
  %704 = vxpose.xlu0.b32.cont [10/16] 0.0, 128
  %705 = vxpose.xlu0.b32.cont [11/16] 0.0, 128
  %706 = vxpose.xlu0.b32.cont [12/16] 0.0, 128
  %707 = vxpose.xlu0.b32.cont [13/16] 0.0, 128
  %708 = vxpose.xlu0.b32.cont [14/16] 0.0, 128
  %709 = vxpose.xlu0.b32.cont [15/16] 0.0, 128
  %710 = vxpose.xlu0.b32.end [16/16] 0.0, 128
  %v711 = vpop.trf.xlu0
  %v712 = vpop.trf.xlu0
  %v713 = vpop.trf.xlu0
  %v714 = vpop.trf.xlu0
  %v715 = vpop.trf.xlu0
  %v716 = vpop.trf.xlu0
  %v717 = vpop.trf.xlu0
  %v718 = vpop.trf.xlu0
  %v719 = vpop.trf.xlu0
  %v720 = vpop.trf.xlu0
  %v721 = vpop.trf.xlu0
  %v722 = vpop.trf.xlu0
  %v723 = vpop.trf.xlu0
  %v724 = vpop.trf.xlu0
  %v725 = vpop.trf.xlu0
  %v726 = vpop.trf.xlu0
  %vm727 = vcmask 195584
  %v729 = vsel %vm727, %v711, 0
  %v732 = vsel %vm727, %v712, 0
  %734 = vmatprep.subr.mxu0 0.0
  %735 = vmatpush1.msra.mxu0 %v692
  %736 = vmatprep.subr.mxu0 0.0
  %737 = vmatpush1.msra.mxu0 %v693
  %738 = vmatprep.subr.mxu0 0.0
  %739 = vmatpush1.msra.mxu0 %v694
  %740 = vmatprep.subr.mxu0 0.0
  %741 = vmatpush1.msra.mxu0 0.0
  %742 = vmatprep.subr.mxu0 0.0
  %743 = vmatpush1.msra.mxu0 0.0
  %744 = vmatprep.subr.mxu0 0.0
  %745 = vmatpush1.msra.mxu0 0.0
  %746 = vmatprep.subr.mxu0 0.0
  %747 = vmatpush1.msra.mxu0 0.0
  %748 = vmatprep.subr.mxu0 0.0
  %749 = vmatpush1.msra.mxu0 0.0
  %750 = vmatprep.subr.mxu0 0.0
  %751 = vmatpush1.msra.mxu0 0.0
  %752 = vmatprep.subr.mxu0 0.0
  %753 = vmatpush1.msra.mxu0 0.0
  %754 = vmatprep.subr.mxu0 0.0
  %755 = vmatpush1.msra.mxu0 0.0
  %756 = vmatprep.subr.mxu0 0.0
  %757 = vmatpush1.msra.mxu0 0.0
  %758 = vmatprep.subr.mxu0 0.0
  %759 = vmatpush1.msra.mxu0 0.0
  %760 = vmatprep.subr.mxu0 0.0
  %761 = vmatpush1.msra.mxu0 0.0
  %762 = vmatprep.subr.mxu0 0.0
  %763 = vmatpush1.msra.mxu0 0.0
  %764 = vmatprep.subr.mxu0 0.0
  %765 = vmatpush1.msra.mxu0 0.0
  %766 = vmatprep.subr.mxu0 0.0
  %767 = vmatpush1.msra.mxu0 0.0
  %768 = vmatprep.subr.mxu0 0.0
  %769 = vmatpush1.msra.mxu0 0.0
  %770 = vmatprep.subr.mxu0 0.0
  %771 = vmatpush1.msra.mxu0 0.0
  %772 = vmatprep.subr.mxu0 0.0
  %773 = vmatpush1.msra.mxu0 0.0
  %774 = vmatprep.subr.mxu0 0.0
  %775 = vmatpush1.msra.mxu0 0.0
  %776 = vmatprep.subr.mxu0 0.0
  %777 = vmatpush1.msra.mxu0 0.0
  %778 = vmatprep.subr.mxu0 0.0
  %779 = vmatpush1.msra.mxu0 0.0
  %780 = vmatprep.subr.mxu0 0.0
  %781 = vmatpush1.msra.mxu0 0.0
  %782 = vmatprep.subr.mxu0 0.0
  %783 = vmatpush1.msra.mxu0 0.0
  %784 = vmatprep.subr.mxu0 0.0
  %785 = vmatpush1.msra.mxu0 0.0
  %786 = vmatprep.subr.mxu0 0.0
  %787 = vmatpush1.msra.mxu0 0.0
  %788 = vmatprep.subr.mxu0 0.0
  %789 = vmatpush1.msra.mxu0 0.0
  %790 = vmatprep.subr.mxu0 0.0
  %791 = vmatpush1.msra.mxu0 0.0
  %792 = vmatprep.subr.mxu0 0.0
  %793 = vmatpush1.msra.mxu0 0.0
  %794 = vmatprep.subr.mxu0 0.0
  %795 = vmatpush1.msra.mxu0 0.0
  %796 = vmatprep.subr.mxu0 0.0
  %797 = vmatpush1.msra.mxu0 0.0
  %798 = vmatprep.mubr.f32.mxu0 0.0
  %799 = vmatmul.mubr.f32.gmra.mrb[0].mxu0 %v729
  %v800 = vpop.f32.mrb[0].mxu0
  %v801 = vadd.f32 0.0, %v800
  %v802 = vpop.f32.mrb[0].mxu0
  %803 = vmatprep.mubr.f32.mxu0 0.0
  %804 = vmatmul.mubr.f32.gmra.mrb[0].mxu0 %v732
  %v805 = vpop.f32.mrb[0].mxu0
  %v806 = vadd.f32 0.0, %v805
  %v807 = vpop.f32.mrb[0].mxu0
  %808 = vdwg.mxu0
  %809 = vmatprep.subr.mxu0 0.0
  %810 = vmatpush1.msra.mxu0 %v672
  %811 = vmatprep.subr.mxu0 0.0
  %812 = vmatpush1.msra.mxu0 %v674
  %813 = vmatprep.subr.mxu0 0.0
  %814 = vmatpush1.msra.mxu0 %v676
  %815 = vmatprep.subr.mxu0 0.0
  %816 = vmatpush1.msra.mxu0 0.0
  %817 = vmatprep.subr.mxu0 0.0
  %818 = vmatpush1.msra.mxu0 0.0
  %819 = vmatprep.subr.mxu0 0.0
  %820 = vmatpush1.msra.mxu0 0.0
  %821 = vmatprep.subr.mxu0 0.0
  %822 = vmatpush1.msra.mxu0 0.0
  %823 = vmatprep.subr.mxu0 0.0
  %824 = vmatpush1.msra.mxu0 0.0
  %825 = vmatprep.subr.mxu0 0.0
  %826 = vmatpush1.msra.mxu0 0.0
  %827 = vmatprep.subr.mxu0 0.0
  %828 = vmatpush1.msra.mxu0 0.0
  %829 = vmatprep.subr.mxu0 0.0
  %830 = vmatpush1.msra.mxu0 0.0
  %831 = vmatprep.subr.mxu0 0.0
  %832 = vmatpush1.msra.mxu0 0.0
  %833 = vmatprep.subr.mxu0 0.0
  %834 = vmatpush1.msra.mxu0 0.0
  %835 = vmatprep.subr.mxu0 0.0
  %836 = vmatpush1.msra.mxu0 0.0
  %837 = vmatprep.subr.mxu0 0.0
  %838 = vmatpush1.msra.mxu0 0.0
  %839 = vmatprep.subr.mxu0 0.0
  %840 = vmatpush1.msra.mxu0 0.0
  %841 = vmatprep.subr.mxu0 0.0
  %842 = vmatpush1.msra.mxu0 0.0
  %843 = vmatprep.subr.mxu0 0.0
  %844 = vmatpush1.msra.mxu0 0.0
  %845 = vmatprep.subr.mxu0 0.0
  %846 = vmatpush1.msra.mxu0 0.0
  %847 = vmatprep.subr.mxu0 0.0
  %848 = vmatpush1.msra.mxu0 0.0
  %849 = vmatprep.subr.mxu0 0.0
  %850 = vmatpush1.msra.mxu0 0.0
  %851 = vmatprep.subr.mxu0 0.0
  %852 = vmatpush1.msra.mxu0 0.0
  %853 = vmatprep.subr.mxu0 0.0
  %854 = vmatpush1.msra.mxu0 0.0
  %855 = vmatprep.subr.mxu0 0.0
  %856 = vmatpush1.msra.mxu0 0.0
  %857 = vmatprep.subr.mxu0 0.0
  %858 = vmatpush1.msra.mxu0 0.0
  %859 = vmatprep.subr.mxu0 0.0
  %860 = vmatpush1.msra.mxu0 0.0
  %861 = vmatprep.subr.mxu0 0.0
  %862 = vmatpush1.msra.mxu0 0.0
  %863 = vmatprep.subr.mxu0 0.0
  %864 = vmatpush1.msra.mxu0 0.0
  %865 = vmatprep.subr.mxu0 0.0
  %866 = vmatpush1.msra.mxu0 0.0
  %867 = vmatprep.subr.mxu0 0.0
  %868 = vmatpush1.msra.mxu0 0.0
  %869 = vmatprep.subr.mxu0 0.0
  %870 = vmatpush1.msra.mxu0 0.0
  %871 = vmatprep.subr.mxu0 0.0
  %872 = vmatpush1.msra.mxu0 0.0
  %873 = vmatprep.mubr.f32.mxu0 0.0
  %874 = vmatmul.mubr.f32.gmra.mrb[0].mxu0 %v729
  %v875 = vpop.f32.mrb[0].mxu0
  %v876 = vadd.f32 0.0, %v875
  %v877 = vpop.f32.mrb[0].mxu0
  %878 = vmatprep.mubr.f32.mxu0 0.0
  %879 = vmatmul.mubr.f32.gmra.mrb[0].mxu0 %v732
  %v880 = vpop.f32.mrb[0].mxu0
  %v881 = vadd.f32 0.0, %v880
  %v882 = vpop.f32.mrb[0].mxu0
  %883 = vdwg.mxu0
  %vm884 = vcmp.gt.f32.partialorder %v876, 0.0
  %vm885 = vcmp.gt.f32.partialorder %v881, 0.0
  %v886 = vsel %vm884, %v876, 1.0
  %v887 = vsel %vm885, %v881, 1.0
  %v888 = vrcp.pop %v886
  %v889 = vrcp.pop %v887
  %891 = vset.pattern.permute.xlu0 0
  %892 = vperm.xlu0 %891, %v888
  %v893 = vpop.permute.xlu0 %892
  %896 = vset.pattern.permute.xlu0 0
  %897 = vperm.xlu0 %896, %v889
  %v898 = vpop.permute.xlu0 %897
  %v900 = vmul.f32 %v801, %v893
  %v901 = vmul.f32 %v806, %v898
  %vm902 = vcmp.gt.f32.partialorder %v900, 0.0
  %vm903 = vcmp.gt.f32.partialorder %v901, 0.0
  %v904 = vmin.f32 %v900, 0.0
  %v905 = vmin.f32 %v901, 0.0
  %v906 = vmul.f32 %v904, 1.442695
  %v907 = vpow.pop %v906
  %v908 = vmul.f32 %v905, 1.442695
  %v909 = vpow.pop %v908
  %v910 = vsub.f32 %v907, 1.0
  %v911 = vsub.f32 %v909, 1.0
  %v912 = vsel %vm902, %v900, %v910
  %v913 = vsel %vm903, %v901, %v911
  %916 = vrot.lane.b32.xlu0 %v127, 32
  %v917 = vpop.permute.xlu0 %916
  %918 = vrot.lane.b32.xlu0 %v128, 32
  %v919 = vpop.permute.xlu0 %918
  %v922 = vsel %vm445, %v912, %v917
  %v923 = vsel %vm445, %v913, %v919
  %v924 = vld [vmem:[%s5 + $0x30] sm:$0xff]
  %v925 = vld [vmem:[%s5 + $0x38] sm:$0xff]
  %v926 = vld [vmem:[%s5 + $0x40] sm:$0xff]
  %v927 = vld [vmem:[%s5 + $0x48] sm:$0xff]
  %v928 = vld [vmem:[%s5 + $0x50] sm:$0xff]
  %v929 = vld [vmem:[%s5 + $0x58] sm:$0xff]
  %v930 = vld [vmem:[%s5 + $0x60] sm:$0xff]
  %v931 = vld [vmem:[%s5 + $0x68] sm:$0xff]
  %v932 = vld [vmem:[%s5 + $0x28] sm:$0x1]
  %v933 = vlaneseq
  %v934 = vshrl.u32 %v933, 7
  %v935 = vsub.s32 0, %v934
  %v936 = vrot.slane %v932, %v935
  %v938 = vsel %vm462, %v922, 0
  %v941 = vsel %vm462, %v923, 0
  %943 = vmatprep.subr.mxu0 0.0
  %944 = vmatpush1.msra.mxu0 %v924
  %945 = vmatprep.subr.mxu0 0.0
  %946 = vmatpush1.msra.mxu0 %v925
  %947 = vmatprep.subr.mxu0 0.0
  %948 = vmatpush1.msra.mxu0 %v926
  %949 = vmatprep.subr.mxu0 0.0
  %950 = vmatpush1.msra.mxu0 %v927
  %951 = vmatprep.subr.mxu0 0.0
  %952 = vmatpush1.msra.mxu0 %v928
  %953 = vmatprep.subr.mxu0 0.0
  %954 = vmatpush1.msra.mxu0 %v929
  %955 = vmatprep.subr.mxu0 0.0
  %956 = vmatpush1.msra.mxu0 %v930
  %957 = vmatprep.subr.mxu0 0.0
  %958 = vmatpush1.msra.mxu0 %v931
  %959 = vmatprep.subr.mxu0 0.0
  %960 = vmatpush1.msra.mxu0 0.0
  %961 = vmatprep.subr.mxu0 0.0
  %962 = vmatpush1.msra.mxu0 0.0
  %963 = vmatprep.subr.mxu0 0.0
  %964 = vmatpush1.msra.mxu0 0.0
  %965 = vmatprep.subr.mxu0 0.0
  %966 = vmatpush1.msra.mxu0 0.0
  %967 = vmatprep.subr.mxu0 0.0
  %968 = vmatpush1.msra.mxu0 0.0
  %969 = vmatprep.subr.mxu0 0.0
  %970 = vmatpush1.msra.mxu0 0.0
  %971 = vmatprep.subr.mxu0 0.0
  %972 = vmatpush1.msra.mxu0 0.0
  %973 = vmatprep.subr.mxu0 0.0
  %974 = vmatpush1.msra.mxu0 0.0
  %975 = vmatprep.subr.mxu0 0.0
  %976 = vmatpush1.msra.mxu0 0.0
  %977 = vmatprep.subr.mxu0 0.0
  %978 = vmatpush1.msra.mxu0 0.0
  %979 = vmatprep.subr.mxu0 0.0
  %980 = vmatpush1.msra.mxu0 0.0
  %981 = vmatprep.subr.mxu0 0.0
  %982 = vmatpush1.msra.mxu0 0.0
  %983 = vmatprep.subr.mxu0 0.0
  %984 = vmatpush1.msra.mxu0 0.0
  %985 = vmatprep.subr.mxu0 0.0
  %986 = vmatpush1.msra.mxu0 0.0
  %987 = vmatprep.subr.mxu0 0.0
  %988 = vmatpush1.msra.mxu0 0.0
  %989 = vmatprep.subr.mxu0 0.0
  %990 = vmatpush1.msra.mxu0 0.0
  %991 = vmatprep.subr.mxu0 0.0
  %992 = vmatpush1.msra.mxu0 0.0
  %993 = vmatprep.subr.mxu0 0.0
  %994 = vmatpush1.msra.mxu0 0.0
  %995 = vmatprep.subr.mxu0 0.0
  %996 = vmatpush1.msra.mxu0 0.0
  %997 = vmatprep.subr.mxu0 0.0
  %998 = vmatpush1.msra.mxu0 0.0
  %999 = vmatprep.subr.mxu0 0.0
  %1000 = vmatpush1.msra.mxu0 0.0
  %1001 = vmatprep.subr.mxu0 0.0
  %1002 = vmatpush1.msra.mxu0 0.0
  %1003 = vmatprep.subr.mxu0 0.0
  %1004 = vmatpush1.msra.mxu0 0.0
  %1005 = vmatprep.subr.mxu0 0.0
  %1006 = vmatpush1.msra.mxu0 0.0
  %1007 = vmatprep.mubr.f32.mxu0 0.0
  %1008 = vmatmul.mubr.f32.gmra.mrb[0].mxu0 %v938
  %v1009 = vpop.f32.mrb[0].mxu0
  %v1010 = vadd.f32 %v936, %v1009
  %v1011 = vpop.f32.mrb[0].mxu0
  %1012 = vmatprep.mubr.f32.mxu0 0.0
  %1013 = vmatmul.mubr.f32.gmra.mrb[0].mxu0 %v941
  %v1014 = vpop.f32.mrb[0].mxu0
  %v1015 = vadd.f32 %v936, %v1014
  %v1016 = vpop.f32.mrb[0].mxu0
  %1017 = vdwg.mxu0
  %v1018 = vxor.u32 %v1010, 2147483648
  %v1019 = vxor.u32 %v1015, 2147483648
  %v1020 = vmul.f32 %v1018, 1.442695
  %v1021 = vpow.pop %v1020
  %v1022 = vmul.f32 %v1019, 1.442695
  %v1023 = vpow.pop %v1022
  %v1024 = vadd.f32 %v1021, 1.0
  %v1025 = vadd.f32 %v1023, 1.0
  %v1026 = vrcp.pop %v1024
  %v1027 = vmul.f32 1.0, %v1026
  %v1028 = vrcp.pop %v1025
  %v1029 = vmul.f32 1.0, %v1028
  %1032 = vrot.lane.b32.xlu0 %v1010, 32
  %v1033 = vpop.permute.xlu0 %1032
  %1034 = vrot.lane.b32.xlu0 %v1015, 32
  %v1035 = vpop.permute.xlu0 %1034
  %v1038 = vmul.f32 %v1027, %v1033
  %v1039 = vmul.f32 %v1029, %v1035
  %1042 = vrot.lane.b32.xlu0 %v1038, 64
  %v1043 = vpop.permute.xlu0 %1042
  %1044 = vrot.lane.b32.xlu0 %v1039, 64
  %v1045 = vpop.permute.xlu0 %1044
  %v1048 = vadd.f32 %v1010, %v1043
  %v1049 = vadd.f32 %v1015, %v1045
  %v1050 = vtanh.pop %v1048
  %v1051 = vtanh.pop %v1049
  %v1052 = vsub.f32 1.0, %v1027
  %v1053 = vsub.f32 1.0, %v1029
  %1056 = vrot.lane.b32.xlu0 %v1050, 96
  %v1057 = vpop.permute.xlu0 %1056
  %1058 = vrot.lane.b32.xlu0 %v1051, 96
  %v1059 = vpop.permute.xlu0 %1058
  %v1062 = vmul.f32 %v1052, %v1057
  %v1063 = vmul.f32 %v1053, %v1059
  %v1064 = vmul.f32 %v1027, %v917
  %v1065 = vmul.f32 %v1029, %v919
  %v1066 = vadd.f32 %v1062, %v1064
  %v1067 = vadd.f32 %v1063, %v1065
  %v1068 = vmax.f32 %v1066, 0.0
  %v1069 = vmax.f32 %v1067, 0.0
  %1072 = vrot.lane.b32.xlu0 %v1068, 96
  %v1073 = vpop.permute.xlu0 %1072
  %1074 = vrot.lane.b32.xlu0 %v1069, 96
  %v1075 = vpop.permute.xlu0 %1074
  %1078 = vmatprep.subr.mxu0 0.0
  %1079 = vmatpush1.msra.mxu0 %v1073
  %1080 = vmatprep.subr.mxu0 0.0
  %1081 = vmatpush1.msra.mxu0 %v1075
  %1082 = vmatprep.subr.mxu0 0.0
  %1083 = vmatpush1.msra.mxu0 0.0
  %1084 = vmatprep.subr.mxu0 0.0
  %1085 = vmatpush1.msra.mxu0 0.0
  %1086 = vmatprep.subr.mxu0 0.0
  %1087 = vmatpush1.msra.mxu0 0.0
  %1088 = vmatprep.subr.mxu0 0.0
  %1089 = vmatpush1.msra.mxu0 0.0
  %1090 = vmatprep.subr.mxu0 0.0
  %1091 = vmatpush1.msra.mxu0 0.0
  %1092 = vmatprep.subr.mxu0 0.0
  %1093 = vmatpush1.msra.mxu0 0.0
  %1094 = vmatprep.subr.mxu0 0.0
  %1095 = vmatpush1.msra.mxu0 0.0
  %1096 = vmatprep.subr.mxu0 0.0
  %1097 = vmatpush1.msra.mxu0 0.0
  %1098 = vmatprep.subr.mxu0 0.0
  %1099 = vmatpush1.msra.mxu0 0.0
  %1100 = vmatprep.subr.mxu0 0.0
  %1101 = vmatpush1.msra.mxu0 0.0
  %1102 = vmatprep.subr.mxu0 0.0
  %1103 = vmatpush1.msra.mxu0 0.0
  %1104 = vmatprep.subr.mxu0 0.0
  %1105 = vmatpush1.msra.mxu0 0.0
  %1106 = vmatprep.subr.mxu0 0.0
  %1107 = vmatpush1.msra.mxu0 0.0
  %1108 = vmatprep.subr.mxu0 0.0
  %1109 = vmatpush1.msra.mxu0 0.0
  %1110 = vmatprep.subr.mxu0 0.0
  %1111 = vmatpush1.msra.mxu0 0.0
  %1112 = vmatprep.subr.mxu0 0.0
  %1113 = vmatpush1.msra.mxu0 0.0
  %1114 = vmatprep.subr.mxu0 0.0
  %1115 = vmatpush1.msra.mxu0 0.0
  %1116 = vmatprep.subr.mxu0 0.0
  %1117 = vmatpush1.msra.mxu0 0.0
  %1118 = vmatprep.subr.mxu0 0.0
  %1119 = vmatpush1.msra.mxu0 0.0
  %1120 = vmatprep.subr.mxu0 0.0
  %1121 = vmatpush1.msra.mxu0 0.0
  %1122 = vmatprep.subr.mxu0 0.0
  %1123 = vmatpush1.msra.mxu0 0.0
  %1124 = vmatprep.subr.mxu0 0.0
  %1125 = vmatpush1.msra.mxu0 0.0
  %1126 = vmatprep.subr.mxu0 0.0
  %1127 = vmatpush1.msra.mxu0 0.0
  %1128 = vmatprep.subr.mxu0 0.0
  %1129 = vmatpush1.msra.mxu0 0.0
  %1130 = vmatprep.subr.mxu0 0.0
  %1131 = vmatpush1.msra.mxu0 0.0
  %1132 = vmatprep.subr.mxu0 0.0
  %1133 = vmatpush1.msra.mxu0 0.0
  %1134 = vmatprep.subr.mxu0 0.0
  %1135 = vmatpush1.msra.mxu0 0.0
  %1136 = vmatprep.subr.mxu0 0.0
  %1137 = vmatpush1.msra.mxu0 0.0
  %1138 = vmatprep.subr.mxu0 0.0
  %1139 = vmatpush1.msra.mxu0 0.0
  %1140 = vmatprep.subr.mxu0 0.0
  %1141 = vmatpush1.msra.mxu0 0.0
  %1142 = vmatprep.mubr.f32.mxu0 0.0
  %1143 = vmatmul.mubr.f32.gmra.mrb[0].mxu0 %v131
  %v1144 = vpop.f32.mrb[0].mxu0
  %v1145 = vadd.f32 0.0, %v1144
  %v1146 = vpop.f32.mrb[0].mxu0
  %1147 = vmatprep.mubr.f32.mxu0 0.0
  %1148 = vmatmul.mubr.f32.gmra.mrb[0].mxu0 %v134
  %v1149 = vpop.f32.mrb[0].mxu0
  %v1150 = vadd.f32 0.0, %v1149
  %v1151 = vpop.f32.mrb[0].mxu0
  %1152 = vmatprep.mubr.f32.mxu0 0.0
  %1153 = vmatmul.mubr.f32.gmra.mrb[0].mxu0 %v137
  %v1154 = vpop.f32.mrb[0].mxu0
  %v1155 = vadd.f32 0.0, %v1154
  %v1156 = vpop.f32.mrb[0].mxu0
  %1157 = vdwg.mxu0
  %1158 = vmatprep.subr.mxu0 0.0
  %1159 = vmatpush1.msra.mxu0 %v1073
  %1160 = vmatprep.subr.mxu0 0.0
  %1161 = vmatpush1.msra.mxu0 %v1075
  %1162 = vmatprep.subr.mxu0 0.0
  %1163 = vmatpush1.msra.mxu0 0.0
  %1164 = vmatprep.subr.mxu0 0.0
  %1165 = vmatpush1.msra.mxu0 0.0
  %1166 = vmatprep.subr.mxu0 0.0
  %1167 = vmatpush1.msra.mxu0 0.0
  %1168 = vmatprep.subr.mxu0 0.0
  %1169 = vmatpush1.msra.mxu0 0.0
  %1170 = vmatprep.subr.mxu0 0.0
  %1171 = vmatpush1.msra.mxu0 0.0
  %1172 = vmatprep.subr.mxu0 0.0
  %1173 = vmatpush1.msra.mxu0 0.0
  %1174 = vmatprep.subr.mxu0 0.0
  %1175 = vmatpush1.msra.mxu0 0.0
  %1176 = vmatprep.subr.mxu0 0.0
  %1177 = vmatpush1.msra.mxu0 0.0
  %1178 = vmatprep.subr.mxu0 0.0
  %1179 = vmatpush1.msra.mxu0 0.0
  %1180 = vmatprep.subr.mxu0 0.0
  %1181 = vmatpush1.msra.mxu0 0.0
  %1182 = vmatprep.subr.mxu0 0.0
  %1183 = vmatpush1.msra.mxu0 0.0
  %1184 = vmatprep.subr.mxu0 0.0
  %1185 = vmatpush1.msra.mxu0 0.0
  %1186 = vmatprep.subr.mxu0 0.0
  %1187 = vmatpush1.msra.mxu0 0.0
  %1188 = vmatprep.subr.mxu0 0.0
  %1189 = vmatpush1.msra.mxu0 0.0
  %1190 = vmatprep.subr.mxu0 0.0
  %1191 = vmatpush1.msra.mxu0 0.0
  %1192 = vmatprep.subr.mxu0 0.0
  %1193 = vmatpush1.msra.mxu0 0.0
  %1194 = vmatprep.subr.mxu0 0.0
  %1195 = vmatpush1.msra.mxu0 0.0
  %1196 = vmatprep.subr.mxu0 0.0
  %1197 = vmatpush1.msra.mxu0 0.0
  %1198 = vmatprep.subr.mxu0 0.0
  %1199 = vmatpush1.msra.mxu0 0.0
  %1200 = vmatprep.subr.mxu0 0.0
  %1201 = vmatpush1.msra.mxu0 0.0
  %1202 = vmatprep.subr.mxu0 0.0
  %1203 = vmatpush1.msra.mxu0 0.0
  %1204 = vmatprep.subr.mxu0 0.0
  %1205 = vmatpush1.msra.mxu0 0.0
  %1206 = vmatprep.subr.mxu0 0.0
  %1207 = vmatpush1.msra.mxu0 0.0
  %1208 = vmatprep.subr.mxu0 0.0
  %1209 = vmatpush1.msra.mxu0 0.0
  %1210 = vmatprep.subr.mxu0 0.0
  %1211 = vmatpush1.msra.mxu0 0.0
  %1212 = vmatprep.subr.mxu0 0.0
  %1213 = vmatpush1.msra.mxu0 0.0
  %1214 = vmatprep.subr.mxu0 0.0
  %1215 = vmatpush1.msra.mxu0 0.0
  %1216 = vmatprep.subr.mxu0 0.0
  %1217 = vmatpush1.msra.mxu0 0.0
  %1218 = vmatprep.subr.mxu0 0.0
  %1219 = vmatpush1.msra.mxu0 0.0
  %1220 = vmatprep.subr.mxu0 0.0
  %1221 = vmatpush1.msra.mxu0 0.0
  %1222 = vmatprep.mubr.f32.mxu0 0.0
  %1223 = vmatmul.mubr.f32.gmra.mrb[0].mxu0 %v345
  %v1224 = vpop.f32.mrb[0].mxu0
  %v1225 = vadd.f32 0.0, %v1224
  %v1226 = vpop.f32.mrb[0].mxu0
  %1227 = vmatprep.mubr.f32.mxu0 0.0
  %1228 = vmatmul.mubr.f32.gmra.mrb[0].mxu0 %v348
  %v1229 = vpop.f32.mrb[0].mxu0
  %v1230 = vadd.f32 0.0, %v1229
  %v1231 = vpop.f32.mrb[0].mxu0
  %1232 = vmatprep.mubr.f32.mxu0 0.0
  %1233 = vmatmul.mubr.f32.gmra.mrb[0].mxu0 %v351
  %v1234 = vpop.f32.mrb[0].mxu0
  %v1235 = vadd.f32 0.0, %v1234
  %v1236 = vpop.f32.mrb[0].mxu0
  %1237 = vdwg.mxu0
  %1241 = vrot.lane.b32.xlu0 %v1145, 32
  %v1242 = vpop.permute.xlu0 %1241
  %1243 = vrot.lane.b32.xlu0 %v1150, 32
  %v1244 = vpop.permute.xlu0 %1243
  %1245 = vrot.lane.b32.xlu0 %v1155, 32
  %v1246 = vpop.permute.xlu0 %1245
  %v1250 = vsel %vm445, %v1225, %v1242
  %v1251 = vsel %vm445, %v1230, %v1244
  %v1252 = vsel %vm445, %v1235, %v1246
  %v1253 = vld [vmem:[%s5 + $0x130] sm:$0xff]
  %v1254 = vld [vmem:[%s5 + $0x138] sm:$0xff]
  %v1255 = vld [vmem:[%s5 + $0x140] sm:$0xff]
  %v1256 = vld [vmem:[%s5 + $0x148] sm:$0xff]
  %v1257 = vld [vmem:[%s5 + $0x150] sm:$0xff]
  %v1258 = vld [vmem:[%s5 + $0x158] sm:$0xff]
  %v1259 = vld [vmem:[%s5 + $0x160] sm:$0xff]
  %v1260 = vld [vmem:[%s5 + $0x168] sm:$0xff]
  %v1261 = vld [vmem:[%s5 + $0x128] sm:$0x1]
  %v1262 = vlaneseq
  %v1263 = vshrl.u32 %v1262, 7
  %v1264 = vsub.s32 0, %v1263
  %v1265 = vrot.slane %v1261, %v1264
  %v1267 = vsel %vm462, %v1250, 0
  %v1270 = vsel %vm462, %v1251, 0
  %v1273 = vsel %vm462, %v1252, 0
  %1275 = vmatprep.subr.mxu0 0.0
  %1276 = vmatpush1.msra.mxu0 %v1253
  %1277 = vmatprep.subr.mxu0 0.0
  %1278 = vmatpush1.msra.mxu0 %v1254
  %1279 = vmatprep.subr.mxu0 0.0
  %1280 = vmatpush1.msra.mxu0 %v1255
  %1281 = vmatprep.subr.mxu0 0.0
  %1282 = vmatpush1.msra.mxu0 %v1256
  %1283 = vmatprep.subr.mxu0 0.0
  %1284 = vmatpush1.msra.mxu0 %v1257
  %1285 = vmatprep.subr.mxu0 0.0
  %1286 = vmatpush1.msra.mxu0 %v1258
  %1287 = vmatprep.subr.mxu0 0.0
  %1288 = vmatpush1.msra.mxu0 %v1259
  %1289 = vmatprep.subr.mxu0 0.0
  %1290 = vmatpush1.msra.mxu0 %v1260
  %1291 = vmatprep.subr.mxu0 0.0
  %1292 = vmatpush1.msra.mxu0 0.0
  %1293 = vmatprep.subr.mxu0 0.0
  %1294 = vmatpush1.msra.mxu0 0.0
  %1295 = vmatprep.subr.mxu0 0.0
  %1296 = vmatpush1.msra.mxu0 0.0
  %1297 = vmatprep.subr.mxu0 0.0
  %1298 = vmatpush1.msra.mxu0 0.0
  %1299 = vmatprep.subr.mxu0 0.0
  %1300 = vmatpush1.msra.mxu0 0.0
  %1301 = vmatprep.subr.mxu0 0.0
  %1302 = vmatpush1.msra.mxu0 0.0
  %1303 = vmatprep.subr.mxu0 0.0
  %1304 = vmatpush1.msra.mxu0 0.0
  %1305 = vmatprep.subr.mxu0 0.0
  %1306 = vmatpush1.msra.mxu0 0.0
  %1307 = vmatprep.subr.mxu0 0.0
  %1308 = vmatpush1.msra.mxu0 0.0
  %1309 = vmatprep.subr.mxu0 0.0
  %1310 = vmatpush1.msra.mxu0 0.0
  %1311 = vmatprep.subr.mxu0 0.0
  %1312 = vmatpush1.msra.mxu0 0.0
  %1313 = vmatprep.subr.mxu0 0.0
  %1314 = vmatpush1.msra.mxu0 0.0
  %1315 = vmatprep.subr.mxu0 0.0
  %1316 = vmatpush1.msra.mxu0 0.0
  %1317 = vmatprep.subr.mxu0 0.0
  %1318 = vmatpush1.msra.mxu0 0.0
  %1319 = vmatprep.subr.mxu0 0.0
  %1320 = vmatpush1.msra.mxu0 0.0
  %1321 = vmatprep.subr.mxu0 0.0
  %1322 = vmatpush1.msra.mxu0 0.0
  %1323 = vmatprep.subr.mxu0 0.0
  %1324 = vmatpush1.msra.mxu0 0.0
  %1325 = vmatprep.subr.mxu0 0.0
  %1326 = vmatpush1.msra.mxu0 0.0
  %1327 = vmatprep.subr.mxu0 0.0
  %1328 = vmatpush1.msra.mxu0 0.0
  %1329 = vmatprep.subr.mxu0 0.0
  %1330 = vmatpush1.msra.mxu0 0.0
  %1331 = vmatprep.subr.mxu0 0.0
  %1332 = vmatpush1.msra.mxu0 0.0
  %1333 = vmatprep.subr.mxu0 0.0
  %1334 = vmatpush1.msra.mxu0 0.0
  %1335 = vmatprep.subr.mxu0 0.0
  %1336 = vmatpush1.msra.mxu0 0.0
  %1337 = vmatprep.subr.mxu0 0.0
  %1338 = vmatpush1.msra.mxu0 0.0
  %1339 = vmatprep.mubr.f32.mxu0 0.0
  %1340 = vmatmul.mubr.f32.gmra.mrb[0].mxu0 %v1267
  %v1341 = vpop.f32.mrb[0].mxu0
  %v1342 = vadd.f32 %v1265, %v1341
  %v1343 = vpop.f32.mrb[0].mxu0
  %1344 = vmatprep.mubr.f32.mxu0 0.0
  %1345 = vmatmul.mubr.f32.gmra.mrb[0].mxu0 %v1270
  %v1346 = vpop.f32.mrb[0].mxu0
  %v1347 = vadd.f32 %v1265, %v1346
  %v1348 = vpop.f32.mrb[0].mxu0
  %1349 = vmatprep.mubr.f32.mxu0 0.0
  %1350 = vmatmul.mubr.f32.gmra.mrb[0].mxu0 %v1273
  %v1351 = vpop.f32.mrb[0].mxu0
  %v1352 = vadd.f32 %v1265, %v1351
  %v1353 = vpop.f32.mrb[0].mxu0
  %1354 = vdwg.mxu0
  %vm1355 = vcmp.gt.f32.partialorder %v1342, 0.0
  %vm1356 = vcmp.gt.f32.partialorder %v1347, 0.0
  %vm1357 = vcmp.gt.f32.partialorder %v1352, 0.0
  %v1358 = vmul.f32 %v1342, 0.01
  %v1359 = vmul.f32 %v1347, 0.01
  %v1360 = vmul.f32 %v1352, 0.01
  %v1361 = vsel %vm1355, %v1342, %v1358
  %v1362 = vsel %vm1356, %v1347, %v1359
  %v1363 = vsel %vm1357, %v1352, %v1360
  %v1364 = vld [vmem:[%s5 + $0x178] sm:$0xff]
  %v1365 = vld [vmem:[%s5 + $0x180] sm:$0xff]
  %v1366 = vld [vmem:[%s5 + $0x188] sm:$0xff]
  %v1367 = vld [vmem:[%s5 + $0x190] sm:$0xff]
  %v1368 = vld [vmem:[%s5 + $0x170] sm:$0x1]
  %v1369 = vlaneseq
  %v1370 = vshrl.u32 %v1369, 7
  %v1371 = vsub.s32 0, %v1370
  %v1372 = vrot.slane %v1368, %v1371
  %v1373 = vsel %vm445, %v1073, 0
  %v1375 = vsel %vm445, %v1075, 0
  %1377 = vmatprep.subr.mxu0 0.0
  %1378 = vmatpush1.msra.mxu0 %v1364
  %1379 = vmatprep.subr.mxu0 0.0
  %1380 = vmatpush1.msra.mxu0 %v1365
  %1381 = vmatprep.subr.mxu0 0.0
  %1382 = vmatpush1.msra.mxu0 %v1366
  %1383 = vmatprep.subr.mxu0 0.0
  %1384 = vmatpush1.msra.mxu0 %v1367
  %1385 = vmatprep.subr.mxu0 0.0
  %1386 = vmatpush1.msra.mxu0 0.0
  %1387 = vmatprep.subr.mxu0 0.0
  %1388 = vmatpush1.msra.mxu0 0.0
  %1389 = vmatprep.subr.mxu0 0.0
  %1390 = vmatpush1.msra.mxu0 0.0
  %1391 = vmatprep.subr.mxu0 0.0
  %1392 = vmatpush1.msra.mxu0 0.0
  %1393 = vmatprep.subr.mxu0 0.0
  %1394 = vmatpush1.msra.mxu0 0.0
  %1395 = vmatprep.subr.mxu0 0.0
  %1396 = vmatpush1.msra.mxu0 0.0
  %1397 = vmatprep.subr.mxu0 0.0
  %1398 = vmatpush1.msra.mxu0 0.0
  %1399 = vmatprep.subr.mxu0 0.0
  %1400 = vmatpush1.msra.mxu0 0.0
  %1401 = vmatprep.subr.mxu0 0.0
  %1402 = vmatpush1.msra.mxu0 0.0
  %1403 = vmatprep.subr.mxu0 0.0
  %1404 = vmatpush1.msra.mxu0 0.0
  %1405 = vmatprep.subr.mxu0 0.0
  %1406 = vmatpush1.msra.mxu0 0.0
  %1407 = vmatprep.subr.mxu0 0.0
  %1408 = vmatpush1.msra.mxu0 0.0
  %1409 = vmatprep.subr.mxu0 0.0
  %1410 = vmatpush1.msra.mxu0 0.0
  %1411 = vmatprep.subr.mxu0 0.0
  %1412 = vmatpush1.msra.mxu0 0.0
  %1413 = vmatprep.subr.mxu0 0.0
  %1414 = vmatpush1.msra.mxu0 0.0
  %1415 = vmatprep.subr.mxu0 0.0
  %1416 = vmatpush1.msra.mxu0 0.0
  %1417 = vmatprep.subr.mxu0 0.0
  %1418 = vmatpush1.msra.mxu0 0.0
  %1419 = vmatprep.subr.mxu0 0.0
  %1420 = vmatpush1.msra.mxu0 0.0
  %1421 = vmatprep.subr.mxu0 0.0
  %1422 = vmatpush1.msra.mxu0 0.0
  %1423 = vmatprep.subr.mxu0 0.0
  %1424 = vmatpush1.msra.mxu0 0.0
  %1425 = vmatprep.subr.mxu0 0.0
  %1426 = vmatpush1.msra.mxu0 0.0
  %1427 = vmatprep.subr.mxu0 0.0
  %1428 = vmatpush1.msra.mxu0 0.0
  %1429 = vmatprep.subr.mxu0 0.0
  %1430 = vmatpush1.msra.mxu0 0.0
  %1431 = vmatprep.subr.mxu0 0.0
  %1432 = vmatpush1.msra.mxu0 0.0
  %1433 = vmatprep.subr.mxu0 0.0
  %1434 = vmatpush1.msra.mxu0 0.0
  %1435 = vmatprep.subr.mxu0 0.0
  %1436 = vmatpush1.msra.mxu0 0.0
  %1437 = vmatprep.subr.mxu0 0.0
  %1438 = vmatpush1.msra.mxu0 0.0
  %1439 = vmatprep.subr.mxu0 0.0
  %1440 = vmatpush1.msra.mxu0 0.0
  %1441 = vmatprep.mubr.f32.mxu0 0.0
  %1442 = vmatmul.mubr.f32.gmra.mrb[0].mxu0 %v1373
  %v1443 = vpop.f32.mrb[0].mxu0
  %v1444 = vadd.f32 %v1372, %v1443
  %v1445 = vpop.f32.mrb[0].mxu0
  %1446 = vmatprep.mubr.f32.mxu0 0.0
  %1447 = vmatmul.mubr.f32.gmra.mrb[0].mxu0 %v1375
  %v1448 = vpop.f32.mrb[0].mxu0
  %v1449 = vadd.f32 %v1372, %v1448
  %v1450 = vpop.f32.mrb[0].mxu0
  %1451 = vdwg.mxu0
  %1452 = vmatprep.subr.mxu0 0.0
  %1453 = vmatpush1.msra.mxu0 %v1444
  %1454 = vmatprep.subr.mxu0 0.0
  %1455 = vmatpush1.msra.mxu0 %v1449
  %1456 = vmatprep.subr.mxu0 0.0
  %1457 = vmatpush1.msra.mxu0 0.0
  %1458 = vmatprep.subr.mxu0 0.0
  %1459 = vmatpush1.msra.mxu0 0.0
  %1460 = vmatprep.subr.mxu0 0.0
  %1461 = vmatpush1.msra.mxu0 0.0
  %1462 = vmatprep.subr.mxu0 0.0
  %1463 = vmatpush1.msra.mxu0 0.0
  %1464 = vmatprep.subr.mxu0 0.0
  %1465 = vmatpush1.msra.mxu0 0.0
  %1466 = vmatprep.subr.mxu0 0.0
  %1467 = vmatpush1.msra.mxu0 0.0
  %1468 = vmatprep.subr.mxu0 0.0
  %1469 = vmatpush1.msra.mxu0 0.0
  %1470 = vmatprep.subr.mxu0 0.0
  %1471 = vmatpush1.msra.mxu0 0.0
  %1472 = vmatprep.subr.mxu0 0.0
  %1473 = vmatpush1.msra.mxu0 0.0
  %1474 = vmatprep.subr.mxu0 0.0
  %1475 = vmatpush1.msra.mxu0 0.0
  %1476 = vmatprep.subr.mxu0 0.0
  %1477 = vmatpush1.msra.mxu0 0.0
  %1478 = vmatprep.subr.mxu0 0.0
  %1479 = vmatpush1.msra.mxu0 0.0
  %1480 = vmatprep.subr.mxu0 0.0
  %1481 = vmatpush1.msra.mxu0 0.0
  %1482 = vmatprep.subr.mxu0 0.0
  %1483 = vmatpush1.msra.mxu0 0.0
  %1484 = vmatprep.subr.mxu0 0.0
  %1485 = vmatpush1.msra.mxu0 0.0
  %1486 = vmatprep.subr.mxu0 0.0
  %1487 = vmatpush1.msra.mxu0 0.0
  %1488 = vmatprep.subr.mxu0 0.0
  %1489 = vmatpush1.msra.mxu0 0.0
  %1490 = vmatprep.subr.mxu0 0.0
  %1491 = vmatpush1.msra.mxu0 0.0
  %1492 = vmatprep.subr.mxu0 0.0
  %1493 = vmatpush1.msra.mxu0 0.0
  %1494 = vmatprep.subr.mxu0 0.0
  %1495 = vmatpush1.msra.mxu0 0.0
  %1496 = vmatprep.subr.mxu0 0.0
  %1497 = vmatpush1.msra.mxu0 0.0
  %1498 = vmatprep.subr.mxu0 0.0
  %1499 = vmatpush1.msra.mxu0 0.0
  %1500 = vmatprep.subr.mxu0 0.0
  %1501 = vmatpush1.msra.mxu0 0.0
  %1502 = vmatprep.subr.mxu0 0.0
  %1503 = vmatpush1.msra.mxu0 0.0
  %1504 = vmatprep.subr.mxu0 0.0
  %1505 = vmatpush1.msra.mxu0 0.0
  %1506 = vmatprep.subr.mxu0 0.0
  %1507 = vmatpush1.msra.mxu0 0.0
  %1508 = vmatprep.subr.mxu0 0.0
  %1509 = vmatpush1.msra.mxu0 0.0
  %1510 = vmatprep.subr.mxu0 0.0
  %1511 = vmatpush1.msra.mxu0 0.0
  %1512 = vmatprep.subr.mxu0 0.0
  %1513 = vmatpush1.msra.mxu0 0.0
  %1514 = vmatprep.subr.mxu0 0.0
  %1515 = vmatpush1.msra.mxu0 0.0
  %1516 = vmatprep.mubr.f32.mxu0 0.0
  %1517 = vmatmul.mubr.f32.gmra.mrb[0].mxu0 %v131
  %v1518 = vpop.f32.mrb[0].mxu0
  %v1519 = vadd.f32 0.0, %v1518
  %v1520 = vpop.f32.mrb[0].mxu0
  %1521 = vmatprep.mubr.f32.mxu0 0.0
  %1522 = vmatmul.mubr.f32.gmra.mrb[0].mxu0 %v134
  %v1523 = vpop.f32.mrb[0].mxu0
  %v1524 = vadd.f32 0.0, %v1523
  %v1525 = vpop.f32.mrb[0].mxu0
  %1526 = vmatprep.mubr.f32.mxu0 0.0
  %1527 = vmatmul.mubr.f32.gmra.mrb[0].mxu0 %v137
  %v1528 = vpop.f32.mrb[0].mxu0
  %v1529 = vadd.f32 0.0, %v1528
  %v1530 = vpop.f32.mrb[0].mxu0
  %1531 = vdwg.mxu0
  %v1532 = vsel %vm656, %v1361, -inf
  %v1533 = vsel %vm656, %v1362, -inf
  %v1534 = vsel %vm656, %v1363, -inf
  %v1535 = vmax.f32 %v1532, %v1533
  %v1536 = vmax.f32 %v1535, %v1534
  %v1537 = vrot.slane %v1536, 4
  %v1538 = vmax.f32 %v1536, %v1537
  %v1539 = vrot.slane %v1538, 2
  %v1540 = vmax.f32 %v1538, %v1539
  %v1541 = vrot.slane %v1540, 1
  %v1542 = vmax.f32 %v1540, %v1541
  %v1543 = vsub.f32 %v1361, %v1542
  %v1544 = vsub.f32 %v1362, %v1542
  %v1545 = vsub.f32 %v1363, %v1542
  %v1546 = vmul.f32 %v1543, 1.442695
  %v1547 = vpow.pop %v1546
  %v1548 = vmul.f32 %v1544, 1.442695
  %v1549 = vpow.pop %v1548
  %v1550 = vmul.f32 %v1545, 1.442695
  %v1551 = vpow.pop %v1550
  %1553 = vset.pattern.permute.xlu0 0
  %1554 = vperm.xlu0 %1553, %v1547
  %v1555 = vpop.permute.xlu0 %1554
  %1558 = vset.pattern.permute.xlu0 0
  %1559 = vperm.xlu0 %1558, %v1549
  %v1560 = vpop.permute.xlu0 %1559
  %1563 = vset.pattern.permute.xlu0 0
  %1564 = vperm.xlu0 %1563, %v1551
  %v1565 = vpop.permute.xlu0 %1564
  %v1567 = vmul.f32 %v1555, %v1519
  %v1568 = vmul.f32 %v1560, %v1524
  %v1569 = vmul.f32 %v1565, %v1529
  %1570 = vmatprep.subr.mxu0 0.0
  %1571 = vmatpush1.msra.mxu0 %v1567
  %1572 = vmatprep.subr.mxu0 0.0
  %1573 = vmatpush1.msra.mxu0 %v1568
  %1574 = vmatprep.subr.mxu0 0.0
  %1575 = vmatpush1.msra.mxu0 %v1569
  %1576 = vmatprep.subr.mxu0 0.0
  %1577 = vmatpush1.msra.mxu0 0.0
  %1578 = vmatprep.subr.mxu0 0.0
  %1579 = vmatpush1.msra.mxu0 0.0
  %1580 = vmatprep.subr.mxu0 0.0
  %1581 = vmatpush1.msra.mxu0 0.0
  %1582 = vmatprep.subr.mxu0 0.0
  %1583 = vmatpush1.msra.mxu0 0.0
  %1584 = vmatprep.subr.mxu0 0.0
  %1585 = vmatpush1.msra.mxu0 0.0
  %1586 = vmatprep.subr.mxu0 0.0
  %1587 = vmatpush1.msra.mxu0 0.0
  %1588 = vmatprep.subr.mxu0 0.0
  %1589 = vmatpush1.msra.mxu0 0.0
  %1590 = vmatprep.subr.mxu0 0.0
  %1591 = vmatpush1.msra.mxu0 0.0
  %1592 = vmatprep.subr.mxu0 0.0
  %1593 = vmatpush1.msra.mxu0 0.0
  %1594 = vmatprep.subr.mxu0 0.0
  %1595 = vmatpush1.msra.mxu0 0.0
  %1596 = vmatprep.subr.mxu0 0.0
  %1597 = vmatpush1.msra.mxu0 0.0
  %1598 = vmatprep.subr.mxu0 0.0
  %1599 = vmatpush1.msra.mxu0 0.0
  %1600 = vmatprep.subr.mxu0 0.0
  %1601 = vmatpush1.msra.mxu0 0.0
  %1602 = vmatprep.subr.mxu0 0.0
  %1603 = vmatpush1.msra.mxu0 0.0
  %1604 = vmatprep.subr.mxu0 0.0
  %1605 = vmatpush1.msra.mxu0 0.0
  %1606 = vmatprep.subr.mxu0 0.0
  %1607 = vmatpush1.msra.mxu0 0.0
  %1608 = vmatprep.subr.mxu0 0.0
  %1609 = vmatpush1.msra.mxu0 0.0
  %1610 = vmatprep.subr.mxu0 0.0
  %1611 = vmatpush1.msra.mxu0 0.0
  %1612 = vmatprep.subr.mxu0 0.0
  %1613 = vmatpush1.msra.mxu0 0.0
  %1614 = vmatprep.subr.mxu0 0.0
  %1615 = vmatpush1.msra.mxu0 0.0
  %1616 = vmatprep.subr.mxu0 0.0
  %1617 = vmatpush1.msra.mxu0 0.0
  %1618 = vmatprep.subr.mxu0 0.0
  %1619 = vmatpush1.msra.mxu0 0.0
  %1620 = vmatprep.subr.mxu0 0.0
  %1621 = vmatpush1.msra.mxu0 0.0
  %1622 = vmatprep.subr.mxu0 0.0
  %1623 = vmatpush1.msra.mxu0 0.0
  %1624 = vmatprep.subr.mxu0 0.0
  %1625 = vmatpush1.msra.mxu0 0.0
  %1626 = vmatprep.subr.mxu0 0.0
  %1627 = vmatpush1.msra.mxu0 0.0
  %1628 = vmatprep.subr.mxu0 0.0
  %1629 = vmatpush1.msra.mxu0 0.0
  %1630 = vmatprep.subr.mxu0 0.0
  %1631 = vmatpush1.msra.mxu0 0.0
  %1632 = vmatprep.subr.mxu0 0.0
  %1633 = vmatpush1.msra.mxu0 0.0
  %1634 = vmatprep.mubr.f32.mxu0 0.0
  %1635 = vmatmul.mubr.f32.gmra.mrb[0].mxu0 %v729
  %v1636 = vpop.f32.mrb[0].mxu0
  %v1637 = vadd.f32 0.0, %v1636
  %v1638 = vpop.f32.mrb[0].mxu0
  %1639 = vmatprep.mubr.f32.mxu0 0.0
  %1640 = vmatmul.mubr.f32.gmra.mrb[0].mxu0 %v732
  %v1641 = vpop.f32.mrb[0].mxu0
  %v1642 = vadd.f32 0.0, %v1641
  %v1643 = vpop.f32.mrb[0].mxu0
  %1644 = vdwg.mxu0
  %1645 = vmatprep.subr.mxu0 0.0
  %1646 = vmatpush1.msra.mxu0 %v1547
  %1647 = vmatprep.subr.mxu0 0.0
  %1648 = vmatpush1.msra.mxu0 %v1549
  %1649 = vmatprep.subr.mxu0 0.0
  %1650 = vmatpush1.msra.mxu0 %v1551
  %1651 = vmatprep.subr.mxu0 0.0
  %1652 = vmatpush1.msra.mxu0 0.0
  %1653 = vmatprep.subr.mxu0 0.0
  %1654 = vmatpush1.msra.mxu0 0.0
  %1655 = vmatprep.subr.mxu0 0.0
  %1656 = vmatpush1.msra.mxu0 0.0
  %1657 = vmatprep.subr.mxu0 0.0
  %1658 = vmatpush1.msra.mxu0 0.0
  %1659 = vmatprep.subr.mxu0 0.0
  %1660 = vmatpush1.msra.mxu0 0.0
  %1661 = vmatprep.subr.mxu0 0.0
  %1662 = vmatpush1.msra.mxu0 0.0
  %1663 = vmatprep.subr.mxu0 0.0
  %1664 = vmatpush1.msra.mxu0 0.0
  %1665 = vmatprep.subr.mxu0 0.0
  %1666 = vmatpush1.msra.mxu0 0.0
  %1667 = vmatprep.subr.mxu0 0.0
  %1668 = vmatpush1.msra.mxu0 0.0
  %1669 = vmatprep.subr.mxu0 0.0
  %1670 = vmatpush1.msra.mxu0 0.0
  %1671 = vmatprep.subr.mxu0 0.0
  %1672 = vmatpush1.msra.mxu0 0.0
  %1673 = vmatprep.subr.mxu0 0.0
  %1674 = vmatpush1.msra.mxu0 0.0
  %1675 = vmatprep.subr.mxu0 0.0
  %1676 = vmatpush1.msra.mxu0 0.0
  %1677 = vmatprep.subr.mxu0 0.0
  %1678 = vmatpush1.msra.mxu0 0.0
  %1679 = vmatprep.subr.mxu0 0.0
  %1680 = vmatpush1.msra.mxu0 0.0
  %1681 = vmatprep.subr.mxu0 0.0
  %1682 = vmatpush1.msra.mxu0 0.0
  %1683 = vmatprep.subr.mxu0 0.0
  %1684 = vmatpush1.msra.mxu0 0.0
  %1685 = vmatprep.subr.mxu0 0.0
  %1686 = vmatpush1.msra.mxu0 0.0
  %1687 = vmatprep.subr.mxu0 0.0
  %1688 = vmatpush1.msra.mxu0 0.0
  %1689 = vmatprep.subr.mxu0 0.0
  %1690 = vmatpush1.msra.mxu0 0.0
  %1691 = vmatprep.subr.mxu0 0.0
  %1692 = vmatpush1.msra.mxu0 0.0
  %1693 = vmatprep.subr.mxu0 0.0
  %1694 = vmatpush1.msra.mxu0 0.0
  %1695 = vmatprep.subr.mxu0 0.0
  %1696 = vmatpush1.msra.mxu0 0.0
  %1697 = vmatprep.subr.mxu0 0.0
  %1698 = vmatpush1.msra.mxu0 0.0
  %1699 = vmatprep.subr.mxu0 0.0
  %1700 = vmatpush1.msra.mxu0 0.0
  %1701 = vmatprep.subr.mxu0 0.0
  %1702 = vmatpush1.msra.mxu0 0.0
  %1703 = vmatprep.subr.mxu0 0.0
  %1704 = vmatpush1.msra.mxu0 0.0
  %1705 = vmatprep.subr.mxu0 0.0
  %1706 = vmatpush1.msra.mxu0 0.0
  %1707 = vmatprep.subr.mxu0 0.0
  %1708 = vmatpush1.msra.mxu0 0.0
  %1709 = vmatprep.mubr.f32.mxu0 0.0
  %1710 = vmatmul.mubr.f32.gmra.mrb[0].mxu0 %v729
  %v1711 = vpop.f32.mrb[0].mxu0
  %v1712 = vadd.f32 0.0, %v1711
  %v1713 = vpop.f32.mrb[0].mxu0
  %1714 = vmatprep.mubr.f32.mxu0 0.0
  %1715 = vmatmul.mubr.f32.gmra.mrb[0].mxu0 %v732
  %v1716 = vpop.f32.mrb[0].mxu0
  %v1717 = vadd.f32 0.0, %v1716
  %v1718 = vpop.f32.mrb[0].mxu0
  %1719 = vdwg.mxu0
  %vm1720 = vcmp.gt.f32.partialorder %v1712, 0.0
  %vm1721 = vcmp.gt.f32.partialorder %v1717, 0.0
  %v1722 = vsel %vm1720, %v1712, 1.0
  %v1723 = vsel %vm1721, %v1717, 1.0
  %v1724 = vrcp.pop %v1722
  %v1725 = vrcp.pop %v1723
  %1727 = vset.pattern.permute.xlu0 0
  %1728 = vperm.xlu0 %1727, %v1724
  %v1729 = vpop.permute.xlu0 %1728
  %1732 = vset.pattern.permute.xlu0 0
  %1733 = vperm.xlu0 %1732, %v1725
  %v1734 = vpop.permute.xlu0 %1733
  %v1736 = vmul.f32 %v1637, %v1729
  %v1737 = vmul.f32 %v1642, %v1734
  %vm1738 = vcmp.gt.f32.partialorder %v1736, 0.0
  %vm1739 = vcmp.gt.f32.partialorder %v1737, 0.0
  %v1740 = vmin.f32 %v1736, 0.0
  %v1741 = vmin.f32 %v1737, 0.0
  %v1742 = vmul.f32 %v1740, 1.442695
  %v1743 = vpow.pop %v1742
  %v1744 = vmul.f32 %v1741, 1.442695
  %v1745 = vpow.pop %v1744
  %v1746 = vsub.f32 %v1743, 1.0
  %v1747 = vsub.f32 %v1745, 1.0
  %v1748 = vsel %vm1738, %v1736, %v1746
  %v1749 = vsel %vm1739, %v1737, %v1747
  %v1750 = vsel %vm445, %v1748, %v1068
  %v1751 = vsel %vm445, %v1749, %v1069
  %v1752 = vld [vmem:[%s5 + $0xe8] sm:$0xff]
  %v1753 = vld [vmem:[%s5 + $0xf0] sm:$0xff]
  %v1754 = vld [vmem:[%s5 + $0xf8] sm:$0xff]
  %v1755 = vld [vmem:[%s5 + $0x100] sm:$0xff]
  %v1756 = vld [vmem:[%s5 + $0x108] sm:$0xff]
  %v1757 = vld [vmem:[%s5 + $0x110] sm:$0xff]
  %v1758 = vld [vmem:[%s5 + $0x118] sm:$0xff]
  %v1759 = vld [vmem:[%s5 + $0x120] sm:$0xff]
  %v1760 = vld [vmem:[%s5 + $0xe0] sm:$0x1]
  %v1761 = vlaneseq
  %v1762 = vshrl.u32 %v1761, 7
  %v1763 = vsub.s32 0, %v1762
  %v1764 = vrot.slane %v1760, %v1763
  %v1766 = vsel %vm462, %v1750, 0
  %v1769 = vsel %vm462, %v1751, 0
  %1771 = vmatprep.subr.mxu0 0.0
  %1772 = vmatpush1.msra.mxu0 %v1752
  %1773 = vmatprep.subr.mxu0 0.0
  %1774 = vmatpush1.msra.mxu0 %v1753
  %1775 = vmatprep.subr.mxu0 0.0
  %1776 = vmatpush1.msra.mxu0 %v1754
  %1777 = vmatprep.subr.mxu0 0.0
  %1778 = vmatpush1.msra.mxu0 %v1755
  %1779 = vmatprep.subr.mxu0 0.0
  %1780 = vmatpush1.msra.mxu0 %v1756
  %1781 = vmatprep.subr.mxu0 0.0
  %1782 = vmatpush1.msra.mxu0 %v1757
  %1783 = vmatprep.subr.mxu0 0.0
  %1784 = vmatpush1.msra.mxu0 %v1758
  %1785 = vmatprep.subr.mxu0 0.0
  %1786 = vmatpush1.msra.mxu0 %v1759
  %1787 = vmatprep.subr.mxu0 0.0
  %1788 = vmatpush1.msra.mxu0 0.0
  %1789 = vmatprep.subr.mxu0 0.0
  %1790 = vmatpush1.msra.mxu0 0.0
  %1791 = vmatprep.subr.mxu0 0.0
  %1792 = vmatpush1.msra.mxu0 0.0
  %1793 = vmatprep.subr.mxu0 0.0
  %1794 = vmatpush1.msra.mxu0 0.0
  %1795 = vmatprep.subr.mxu0 0.0
  %1796 = vmatpush1.msra.mxu0 0.0
  %1797 = vmatprep.subr.mxu0 0.0
  %1798 = vmatpush1.msra.mxu0 0.0
  %1799 = vmatprep.subr.mxu0 0.0
  %1800 = vmatpush1.msra.mxu0 0.0
  %1801 = vmatprep.subr.mxu0 0.0
  %1802 = vmatpush1.msra.mxu0 0.0
  %1803 = vmatprep.subr.mxu0 0.0
  %1804 = vmatpush1.msra.mxu0 0.0
  %1805 = vmatprep.subr.mxu0 0.0
  %1806 = vmatpush1.msra.mxu0 0.0
  %1807 = vmatprep.subr.mxu0 0.0
  %1808 = vmatpush1.msra.mxu0 0.0
  %1809 = vmatprep.subr.mxu0 0.0
  %1810 = vmatpush1.msra.mxu0 0.0
  %1811 = vmatprep.subr.mxu0 0.0
  %1812 = vmatpush1.msra.mxu0 0.0
  %1813 = vmatprep.subr.mxu0 0.0
  %1814 = vmatpush1.msra.mxu0 0.0
  %1815 = vmatprep.subr.mxu0 0.0
  %1816 = vmatpush1.msra.mxu0 0.0
  %1817 = vmatprep.subr.mxu0 0.0
  %1818 = vmatpush1.msra.mxu0 0.0
  %1819 = vmatprep.subr.mxu0 0.0
  %1820 = vmatpush1.msra.mxu0 0.0
  %1821 = vmatprep.subr.mxu0 0.0
  %1822 = vmatpush1.msra.mxu0 0.0
  %1823 = vmatprep.subr.mxu0 0.0
  %1824 = vmatpush1.msra.mxu0 0.0
  %1825 = vmatprep.subr.mxu0 0.0
  %1826 = vmatpush1.msra.mxu0 0.0
  %1827 = vmatprep.subr.mxu0 0.0
  %1828 = vmatpush1.msra.mxu0 0.0
  %1829 = vmatprep.subr.mxu0 0.0
  %1830 = vmatpush1.msra.mxu0 0.0
  %1831 = vmatprep.subr.mxu0 0.0
  %1832 = vmatpush1.msra.mxu0 0.0
  %1833 = vmatprep.subr.mxu0 0.0
  %1834 = vmatpush1.msra.mxu0 0.0
  %1835 = vmatprep.mubr.f32.mxu0 0.0
  %1836 = vmatmul.mubr.f32.gmra.mrb[0].mxu0 %v1766
  %v1837 = vpop.f32.mrb[0].mxu0
  %v1838 = vadd.f32 %v1764, %v1837
  %v1839 = vpop.f32.mrb[0].mxu0
  %1840 = vmatprep.mubr.f32.mxu0 0.0
  %1841 = vmatmul.mubr.f32.gmra.mrb[0].mxu0 %v1769
  %v1842 = vpop.f32.mrb[0].mxu0
  %v1843 = vadd.f32 %v1764, %v1842
  %v1844 = vpop.f32.mrb[0].mxu0
  %1845 = vdwg.mxu0
  %v1846 = vxor.u32 %v1838, 2147483648
  %v1847 = vxor.u32 %v1843, 2147483648
  %v1848 = vmul.f32 %v1846, 1.442695
  %v1849 = vpow.pop %v1848
  %v1850 = vmul.f32 %v1847, 1.442695
  %v1851 = vpow.pop %v1850
  %v1852 = vadd.f32 %v1849, 1.0
  %v1853 = vadd.f32 %v1851, 1.0
  %v1854 = vrcp.pop %v1852
  %v1855 = vmul.f32 1.0, %v1854
  %v1856 = vrcp.pop %v1853
  %v1857 = vmul.f32 1.0, %v1856
  %1860 = vrot.lane.b32.xlu0 %v1838, 32
  %v1861 = vpop.permute.xlu0 %1860
  %1862 = vrot.lane.b32.xlu0 %v1843, 32
  %v1863 = vpop.permute.xlu0 %1862
  %v1866 = vmul.f32 %v1855, %v1861
  %v1867 = vmul.f32 %v1857, %v1863
  %1870 = vrot.lane.b32.xlu0 %v1866, 64
  %v1871 = vpop.permute.xlu0 %1870
  %1872 = vrot.lane.b32.xlu0 %v1867, 64
  %v1873 = vpop.permute.xlu0 %1872
  %v1876 = vadd.f32 %v1838, %v1871
  %v1877 = vadd.f32 %v1843, %v1873
  %v1878 = vtanh.pop %v1876
  %v1879 = vtanh.pop %v1877
  %v1880 = vsub.f32 1.0, %v1855
  %v1881 = vsub.f32 1.0, %v1857
  %1884 = vrot.lane.b32.xlu0 %v1878, 96
  %v1885 = vpop.permute.xlu0 %1884
  %1886 = vrot.lane.b32.xlu0 %v1879, 96
  %v1887 = vpop.permute.xlu0 %1886
  %v1890 = vmul.f32 %v1880, %v1885
  %v1891 = vmul.f32 %v1881, %v1887
  %v1892 = vmul.f32 %v1855, %v1068
  %v1893 = vmul.f32 %v1857, %v1069
  %v1894 = vadd.f32 %v1890, %v1892
  %v1895 = vadd.f32 %v1891, %v1893
  %v1896 = vmax.f32 %v1894, 0.0
  %v1897 = vmax.f32 %v1895, 0.0
  %1900 = vrot.lane.b32.xlu0 %v1896, 96
  %v1901 = vpop.permute.xlu0 %1900
  %1902 = vrot.lane.b32.xlu0 %v1897, 96
  %v1903 = vpop.permute.xlu0 %1902
  %v1907 = vsel %vm129, %v34, 0
  %1909 = vmatprep.subr.mxu0 0.0
  %1910 = vmatpush1.msra.mxu0 %v1901
  %1911 = vmatprep.subr.mxu0 0.0
  %1912 = vmatpush1.msra.mxu0 %v1903
  %1913 = vmatprep.subr.mxu0 0.0
  %1914 = vmatpush1.msra.mxu0 0.0
  %1915 = vmatprep.subr.mxu0 0.0
  %1916 = vmatpush1.msra.mxu0 0.0
  %1917 = vmatprep.subr.mxu0 0.0
  %1918 = vmatpush1.msra.mxu0 0.0
  %1919 = vmatprep.subr.mxu0 0.0
  %1920 = vmatpush1.msra.mxu0 0.0
  %1921 = vmatprep.subr.mxu0 0.0
  %1922 = vmatpush1.msra.mxu0 0.0
  %1923 = vmatprep.subr.mxu0 0.0
  %1924 = vmatpush1.msra.mxu0 0.0
  %1925 = vmatprep.subr.mxu0 0.0
  %1926 = vmatpush1.msra.mxu0 0.0
  %1927 = vmatprep.subr.mxu0 0.0
  %1928 = vmatpush1.msra.mxu0 0.0
  %1929 = vmatprep.subr.mxu0 0.0
  %1930 = vmatpush1.msra.mxu0 0.0
  %1931 = vmatprep.subr.mxu0 0.0
  %1932 = vmatpush1.msra.mxu0 0.0
  %1933 = vmatprep.subr.mxu0 0.0
  %1934 = vmatpush1.msra.mxu0 0.0
  %1935 = vmatprep.subr.mxu0 0.0
  %1936 = vmatpush1.msra.mxu0 0.0
  %1937 = vmatprep.subr.mxu0 0.0
  %1938 = vmatpush1.msra.mxu0 0.0
  %1939 = vmatprep.subr.mxu0 0.0
  %1940 = vmatpush1.msra.mxu0 0.0
  %1941 = vmatprep.subr.mxu0 0.0
  %1942 = vmatpush1.msra.mxu0 0.0
  %1943 = vmatprep.subr.mxu0 0.0
  %1944 = vmatpush1.msra.mxu0 0.0
  %1945 = vmatprep.subr.mxu0 0.0
  %1946 = vmatpush1.msra.mxu0 0.0
  %1947 = vmatprep.subr.mxu0 0.0
  %1948 = vmatpush1.msra.mxu0 0.0
  %1949 = vmatprep.subr.mxu0 0.0
  %1950 = vmatpush1.msra.mxu0 0.0
  %1951 = vmatprep.subr.mxu0 0.0
  %1952 = vmatpush1.msra.mxu0 0.0
  %1953 = vmatprep.subr.mxu0 0.0
  %1954 = vmatpush1.msra.mxu0 0.0
  %1955 = vmatprep.subr.mxu0 0.0
  %1956 = vmatpush1.msra.mxu0 0.0
  %1957 = vmatprep.subr.mxu0 0.0
  %1958 = vmatpush1.msra.mxu0 0.0
  %1959 = vmatprep.subr.mxu0 0.0
  %1960 = vmatpush1.msra.mxu0 0.0
  %1961 = vmatprep.subr.mxu0 0.0
  %1962 = vmatpush1.msra.mxu0 0.0
  %1963 = vmatprep.subr.mxu0 0.0
  %1964 = vmatpush1.msra.mxu0 0.0
  %1965 = vmatprep.subr.mxu0 0.0
  %1966 = vmatpush1.msra.mxu0 0.0
  %1967 = vmatprep.subr.mxu0 0.0
  %1968 = vmatpush1.msra.mxu0 0.0
  %1969 = vmatprep.subr.mxu0 0.0
  %1970 = vmatpush1.msra.mxu0 0.0
  %1971 = vmatprep.subr.mxu0 0.0
  %1972 = vmatpush1.msra.mxu0 0.0
  %1973 = vmatprep.mubr.f32.mxu0 0.0
  %1974 = vmatmul.mubr.f32.gmra.mrb[0].mxu0 %v1907
  %v1975 = vpop.f32.mrb[0].mxu0
  %v1976 = vadd.f32 0.0, %v1975
  %v1977 = vpop.f32.mrb[0].mxu0
  %1978 = vdwg.mxu0
  %v1979 = vmax.f32 %v1976, 0.0
  %1980 = vxpose.xlu0.b32.start [1/16] %v34, 128
  %1981 = vxpose.xlu0.b32.cont [2/16] 0.0, 128
  %1982 = vxpose.xlu0.b32.cont [3/16] 0.0, 128
  %1983 = vxpose.xlu0.b32.cont [4/16] 0.0, 128
  %1984 = vxpose.xlu0.b32.cont [5/16] 0.0, 128
  %1985 = vxpose.xlu0.b32.cont [6/16] 0.0, 128
  %1986 = vxpose.xlu0.b32.cont [7/16] 0.0, 128
  %1987 = vxpose.xlu0.b32.cont [8/16] 0.0, 128
  %1988 = vxpose.xlu0.b32.cont [9/16] 0.0, 128
  %1989 = vxpose.xlu0.b32.cont [10/16] 0.0, 128
  %1990 = vxpose.xlu0.b32.cont [11/16] 0.0, 128
  %1991 = vxpose.xlu0.b32.cont [12/16] 0.0, 128
  %1992 = vxpose.xlu0.b32.cont [13/16] 0.0, 128
  %1993 = vxpose.xlu0.b32.cont [14/16] 0.0, 128
  %1994 = vxpose.xlu0.b32.cont [15/16] 0.0, 128
  %1995 = vxpose.xlu0.b32.end [16/16] 0.0, 128
  %v1996 = vpop.trf.xlu0
  %v1997 = vpop.trf.xlu0
  %v1998 = vpop.trf.xlu0
  %v1999 = vpop.trf.xlu0
  %v2000 = vpop.trf.xlu0
  %v2001 = vpop.trf.xlu0
  %v2002 = vpop.trf.xlu0
  %v2003 = vpop.trf.xlu0
  %v2004 = vpop.trf.xlu0
  %v2005 = vpop.trf.xlu0
  %v2006 = vpop.trf.xlu0
  %v2007 = vpop.trf.xlu0
  %v2008 = vpop.trf.xlu0
  %v2009 = vpop.trf.xlu0
  %v2010 = vpop.trf.xlu0
  %v2011 = vpop.trf.xlu0
  %v2013 = vsel %vm41, %v1996, 0
  %v2016 = vsel %vm41, %v1997, 0
  %2018 = vmatprep.subr.mxu0 0.0
  %2019 = vmatpush1.msra.mxu0 %v1979
  %2020 = vmatprep.subr.mxu0 0.0
  %2021 = vmatpush1.msra.mxu0 0.0
  %2022 = vmatprep.subr.mxu0 0.0
  %2023 = vmatpush1.msra.mxu0 0.0
  %2024 = vmatprep.subr.mxu0 0.0
  %2025 = vmatpush1.msra.mxu0 0.0
  %2026 = vmatprep.subr.mxu0 0.0
  %2027 = vmatpush1.msra.mxu0 0.0
  %2028 = vmatprep.subr.mxu0 0.0
  %2029 = vmatpush1.msra.mxu0 0.0
  %2030 = vmatprep.subr.mxu0 0.0
  %2031 = vmatpush1.msra.mxu0 0.0
  %2032 = vmatprep.subr.mxu0 0.0
  %2033 = vmatpush1.msra.mxu0 0.0
  %2034 = vmatprep.subr.mxu0 0.0
  %2035 = vmatpush1.msra.mxu0 0.0
  %2036 = vmatprep.subr.mxu0 0.0
  %2037 = vmatpush1.msra.mxu0 0.0
  %2038 = vmatprep.subr.mxu0 0.0
  %2039 = vmatpush1.msra.mxu0 0.0
  %2040 = vmatprep.subr.mxu0 0.0
  %2041 = vmatpush1.msra.mxu0 0.0
  %2042 = vmatprep.subr.mxu0 0.0
  %2043 = vmatpush1.msra.mxu0 0.0
  %2044 = vmatprep.subr.mxu0 0.0
  %2045 = vmatpush1.msra.mxu0 0.0
  %2046 = vmatprep.subr.mxu0 0.0
  %2047 = vmatpush1.msra.mxu0 0.0
  %2048 = vmatprep.subr.mxu0 0.0
  %2049 = vmatpush1.msra.mxu0 0.0
  %2050 = vmatprep.subr.mxu0 0.0
  %2051 = vmatpush1.msra.mxu0 0.0
  %2052 = vmatprep.subr.mxu0 0.0
  %2053 = vmatpush1.msra.mxu0 0.0
  %2054 = vmatprep.subr.mxu0 0.0
  %2055 = vmatpush1.msra.mxu0 0.0
  %2056 = vmatprep.subr.mxu0 0.0
  %2057 = vmatpush1.msra.mxu0 0.0
  %2058 = vmatprep.subr.mxu0 0.0
  %2059 = vmatpush1.msra.mxu0 0.0
  %2060 = vmatprep.subr.mxu0 0.0
  %2061 = vmatpush1.msra.mxu0 0.0
  %2062 = vmatprep.subr.mxu0 0.0
  %2063 = vmatpush1.msra.mxu0 0.0
  %2064 = vmatprep.subr.mxu0 0.0
  %2065 = vmatpush1.msra.mxu0 0.0
  %2066 = vmatprep.subr.mxu0 0.0
  %2067 = vmatpush1.msra.mxu0 0.0
  %2068 = vmatprep.subr.mxu0 0.0
  %2069 = vmatpush1.msra.mxu0 0.0
  %2070 = vmatprep.subr.mxu0 0.0
  %2071 = vmatpush1.msra.mxu0 0.0
  %2072 = vmatprep.subr.mxu0 0.0
  %2073 = vmatpush1.msra.mxu0 0.0
  %2074 = vmatprep.subr.mxu0 0.0
  %2075 = vmatpush1.msra.mxu0 0.0
  %2076 = vmatprep.subr.mxu0 0.0
  %2077 = vmatpush1.msra.mxu0 0.0
  %2078 = vmatprep.subr.mxu0 0.0
  %2079 = vmatpush1.msra.mxu0 0.0
  %2080 = vmatprep.subr.mxu0 0.0
  %2081 = vmatpush1.msra.mxu0 0.0
  %2082 = vmatprep.mubr.f32.mxu0 0.0
  %2083 = vmatmul.mubr.f32.gmra.mrb[0].mxu0 %v2013
  %v2084 = vpop.f32.mrb[0].mxu0
  %v2085 = vadd.f32 0.0, %v2084
  %v2086 = vpop.f32.mrb[0].mxu0
  %2087 = vmatprep.mubr.f32.mxu0 0.0
  %2088 = vmatmul.mubr.f32.gmra.mrb[0].mxu0 %v2016
  %v2089 = vpop.f32.mrb[0].mxu0
  %v2090 = vadd.f32 0.0, %v2089
  %v2091 = vpop.f32.mrb[0].mxu0
  %2092 = vdwg.mxu0
  %v2093 = vsel %vm445, %v2085, %v1896
  %v2094 = vsel %vm445, %v2090, %v1897
  %v2095 = vld [vmem:[%s5 + $0x210] sm:$0xff]
  %v2096 = vld [vmem:[%s5 + $0x218] sm:$0xff]
  %v2097 = vld [vmem:[%s5 + $0x220] sm:$0xff]
  %v2098 = vld [vmem:[%s5 + $0x228] sm:$0xff]
  %v2099 = vld [vmem:[%s5 + $0x230] sm:$0xff]
  %v2100 = vld [vmem:[%s5 + $0x238] sm:$0xff]
  %v2101 = vld [vmem:[%s5 + $0x240] sm:$0xff]
  %v2102 = vld [vmem:[%s5 + $0x248] sm:$0xff]
  %v2103 = vld [vmem:[%s5 + $0x208] sm:$0x1]
  %v2104 = vlaneseq
  %v2105 = vshrl.u32 %v2104, 7
  %v2106 = vsub.s32 0, %v2105
  %v2107 = vrot.slane %v2103, %v2106
  %v2109 = vsel %vm462, %v2093, 0
  %v2112 = vsel %vm462, %v2094, 0
  %2114 = vmatprep.subr.mxu0 0.0
  %2115 = vmatpush1.msra.mxu0 %v2095
  %2116 = vmatprep.subr.mxu0 0.0
  %2117 = vmatpush1.msra.mxu0 %v2096
  %2118 = vmatprep.subr.mxu0 0.0
  %2119 = vmatpush1.msra.mxu0 %v2097
  %2120 = vmatprep.subr.mxu0 0.0
  %2121 = vmatpush1.msra.mxu0 %v2098
  %2122 = vmatprep.subr.mxu0 0.0
  %2123 = vmatpush1.msra.mxu0 %v2099
  %2124 = vmatprep.subr.mxu0 0.0
  %2125 = vmatpush1.msra.mxu0 %v2100
  %2126 = vmatprep.subr.mxu0 0.0
  %2127 = vmatpush1.msra.mxu0 %v2101
  %2128 = vmatprep.subr.mxu0 0.0
  %2129 = vmatpush1.msra.mxu0 %v2102
  %2130 = vmatprep.subr.mxu0 0.0
  %2131 = vmatpush1.msra.mxu0 0.0
  %2132 = vmatprep.subr.mxu0 0.0
  %2133 = vmatpush1.msra.mxu0 0.0
  %2134 = vmatprep.subr.mxu0 0.0
  %2135 = vmatpush1.msra.mxu0 0.0
  %2136 = vmatprep.subr.mxu0 0.0
  %2137 = vmatpush1.msra.mxu0 0.0
  %2138 = vmatprep.subr.mxu0 0.0
  %2139 = vmatpush1.msra.mxu0 0.0
  %2140 = vmatprep.subr.mxu0 0.0
  %2141 = vmatpush1.msra.mxu0 0.0
  %2142 = vmatprep.subr.mxu0 0.0
  %2143 = vmatpush1.msra.mxu0 0.0
  %2144 = vmatprep.subr.mxu0 0.0
  %2145 = vmatpush1.msra.mxu0 0.0
  %2146 = vmatprep.subr.mxu0 0.0
  %2147 = vmatpush1.msra.mxu0 0.0
  %2148 = vmatprep.subr.mxu0 0.0
  %2149 = vmatpush1.msra.mxu0 0.0
  %2150 = vmatprep.subr.mxu0 0.0
  %2151 = vmatpush1.msra.mxu0 0.0
  %2152 = vmatprep.subr.mxu0 0.0
  %2153 = vmatpush1.msra.mxu0 0.0
  %2154 = vmatprep.subr.mxu0 0.0
  %2155 = vmatpush1.msra.mxu0 0.0
  %2156 = vmatprep.subr.mxu0 0.0
  %2157 = vmatpush1.msra.mxu0 0.0
  %2158 = vmatprep.subr.mxu0 0.0
  %2159 = vmatpush1.msra.mxu0 0.0
  %2160 = vmatprep.subr.mxu0 0.0
  %2161 = vmatpush1.msra.mxu0 0.0
  %2162 = vmatprep.subr.mxu0 0.0
  %2163 = vmatpush1.msra.mxu0 0.0
  %2164 = vmatprep.subr.mxu0 0.0
  %2165 = vmatpush1.msra.mxu0 0.0
  %2166 = vmatprep.subr.mxu0 0.0
  %2167 = vmatpush1.msra.mxu0 0.0
  %2168 = vmatprep.subr.mxu0 0.0
  %2169 = vmatpush1.msra.mxu0 0.0
  %2170 = vmatprep.subr.mxu0 0.0
  %2171 = vmatpush1.msra.mxu0 0.0
  %2172 = vmatprep.subr.mxu0 0.0
  %2173 = vmatpush1.msra.mxu0 0.0
  %2174 = vmatprep.subr.mxu0 0.0
  %2175 = vmatpush1.msra.mxu0 0.0
  %2176 = vmatprep.subr.mxu0 0.0
  %2177 = vmatpush1.msra.mxu0 0.0
  %2178 = vmatprep.mubr.f32.mxu0 0.0
  %2179 = vmatmul.mubr.f32.gmra.mrb[0].mxu0 %v2109
  %v2180 = vpop.f32.mrb[0].mxu0
  %v2181 = vadd.f32 %v2107, %v2180
  %v2182 = vpop.f32.mrb[0].mxu0
  %2183 = vmatprep.mubr.f32.mxu0 0.0
  %2184 = vmatmul.mubr.f32.gmra.mrb[0].mxu0 %v2112
  %v2185 = vpop.f32.mrb[0].mxu0
  %v2186 = vadd.f32 %v2107, %v2185
  %v2187 = vpop.f32.mrb[0].mxu0
  %2188 = vdwg.mxu0
  %vm2189 = vcmp.gt.f32.partialorder %v2181, 0.0
  %vm2190 = vcmp.gt.f32.partialorder %v2186, 0.0
  %v2191 = vmul.f32 %v2181, 0.01
  %v2192 = vmul.f32 %v2186, 0.01
  %v2193 = vsel %vm2189, %v2181, %v2191
  %v2194 = vsel %vm2190, %v2186, %v2192
  %v2195 = vld [vmem:[%s5 + $0x258] sm:$0xff]
  %v2196 = vld [vmem:[%s5 + $0x260] sm:$0xff]
  %v2197 = vld [vmem:[%s5 + $0x268] sm:$0xff]
  %v2198 = vld [vmem:[%s5 + $0x270] sm:$0xff]
  %v2199 = vld [vmem:[%s5 + $0x250] sm:$0x1]
  %v2200 = vlaneseq
  %v2201 = vshrl.u32 %v2200, 7
  %v2202 = vsub.s32 0, %v2201
  %v2203 = vrot.slane %v2199, %v2202
  %v2204 = vsel %vm445, %v1901, 0
  %v2206 = vsel %vm445, %v1903, 0
  %2208 = vmatprep.subr.mxu0 0.0
  %2209 = vmatpush1.msra.mxu0 %v2195
  %2210 = vmatprep.subr.mxu0 0.0
  %2211 = vmatpush1.msra.mxu0 %v2196
  %2212 = vmatprep.subr.mxu0 0.0
  %2213 = vmatpush1.msra.mxu0 %v2197
  %2214 = vmatprep.subr.mxu0 0.0
  %2215 = vmatpush1.msra.mxu0 %v2198
  %2216 = vmatprep.subr.mxu0 0.0
  %2217 = vmatpush1.msra.mxu0 0.0
  %2218 = vmatprep.subr.mxu0 0.0
  %2219 = vmatpush1.msra.mxu0 0.0
  %2220 = vmatprep.subr.mxu0 0.0
  %2221 = vmatpush1.msra.mxu0 0.0
  %2222 = vmatprep.subr.mxu0 0.0
  %2223 = vmatpush1.msra.mxu0 0.0
  %2224 = vmatprep.subr.mxu0 0.0
  %2225 = vmatpush1.msra.mxu0 0.0
  %2226 = vmatprep.subr.mxu0 0.0
  %2227 = vmatpush1.msra.mxu0 0.0
  %2228 = vmatprep.subr.mxu0 0.0
  %2229 = vmatpush1.msra.mxu0 0.0
  %2230 = vmatprep.subr.mxu0 0.0
  %2231 = vmatpush1.msra.mxu0 0.0
  %2232 = vmatprep.subr.mxu0 0.0
  %2233 = vmatpush1.msra.mxu0 0.0
  %2234 = vmatprep.subr.mxu0 0.0
  %2235 = vmatpush1.msra.mxu0 0.0
  %2236 = vmatprep.subr.mxu0 0.0
  %2237 = vmatpush1.msra.mxu0 0.0
  %2238 = vmatprep.subr.mxu0 0.0
  %2239 = vmatpush1.msra.mxu0 0.0
  %2240 = vmatprep.subr.mxu0 0.0
  %2241 = vmatpush1.msra.mxu0 0.0
  %2242 = vmatprep.subr.mxu0 0.0
  %2243 = vmatpush1.msra.mxu0 0.0
  %2244 = vmatprep.subr.mxu0 0.0
  %2245 = vmatpush1.msra.mxu0 0.0
  %2246 = vmatprep.subr.mxu0 0.0
  %2247 = vmatpush1.msra.mxu0 0.0
  %2248 = vmatprep.subr.mxu0 0.0
  %2249 = vmatpush1.msra.mxu0 0.0
  %2250 = vmatprep.subr.mxu0 0.0
  %2251 = vmatpush1.msra.mxu0 0.0
  %2252 = vmatprep.subr.mxu0 0.0
  %2253 = vmatpush1.msra.mxu0 0.0
  %2254 = vmatprep.subr.mxu0 0.0
  %2255 = vmatpush1.msra.mxu0 0.0
  %2256 = vmatprep.subr.mxu0 0.0
  %2257 = vmatpush1.msra.mxu0 0.0
  %2258 = vmatprep.subr.mxu0 0.0
  %2259 = vmatpush1.msra.mxu0 0.0
  %2260 = vmatprep.subr.mxu0 0.0
  %2261 = vmatpush1.msra.mxu0 0.0
  %2262 = vmatprep.subr.mxu0 0.0
  %2263 = vmatpush1.msra.mxu0 0.0
  %2264 = vmatprep.subr.mxu0 0.0
  %2265 = vmatpush1.msra.mxu0 0.0
  %2266 = vmatprep.subr.mxu0 0.0
  %2267 = vmatpush1.msra.mxu0 0.0
  %2268 = vmatprep.subr.mxu0 0.0
  %2269 = vmatpush1.msra.mxu0 0.0
  %2270 = vmatprep.subr.mxu0 0.0
  %2271 = vmatpush1.msra.mxu0 0.0
  %2272 = vmatprep.mubr.f32.mxu0 0.0
  %2273 = vmatmul.mubr.f32.gmra.mrb[0].mxu0 %v2204
  %v2274 = vpop.f32.mrb[0].mxu0
  %v2275 = vadd.f32 %v2203, %v2274
  %v2276 = vpop.f32.mrb[0].mxu0
  %2277 = vmatprep.mubr.f32.mxu0 0.0
  %2278 = vmatmul.mubr.f32.gmra.mrb[0].mxu0 %v2206
  %v2279 = vpop.f32.mrb[0].mxu0
  %v2280 = vadd.f32 %v2203, %v2279
  %v2281 = vpop.f32.mrb[0].mxu0
  %2282 = vdwg.mxu0
  %v2283 = vsel %vm656, %v2193, -inf
  %v2284 = vsel %vm656, %v2194, -inf
  %v2285 = vmax.f32 %v2283, %v2284
  %v2286 = vrot.slane %v2285, 4
  %v2287 = vmax.f32 %v2285, %v2286
  %v2288 = vrot.slane %v2287, 2
  %v2289 = vmax.f32 %v2287, %v2288
  %v2290 = vrot.slane %v2289, 1
  %v2291 = vmax.f32 %v2289, %v2290
  %v2292 = vsub.f32 %v2193, %v2291
  %v2293 = vsub.f32 %v2194, %v2291
  %v2294 = vmul.f32 %v2292, 1.442695
  %v2295 = vpow.pop %v2294
  %v2296 = vmul.f32 %v2293, 1.442695
  %v2297 = vpow.pop %v2296
  %2299 = vset.pattern.permute.xlu0 0
  %2300 = vperm.xlu0 %2299, %v2295
  %v2301 = vpop.permute.xlu0 %2300
  %2304 = vset.pattern.permute.xlu0 0
  %2305 = vperm.xlu0 %2304, %v2297
  %v2306 = vpop.permute.xlu0 %2305
  %v2308 = vmul.f32 %v2301, %v2275
  %v2309 = vmul.f32 %v2306, %v2280
  %2310 = vmatprep.subr.mxu0 0.0
  %2311 = vmatpush1.msra.mxu0 %v2308
  %2312 = vmatprep.subr.mxu0 0.0
  %2313 = vmatpush1.msra.mxu0 %v2309
  %2314 = vmatprep.subr.mxu0 0.0
  %2315 = vmatpush1.msra.mxu0 0.0
  %2316 = vmatprep.subr.mxu0 0.0
  %2317 = vmatpush1.msra.mxu0 0.0
  %2318 = vmatprep.subr.mxu0 0.0
  %2319 = vmatpush1.msra.mxu0 0.0
  %2320 = vmatprep.subr.mxu0 0.0
  %2321 = vmatpush1.msra.mxu0 0.0
  %2322 = vmatprep.subr.mxu0 0.0
  %2323 = vmatpush1.msra.mxu0 0.0
  %2324 = vmatprep.subr.mxu0 0.0
  %2325 = vmatpush1.msra.mxu0 0.0
  %2326 = vmatprep.subr.mxu0 0.0
  %2327 = vmatpush1.msra.mxu0 0.0
  %2328 = vmatprep.subr.mxu0 0.0
  %2329 = vmatpush1.msra.mxu0 0.0
  %2330 = vmatprep.subr.mxu0 0.0
  %2331 = vmatpush1.msra.mxu0 0.0
  %2332 = vmatprep.subr.mxu0 0.0
  %2333 = vmatpush1.msra.mxu0 0.0
  %2334 = vmatprep.subr.mxu0 0.0
  %2335 = vmatpush1.msra.mxu0 0.0
  %2336 = vmatprep.subr.mxu0 0.0
  %2337 = vmatpush1.msra.mxu0 0.0
  %2338 = vmatprep.subr.mxu0 0.0
  %2339 = vmatpush1.msra.mxu0 0.0
  %2340 = vmatprep.subr.mxu0 0.0
  %2341 = vmatpush1.msra.mxu0 0.0
  %2342 = vmatprep.subr.mxu0 0.0
  %2343 = vmatpush1.msra.mxu0 0.0
  %2344 = vmatprep.subr.mxu0 0.0
  %2345 = vmatpush1.msra.mxu0 0.0
  %2346 = vmatprep.subr.mxu0 0.0
  %2347 = vmatpush1.msra.mxu0 0.0
  %2348 = vmatprep.subr.mxu0 0.0
  %2349 = vmatpush1.msra.mxu0 0.0
  %2350 = vmatprep.subr.mxu0 0.0
  %2351 = vmatpush1.msra.mxu0 0.0
  %2352 = vmatprep.subr.mxu0 0.0
  %2353 = vmatpush1.msra.mxu0 0.0
  %2354 = vmatprep.subr.mxu0 0.0
  %2355 = vmatpush1.msra.mxu0 0.0
  %2356 = vmatprep.subr.mxu0 0.0
  %2357 = vmatpush1.msra.mxu0 0.0
  %2358 = vmatprep.subr.mxu0 0.0
  %2359 = vmatpush1.msra.mxu0 0.0
  %2360 = vmatprep.subr.mxu0 0.0
  %2361 = vmatpush1.msra.mxu0 0.0
  %2362 = vmatprep.subr.mxu0 0.0
  %2363 = vmatpush1.msra.mxu0 0.0
  %2364 = vmatprep.subr.mxu0 0.0
  %2365 = vmatpush1.msra.mxu0 0.0
  %2366 = vmatprep.subr.mxu0 0.0
  %2367 = vmatpush1.msra.mxu0 0.0
  %2368 = vmatprep.subr.mxu0 0.0
  %2369 = vmatpush1.msra.mxu0 0.0
  %2370 = vmatprep.subr.mxu0 0.0
  %2371 = vmatpush1.msra.mxu0 0.0
  %2372 = vmatprep.subr.mxu0 0.0
  %2373 = vmatpush1.msra.mxu0 0.0
  %2374 = vmatprep.mubr.f32.mxu0 0.0
  %2375 = vmatmul.mubr.f32.gmra.mrb[0].mxu0 %v1907
  %v2376 = vpop.f32.mrb[0].mxu0
  %v2377 = vadd.f32 0.0, %v2376
  %v2378 = vpop.f32.mrb[0].mxu0
  %2379 = vdwg.mxu0
  %2380 = vmatprep.subr.mxu0 0.0
  %2381 = vmatpush1.msra.mxu0 %v2295
  %2382 = vmatprep.subr.mxu0 0.0
  %2383 = vmatpush1.msra.mxu0 %v2297
  %2384 = vmatprep.subr.mxu0 0.0
  %2385 = vmatpush1.msra.mxu0 0.0
  %2386 = vmatprep.subr.mxu0 0.0
  %2387 = vmatpush1.msra.mxu0 0.0
  %2388 = vmatprep.subr.mxu0 0.0
  %2389 = vmatpush1.msra.mxu0 0.0
  %2390 = vmatprep.subr.mxu0 0.0
  %2391 = vmatpush1.msra.mxu0 0.0
  %2392 = vmatprep.subr.mxu0 0.0
  %2393 = vmatpush1.msra.mxu0 0.0
  %2394 = vmatprep.subr.mxu0 0.0
  %2395 = vmatpush1.msra.mxu0 0.0
  %2396 = vmatprep.subr.mxu0 0.0
  %2397 = vmatpush1.msra.mxu0 0.0
  %2398 = vmatprep.subr.mxu0 0.0
  %2399 = vmatpush1.msra.mxu0 0.0
  %2400 = vmatprep.subr.mxu0 0.0
  %2401 = vmatpush1.msra.mxu0 0.0
  %2402 = vmatprep.subr.mxu0 0.0
  %2403 = vmatpush1.msra.mxu0 0.0
  %2404 = vmatprep.subr.mxu0 0.0
  %2405 = vmatpush1.msra.mxu0 0.0
  %2406 = vmatprep.subr.mxu0 0.0
  %2407 = vmatpush1.msra.mxu0 0.0
  %2408 = vmatprep.subr.mxu0 0.0
  %2409 = vmatpush1.msra.mxu0 0.0
  %2410 = vmatprep.subr.mxu0 0.0
  %2411 = vmatpush1.msra.mxu0 0.0
  %2412 = vmatprep.subr.mxu0 0.0
  %2413 = vmatpush1.msra.mxu0 0.0
  %2414 = vmatprep.subr.mxu0 0.0
  %2415 = vmatpush1.msra.mxu0 0.0
  %2416 = vmatprep.subr.mxu0 0.0
  %2417 = vmatpush1.msra.mxu0 0.0
  %2418 = vmatprep.subr.mxu0 0.0
  %2419 = vmatpush1.msra.mxu0 0.0
  %2420 = vmatprep.subr.mxu0 0.0
  %2421 = vmatpush1.msra.mxu0 0.0
  %2422 = vmatprep.subr.mxu0 0.0
  %2423 = vmatpush1.msra.mxu0 0.0
  %2424 = vmatprep.subr.mxu0 0.0
  %2425 = vmatpush1.msra.mxu0 0.0
  %2426 = vmatprep.subr.mxu0 0.0
  %2427 = vmatpush1.msra.mxu0 0.0
  %2428 = vmatprep.subr.mxu0 0.0
  %2429 = vmatpush1.msra.mxu0 0.0
  %2430 = vmatprep.subr.mxu0 0.0
  %2431 = vmatpush1.msra.mxu0 0.0
  %2432 = vmatprep.subr.mxu0 0.0
  %2433 = vmatpush1.msra.mxu0 0.0
  %2434 = vmatprep.subr.mxu0 0.0
  %2435 = vmatpush1.msra.mxu0 0.0
  %2436 = vmatprep.subr.mxu0 0.0
  %2437 = vmatpush1.msra.mxu0 0.0
  %2438 = vmatprep.subr.mxu0 0.0
  %2439 = vmatpush1.msra.mxu0 0.0
  %2440 = vmatprep.subr.mxu0 0.0
  %2441 = vmatpush1.msra.mxu0 0.0
  %2442 = vmatprep.subr.mxu0 0.0
  %2443 = vmatpush1.msra.mxu0 0.0
  %2444 = vmatprep.mubr.f32.mxu0 0.0
  %2445 = vmatmul.mubr.f32.gmra.mrb[0].mxu0 %v1907
  %v2446 = vpop.f32.mrb[0].mxu0
  %v2447 = vadd.f32 0.0, %v2446
  %v2448 = vpop.f32.mrb[0].mxu0
  %2449 = vdwg.mxu0
  %vm2450 = vcmp.gt.f32.partialorder %v2447, 0.0
  %v2451 = vsel %vm2450, %v2447, 1.0
  %v2452 = vrcp.pop %v2451
  %2454 = vset.pattern.permute.xlu0 0
  %2455 = vperm.xlu0 %2454, %v2452
  %v2456 = vpop.permute.xlu0 %2455
  %v2458 = vmul.f32 %v2377, %v2456
  %vm2459 = vcmp.gt.f32.partialorder %v2458, 0.0
  %v2460 = vmin.f32 %v2458, 0.0
  %v2461 = vmul.f32 %v2460, 1.442695
  %v2462 = vpow.pop %v2461
  %v2463 = vsub.f32 %v2462, 1.0
  %v2464 = vsel %vm2459, %v2458, %v2463
  %2466 = vrot.lane.b32.xlu0 %v1976, 32
  %v2467 = vpop.permute.xlu0 %2466
  %v2469 = vsel %vm445, %v2464, %v2467
  %v2470 = vld [vmem:[%s5 + $0x1c8] sm:$0xff]
  %v2471 = vld [vmem:[%s5 + $0x1d0] sm:$0xff]
  %v2472 = vld [vmem:[%s5 + $0x1d8] sm:$0xff]
  %v2473 = vld [vmem:[%s5 + $0x1e0] sm:$0xff]
  %v2474 = vld [vmem:[%s5 + $0x1e8] sm:$0xff]
  %v2475 = vld [vmem:[%s5 + $0x1f0] sm:$0xff]
  %v2476 = vld [vmem:[%s5 + $0x1f8] sm:$0xff]
  %v2477 = vld [vmem:[%s5 + $0x200] sm:$0xff]
  %v2478 = vld [vmem:[%s5 + $0x1c0] sm:$0x1]
  %v2479 = vlaneseq
  %v2480 = vshrl.u32 %v2479, 7
  %v2481 = vsub.s32 0, %v2480
  %v2482 = vrot.slane %v2478, %v2481
  %v2484 = vsel %vm462, %v2469, 0
  %2486 = vmatprep.subr.mxu0 0.0
  %2487 = vmatpush1.msra.mxu0 %v2470
  %2488 = vmatprep.subr.mxu0 0.0
  %2489 = vmatpush1.msra.mxu0 %v2471
  %2490 = vmatprep.subr.mxu0 0.0
  %2491 = vmatpush1.msra.mxu0 %v2472
  %2492 = vmatprep.subr.mxu0 0.0
  %2493 = vmatpush1.msra.mxu0 %v2473
  %2494 = vmatprep.subr.mxu0 0.0
  %2495 = vmatpush1.msra.mxu0 %v2474
  %2496 = vmatprep.subr.mxu0 0.0
  %2497 = vmatpush1.msra.mxu0 %v2475
  %2498 = vmatprep.subr.mxu0 0.0
  %2499 = vmatpush1.msra.mxu0 %v2476
  %2500 = vmatprep.subr.mxu0 0.0
  %2501 = vmatpush1.msra.mxu0 %v2477
  %2502 = vmatprep.subr.mxu0 0.0
  %2503 = vmatpush1.msra.mxu0 0.0
  %2504 = vmatprep.subr.mxu0 0.0
  %2505 = vmatpush1.msra.mxu0 0.0
  %2506 = vmatprep.subr.mxu0 0.0
  %2507 = vmatpush1.msra.mxu0 0.0
  %2508 = vmatprep.subr.mxu0 0.0
  %2509 = vmatpush1.msra.mxu0 0.0
  %2510 = vmatprep.subr.mxu0 0.0
  %2511 = vmatpush1.msra.mxu0 0.0
  %2512 = vmatprep.subr.mxu0 0.0
  %2513 = vmatpush1.msra.mxu0 0.0
  %2514 = vmatprep.subr.mxu0 0.0
  %2515 = vmatpush1.msra.mxu0 0.0
  %2516 = vmatprep.subr.mxu0 0.0
  %2517 = vmatpush1.msra.mxu0 0.0
  %2518 = vmatprep.subr.mxu0 0.0
  %2519 = vmatpush1.msra.mxu0 0.0
  %2520 = vmatprep.subr.mxu0 0.0
  %2521 = vmatpush1.msra.mxu0 0.0
  %2522 = vmatprep.subr.mxu0 0.0
  %2523 = vmatpush1.msra.mxu0 0.0
  %2524 = vmatprep.subr.mxu0 0.0
  %2525 = vmatpush1.msra.mxu0 0.0
  %2526 = vmatprep.subr.mxu0 0.0
  %2527 = vmatpush1.msra.mxu0 0.0
  %2528 = vmatprep.subr.mxu0 0.0
  %2529 = vmatpush1.msra.mxu0 0.0
  %2530 = vmatprep.subr.mxu0 0.0
  %2531 = vmatpush1.msra.mxu0 0.0
  %2532 = vmatprep.subr.mxu0 0.0
  %2533 = vmatpush1.msra.mxu0 0.0
  %2534 = vmatprep.subr.mxu0 0.0
  %2535 = vmatpush1.msra.mxu0 0.0
  %2536 = vmatprep.subr.mxu0 0.0
  %2537 = vmatpush1.msra.mxu0 0.0
  %2538 = vmatprep.subr.mxu0 0.0
  %2539 = vmatpush1.msra.mxu0 0.0
  %2540 = vmatprep.subr.mxu0 0.0
  %2541 = vmatpush1.msra.mxu0 0.0
  %2542 = vmatprep.subr.mxu0 0.0
  %2543 = vmatpush1.msra.mxu0 0.0
  %2544 = vmatprep.subr.mxu0 0.0
  %2545 = vmatpush1.msra.mxu0 0.0
  %2546 = vmatprep.subr.mxu0 0.0
  %2547 = vmatpush1.msra.mxu0 0.0
  %2548 = vmatprep.subr.mxu0 0.0
  %2549 = vmatpush1.msra.mxu0 0.0
  %2550 = vmatprep.mubr.f32.mxu0 0.0
  %2551 = vmatmul.mubr.f32.gmra.mrb[0].mxu0 %v2484
  %v2552 = vpop.f32.mrb[0].mxu0
  %v2553 = vadd.f32 %v2482, %v2552
  %v2554 = vpop.f32.mrb[0].mxu0
  %2555 = vdwg.mxu0
  %v2556 = vxor.u32 %v2553, 2147483648
  %v2557 = vmul.f32 %v2556, 1.442695
  %v2558 = vpow.pop %v2557
  %v2559 = vadd.f32 %v2558, 1.0
  %v2560 = vrcp.pop %v2559
  %v2561 = vmul.f32 1.0, %v2560
  %2563 = vrot.lane.b32.xlu0 %v2553, 32
  %v2564 = vpop.permute.xlu0 %2563
  %v2566 = vmul.f32 %v2561, %v2564
  %2568 = vrot.lane.b32.xlu0 %v2566, 64
  %v2569 = vpop.permute.xlu0 %2568
  %v2571 = vadd.f32 %v2553, %v2569
  %v2572 = vtanh.pop %v2571
  %v2573 = vsub.f32 1.0, %v2561
  %2575 = vrot.lane.b32.xlu0 %v2572, 96
  %v2576 = vpop.permute.xlu0 %2575
  %v2578 = vmul.f32 %v2573, %v2576
  %v2579 = vmul.f32 %v2561, %v2467
  %v2580 = vadd.f32 %v2578, %v2579
  %v2581 = vmax.f32 %v2580, 0.0
  %v2582 = vmax.f32 %v2581, 0.0
  %2584 = vrot.lane.b32.xlu0 %v2582, 96
  %v2585 = vpop.permute.xlu0 %2584
  %2587 = vmatprep.subr.mxu0 0.0
  %2588 = vmatpush1.msra.mxu0 %v2585
  %2589 = vmatprep.subr.mxu0 0.0
  %2590 = vmatpush1.msra.mxu0 0.0
  %2591 = vmatprep.subr.mxu0 0.0
  %2592 = vmatpush1.msra.mxu0 0.0
  %2593 = vmatprep.subr.mxu0 0.0
  %2594 = vmatpush1.msra.mxu0 0.0
  %2595 = vmatprep.subr.mxu0 0.0
  %2596 = vmatpush1.msra.mxu0 0.0
  %2597 = vmatprep.subr.mxu0 0.0
  %2598 = vmatpush1.msra.mxu0 0.0
  %2599 = vmatprep.subr.mxu0 0.0
  %2600 = vmatpush1.msra.mxu0 0.0
  %2601 = vmatprep.subr.mxu0 0.0
  %2602 = vmatpush1.msra.mxu0 0.0
  %2603 = vmatprep.subr.mxu0 0.0
  %2604 = vmatpush1.msra.mxu0 0.0
  %2605 = vmatprep.subr.mxu0 0.0
  %2606 = vmatpush1.msra.mxu0 0.0
  %2607 = vmatprep.subr.mxu0 0.0
  %2608 = vmatpush1.msra.mxu0 0.0
  %2609 = vmatprep.subr.mxu0 0.0
  %2610 = vmatpush1.msra.mxu0 0.0
  %2611 = vmatprep.subr.mxu0 0.0
  %2612 = vmatpush1.msra.mxu0 0.0
  %2613 = vmatprep.subr.mxu0 0.0
  %2614 = vmatpush1.msra.mxu0 0.0
  %2615 = vmatprep.subr.mxu0 0.0
  %2616 = vmatpush1.msra.mxu0 0.0
  %2617 = vmatprep.subr.mxu0 0.0
  %2618 = vmatpush1.msra.mxu0 0.0
  %2619 = vmatprep.subr.mxu0 0.0
  %2620 = vmatpush1.msra.mxu0 0.0
  %2621 = vmatprep.subr.mxu0 0.0
  %2622 = vmatpush1.msra.mxu0 0.0
  %2623 = vmatprep.subr.mxu0 0.0
  %2624 = vmatpush1.msra.mxu0 0.0
  %2625 = vmatprep.subr.mxu0 0.0
  %2626 = vmatpush1.msra.mxu0 0.0
  %2627 = vmatprep.subr.mxu0 0.0
  %2628 = vmatpush1.msra.mxu0 0.0
  %2629 = vmatprep.subr.mxu0 0.0
  %2630 = vmatpush1.msra.mxu0 0.0
  %2631 = vmatprep.subr.mxu0 0.0
  %2632 = vmatpush1.msra.mxu0 0.0
  %2633 = vmatprep.subr.mxu0 0.0
  %2634 = vmatpush1.msra.mxu0 0.0
  %2635 = vmatprep.subr.mxu0 0.0
  %2636 = vmatpush1.msra.mxu0 0.0
  %2637 = vmatprep.subr.mxu0 0.0
  %2638 = vmatpush1.msra.mxu0 0.0
  %2639 = vmatprep.subr.mxu0 0.0
  %2640 = vmatpush1.msra.mxu0 0.0
  %2641 = vmatprep.subr.mxu0 0.0
  %2642 = vmatpush1.msra.mxu0 0.0
  %2643 = vmatprep.subr.mxu0 0.0
  %2644 = vmatpush1.msra.mxu0 0.0
  %2645 = vmatprep.subr.mxu0 0.0
  %2646 = vmatpush1.msra.mxu0 0.0
  %2647 = vmatprep.subr.mxu0 0.0
  %2648 = vmatpush1.msra.mxu0 0.0
  %2649 = vmatprep.subr.mxu0 0.0
  %2650 = vmatpush1.msra.mxu0 0.0
  %2651 = vmatprep.mubr.f32.mxu0 0.0
  %2652 = vmatmul.mubr.f32.gmra.mrb[0].mxu0 %v2013
  %v2653 = vpop.f32.mrb[0].mxu0
  %v2654 = vadd.f32 0.0, %v2653
  %v2655 = vpop.f32.mrb[0].mxu0
  %2656 = vmatprep.mubr.f32.mxu0 0.0
  %2657 = vmatmul.mubr.f32.gmra.mrb[0].mxu0 %v2016
  %v2658 = vpop.f32.mrb[0].mxu0
  %v2659 = vadd.f32 0.0, %v2658
  %v2660 = vpop.f32.mrb[0].mxu0
  %2661 = vdwg.mxu0
  %v2662 = vsel %vm445, %v2654, %v1896
  %v2663 = vsel %vm445, %v2659, %v1897
  %v2664 = vld [vmem:[%s5 + $0x2c8] sm:$0xff]
  %v2665 = vld [vmem:[%s5 + $0x2d0] sm:$0xff]
  %v2666 = vld [vmem:[%s5 + $0x2d8] sm:$0xff]
  %v2667 = vld [vmem:[%s5 + $0x2e0] sm:$0xff]
  %v2668 = vld [vmem:[%s5 + $0x2e8] sm:$0xff]
  %v2669 = vld [vmem:[%s5 + $0x2f0] sm:$0xff]
  %v2670 = vld [vmem:[%s5 + $0x2f8] sm:$0xff]
  %v2671 = vld [vmem:[%s5 + $0x300] sm:$0xff]
  %v2672 = vld [vmem:[%s5 + $0x2c0] sm:$0x1]
  %v2673 = vlaneseq
  %v2674 = vshrl.u32 %v2673, 7
  %v2675 = vsub.s32 0, %v2674
  %v2676 = vrot.slane %v2672, %v2675
  %v2678 = vsel %vm462, %v2662, 0
  %v2681 = vsel %vm462, %v2663, 0
  %2683 = vmatprep.subr.mxu0 0.0
  %2684 = vmatpush1.msra.mxu0 %v2664
  %2685 = vmatprep.subr.mxu0 0.0
  %2686 = vmatpush1.msra.mxu0 %v2665
  %2687 = vmatprep.subr.mxu0 0.0
  %2688 = vmatpush1.msra.mxu0 %v2666
  %2689 = vmatprep.subr.mxu0 0.0
  %2690 = vmatpush1.msra.mxu0 %v2667
  %2691 = vmatprep.subr.mxu0 0.0
  %2692 = vmatpush1.msra.mxu0 %v2668
  %2693 = vmatprep.subr.mxu0 0.0
  %2694 = vmatpush1.msra.mxu0 %v2669
  %2695 = vmatprep.subr.mxu0 0.0
  %2696 = vmatpush1.msra.mxu0 %v2670
  %2697 = vmatprep.subr.mxu0 0.0
  %2698 = vmatpush1.msra.mxu0 %v2671
  %2699 = vmatprep.subr.mxu0 0.0
  %2700 = vmatpush1.msra.mxu0 0.0
  %2701 = vmatprep.subr.mxu0 0.0
  %2702 = vmatpush1.msra.mxu0 0.0
  %2703 = vmatprep.subr.mxu0 0.0
  %2704 = vmatpush1.msra.mxu0 0.0
  %2705 = vmatprep.subr.mxu0 0.0
  %2706 = vmatpush1.msra.mxu0 0.0
  %2707 = vmatprep.subr.mxu0 0.0
  %2708 = vmatpush1.msra.mxu0 0.0
  %2709 = vmatprep.subr.mxu0 0.0
  %2710 = vmatpush1.msra.mxu0 0.0
  %2711 = vmatprep.subr.mxu0 0.0
  %2712 = vmatpush1.msra.mxu0 0.0
  %2713 = vmatprep.subr.mxu0 0.0
  %2714 = vmatpush1.msra.mxu0 0.0
  %2715 = vmatprep.subr.mxu0 0.0
  %2716 = vmatpush1.msra.mxu0 0.0
  %2717 = vmatprep.subr.mxu0 0.0
  %2718 = vmatpush1.msra.mxu0 0.0
  %2719 = vmatprep.subr.mxu0 0.0
  %2720 = vmatpush1.msra.mxu0 0.0
  %2721 = vmatprep.subr.mxu0 0.0
  %2722 = vmatpush1.msra.mxu0 0.0
  %2723 = vmatprep.subr.mxu0 0.0
  %2724 = vmatpush1.msra.mxu0 0.0
  %2725 = vmatprep.subr.mxu0 0.0
  %2726 = vmatpush1.msra.mxu0 0.0
  %2727 = vmatprep.subr.mxu0 0.0
  %2728 = vmatpush1.msra.mxu0 0.0
  %2729 = vmatprep.subr.mxu0 0.0
  %2730 = vmatpush1.msra.mxu0 0.0
  %2731 = vmatprep.subr.mxu0 0.0
  %2732 = vmatpush1.msra.mxu0 0.0
  %2733 = vmatprep.subr.mxu0 0.0
  %2734 = vmatpush1.msra.mxu0 0.0
  %2735 = vmatprep.subr.mxu0 0.0
  %2736 = vmatpush1.msra.mxu0 0.0
  %2737 = vmatprep.subr.mxu0 0.0
  %2738 = vmatpush1.msra.mxu0 0.0
  %2739 = vmatprep.subr.mxu0 0.0
  %2740 = vmatpush1.msra.mxu0 0.0
  %2741 = vmatprep.subr.mxu0 0.0
  %2742 = vmatpush1.msra.mxu0 0.0
  %2743 = vmatprep.subr.mxu0 0.0
  %2744 = vmatpush1.msra.mxu0 0.0
  %2745 = vmatprep.subr.mxu0 0.0
  %2746 = vmatpush1.msra.mxu0 0.0
  %2747 = vmatprep.mubr.f32.mxu0 0.0
  %2748 = vmatmul.mubr.f32.gmra.mrb[0].mxu0 %v2678
  %v2749 = vpop.f32.mrb[0].mxu0
  %v2750 = vadd.f32 %v2676, %v2749
  %v2751 = vpop.f32.mrb[0].mxu0
  %2752 = vmatprep.mubr.f32.mxu0 0.0
  %2753 = vmatmul.mubr.f32.gmra.mrb[0].mxu0 %v2681
  %v2754 = vpop.f32.mrb[0].mxu0
  %v2755 = vadd.f32 %v2676, %v2754
  %v2756 = vpop.f32.mrb[0].mxu0
  %2757 = vdwg.mxu0
  %vm2758 = vcmp.gt.f32.partialorder %v2750, 0.0
  %vm2759 = vcmp.gt.f32.partialorder %v2755, 0.0
  %v2760 = vmul.f32 %v2750, 0.01
  %v2761 = vmul.f32 %v2755, 0.01
  %v2762 = vsel %vm2758, %v2750, %v2760
  %v2763 = vsel %vm2759, %v2755, %v2761
  %v2764 = vld [vmem:[%s5 + $0x310] sm:$0xff]
  %v2765 = vld [vmem:[%s5 + $0x318] sm:$0xff]
  %v2766 = vld [vmem:[%s5 + $0x320] sm:$0xff]
  %v2767 = vld [vmem:[%s5 + $0x328] sm:$0xff]
  %v2768 = vld [vmem:[%s5 + $0x308] sm:$0x1]
  %v2769 = vlaneseq
  %v2770 = vshrl.u32 %v2769, 7
  %v2771 = vsub.s32 0, %v2770
  %v2772 = vrot.slane %v2768, %v2771
  %2773 = vmatprep.subr.mxu0 0.0
  %2774 = vmatpush1.msra.mxu0 %v2764
  %2775 = vmatprep.subr.mxu0 0.0
  %2776 = vmatpush1.msra.mxu0 %v2765
  %2777 = vmatprep.subr.mxu0 0.0
  %2778 = vmatpush1.msra.mxu0 %v2766
  %2779 = vmatprep.subr.mxu0 0.0
  %2780 = vmatpush1.msra.mxu0 %v2767
  %2781 = vmatprep.subr.mxu0 0.0
  %2782 = vmatpush1.msra.mxu0 0.0
  %2783 = vmatprep.subr.mxu0 0.0
  %2784 = vmatpush1.msra.mxu0 0.0
  %2785 = vmatprep.subr.mxu0 0.0
  %2786 = vmatpush1.msra.mxu0 0.0
  %2787 = vmatprep.subr.mxu0 0.0
  %2788 = vmatpush1.msra.mxu0 0.0
  %2789 = vmatprep.subr.mxu0 0.0
  %2790 = vmatpush1.msra.mxu0 0.0
  %2791 = vmatprep.subr.mxu0 0.0
  %2792 = vmatpush1.msra.mxu0 0.0
  %2793 = vmatprep.subr.mxu0 0.0
  %2794 = vmatpush1.msra.mxu0 0.0
  %2795 = vmatprep.subr.mxu0 0.0
  %2796 = vmatpush1.msra.mxu0 0.0
  %2797 = vmatprep.subr.mxu0 0.0
  %2798 = vmatpush1.msra.mxu0 0.0
  %2799 = vmatprep.subr.mxu0 0.0
  %2800 = vmatpush1.msra.mxu0 0.0
  %2801 = vmatprep.subr.mxu0 0.0
  %2802 = vmatpush1.msra.mxu0 0.0
  %2803 = vmatprep.subr.mxu0 0.0
  %2804 = vmatpush1.msra.mxu0 0.0
  %2805 = vmatprep.subr.mxu0 0.0
  %2806 = vmatpush1.msra.mxu0 0.0
  %2807 = vmatprep.subr.mxu0 0.0
  %2808 = vmatpush1.msra.mxu0 0.0
  %2809 = vmatprep.subr.mxu0 0.0
  %2810 = vmatpush1.msra.mxu0 0.0
  %2811 = vmatprep.subr.mxu0 0.0
  %2812 = vmatpush1.msra.mxu0 0.0
  %2813 = vmatprep.subr.mxu0 0.0
  %2814 = vmatpush1.msra.mxu0 0.0
  %2815 = vmatprep.subr.mxu0 0.0
  %2816 = vmatpush1.msra.mxu0 0.0
  %2817 = vmatprep.subr.mxu0 0.0
  %2818 = vmatpush1.msra.mxu0 0.0
  %2819 = vmatprep.subr.mxu0 0.0
  %2820 = vmatpush1.msra.mxu0 0.0
  %2821 = vmatprep.subr.mxu0 0.0
  %2822 = vmatpush1.msra.mxu0 0.0
  %2823 = vmatprep.subr.mxu0 0.0
  %2824 = vmatpush1.msra.mxu0 0.0
  %2825 = vmatprep.subr.mxu0 0.0
  %2826 = vmatpush1.msra.mxu0 0.0
  %2827 = vmatprep.subr.mxu0 0.0
  %2828 = vmatpush1.msra.mxu0 0.0
  %2829 = vmatprep.subr.mxu0 0.0
  %2830 = vmatpush1.msra.mxu0 0.0
  %2831 = vmatprep.subr.mxu0 0.0
  %2832 = vmatpush1.msra.mxu0 0.0
  %2833 = vmatprep.subr.mxu0 0.0
  %2834 = vmatpush1.msra.mxu0 0.0
  %2835 = vmatprep.subr.mxu0 0.0
  %2836 = vmatpush1.msra.mxu0 0.0
  %2837 = vmatprep.mubr.f32.mxu0 0.0
  %2838 = vmatmul.mubr.f32.gmra.mrb[0].mxu0 %v2204
  %v2839 = vpop.f32.mrb[0].mxu0
  %v2840 = vadd.f32 %v2772, %v2839
  %v2841 = vpop.f32.mrb[0].mxu0
  %2842 = vmatprep.mubr.f32.mxu0 0.0
  %2843 = vmatmul.mubr.f32.gmra.mrb[0].mxu0 %v2206
  %v2844 = vpop.f32.mrb[0].mxu0
  %v2845 = vadd.f32 %v2772, %v2844
  %v2846 = vpop.f32.mrb[0].mxu0
  %2847 = vdwg.mxu0
  %v2848 = vsel %vm656, %v2762, -inf
  %v2849 = vsel %vm656, %v2763, -inf
  %v2850 = vmax.f32 %v2848, %v2849
  %v2851 = vrot.slane %v2850, 4
  %v2852 = vmax.f32 %v2850, %v2851
  %v2853 = vrot.slane %v2852, 2
  %v2854 = vmax.f32 %v2852, %v2853
  %v2855 = vrot.slane %v2854, 1
  %v2856 = vmax.f32 %v2854, %v2855
  %v2857 = vsub.f32 %v2762, %v2856
  %v2858 = vsub.f32 %v2763, %v2856
  %v2859 = vmul.f32 %v2857, 1.442695
  %v2860 = vpow.pop %v2859
  %v2861 = vmul.f32 %v2858, 1.442695
  %v2862 = vpow.pop %v2861
  %2864 = vset.pattern.permute.xlu0 0
  %2865 = vperm.xlu0 %2864, %v2860
  %v2866 = vpop.permute.xlu0 %2865
  %2869 = vset.pattern.permute.xlu0 0
  %2870 = vperm.xlu0 %2869, %v2862
  %v2871 = vpop.permute.xlu0 %2870
  %v2873 = vmul.f32 %v2866, %v2840
  %v2874 = vmul.f32 %v2871, %v2845
  %2875 = vmatprep.subr.mxu0 0.0
  %2876 = vmatpush1.msra.mxu0 %v2873
  %2877 = vmatprep.subr.mxu0 0.0
  %2878 = vmatpush1.msra.mxu0 %v2874
  %2879 = vmatprep.subr.mxu0 0.0
  %2880 = vmatpush1.msra.mxu0 0.0
  %2881 = vmatprep.subr.mxu0 0.0
  %2882 = vmatpush1.msra.mxu0 0.0
  %2883 = vmatprep.subr.mxu0 0.0
  %2884 = vmatpush1.msra.mxu0 0.0
  %2885 = vmatprep.subr.mxu0 0.0
  %2886 = vmatpush1.msra.mxu0 0.0
  %2887 = vmatprep.subr.mxu0 0.0
  %2888 = vmatpush1.msra.mxu0 0.0
  %2889 = vmatprep.subr.mxu0 0.0
  %2890 = vmatpush1.msra.mxu0 0.0
  %2891 = vmatprep.subr.mxu0 0.0
  %2892 = vmatpush1.msra.mxu0 0.0
  %2893 = vmatprep.subr.mxu0 0.0
  %2894 = vmatpush1.msra.mxu0 0.0
  %2895 = vmatprep.subr.mxu0 0.0
  %2896 = vmatpush1.msra.mxu0 0.0
  %2897 = vmatprep.subr.mxu0 0.0
  %2898 = vmatpush1.msra.mxu0 0.0
  %2899 = vmatprep.subr.mxu0 0.0
  %2900 = vmatpush1.msra.mxu0 0.0
  %2901 = vmatprep.subr.mxu0 0.0
  %2902 = vmatpush1.msra.mxu0 0.0
  %2903 = vmatprep.subr.mxu0 0.0
  %2904 = vmatpush1.msra.mxu0 0.0
  %2905 = vmatprep.subr.mxu0 0.0
  %2906 = vmatpush1.msra.mxu0 0.0
  %2907 = vmatprep.subr.mxu0 0.0
  %2908 = vmatpush1.msra.mxu0 0.0
  %2909 = vmatprep.subr.mxu0 0.0
  %2910 = vmatpush1.msra.mxu0 0.0
  %2911 = vmatprep.subr.mxu0 0.0
  %2912 = vmatpush1.msra.mxu0 0.0
  %2913 = vmatprep.subr.mxu0 0.0
  %2914 = vmatpush1.msra.mxu0 0.0
  %2915 = vmatprep.subr.mxu0 0.0
  %2916 = vmatpush1.msra.mxu0 0.0
  %2917 = vmatprep.subr.mxu0 0.0
  %2918 = vmatpush1.msra.mxu0 0.0
  %2919 = vmatprep.subr.mxu0 0.0
  %2920 = vmatpush1.msra.mxu0 0.0
  %2921 = vmatprep.subr.mxu0 0.0
  %2922 = vmatpush1.msra.mxu0 0.0
  %2923 = vmatprep.subr.mxu0 0.0
  %2924 = vmatpush1.msra.mxu0 0.0
  %2925 = vmatprep.subr.mxu0 0.0
  %2926 = vmatpush1.msra.mxu0 0.0
  %2927 = vmatprep.subr.mxu0 0.0
  %2928 = vmatpush1.msra.mxu0 0.0
  %2929 = vmatprep.subr.mxu0 0.0
  %2930 = vmatpush1.msra.mxu0 0.0
  %2931 = vmatprep.subr.mxu0 0.0
  %2932 = vmatpush1.msra.mxu0 0.0
  %2933 = vmatprep.subr.mxu0 0.0
  %2934 = vmatpush1.msra.mxu0 0.0
  %2935 = vmatprep.subr.mxu0 0.0
  %2936 = vmatpush1.msra.mxu0 0.0
  %2937 = vmatprep.subr.mxu0 0.0
  %2938 = vmatpush1.msra.mxu0 0.0
  %2939 = vmatprep.mubr.f32.mxu0 0.0
  %2940 = vmatmul.mubr.f32.gmra.mrb[0].mxu0 %v1907
  %v2941 = vpop.f32.mrb[0].mxu0
  %v2942 = vadd.f32 0.0, %v2941
  %v2943 = vpop.f32.mrb[0].mxu0
  %2944 = vdwg.mxu0
  %2945 = vmatprep.subr.mxu0 0.0
  %2946 = vmatpush1.msra.mxu0 %v2860
  %2947 = vmatprep.subr.mxu0 0.0
  %2948 = vmatpush1.msra.mxu0 %v2862
  %2949 = vmatprep.subr.mxu0 0.0
  %2950 = vmatpush1.msra.mxu0 0.0
  %2951 = vmatprep.subr.mxu0 0.0
  %2952 = vmatpush1.msra.mxu0 0.0
  %2953 = vmatprep.subr.mxu0 0.0
  %2954 = vmatpush1.msra.mxu0 0.0
  %2955 = vmatprep.subr.mxu0 0.0
  %2956 = vmatpush1.msra.mxu0 0.0
  %2957 = vmatprep.subr.mxu0 0.0
  %2958 = vmatpush1.msra.mxu0 0.0
  %2959 = vmatprep.subr.mxu0 0.0
  %2960 = vmatpush1.msra.mxu0 0.0
  %2961 = vmatprep.subr.mxu0 0.0
  %2962 = vmatpush1.msra.mxu0 0.0
  %2963 = vmatprep.subr.mxu0 0.0
  %2964 = vmatpush1.msra.mxu0 0.0
  %2965 = vmatprep.subr.mxu0 0.0
  %2966 = vmatpush1.msra.mxu0 0.0
  %2967 = vmatprep.subr.mxu0 0.0
  %2968 = vmatpush1.msra.mxu0 0.0
  %2969 = vmatprep.subr.mxu0 0.0
  %2970 = vmatpush1.msra.mxu0 0.0
  %2971 = vmatprep.subr.mxu0 0.0
  %2972 = vmatpush1.msra.mxu0 0.0
  %2973 = vmatprep.subr.mxu0 0.0
  %2974 = vmatpush1.msra.mxu0 0.0
  %2975 = vmatprep.subr.mxu0 0.0
  %2976 = vmatpush1.msra.mxu0 0.0
  %2977 = vmatprep.subr.mxu0 0.0
  %2978 = vmatpush1.msra.mxu0 0.0
  %2979 = vmatprep.subr.mxu0 0.0
  %2980 = vmatpush1.msra.mxu0 0.0
  %2981 = vmatprep.subr.mxu0 0.0
  %2982 = vmatpush1.msra.mxu0 0.0
  %2983 = vmatprep.subr.mxu0 0.0
  %2984 = vmatpush1.msra.mxu0 0.0
  %2985 = vmatprep.subr.mxu0 0.0
  %2986 = vmatpush1.msra.mxu0 0.0
  %2987 = vmatprep.subr.mxu0 0.0
  %2988 = vmatpush1.msra.mxu0 0.0
  %2989 = vmatprep.subr.mxu0 0.0
  %2990 = vmatpush1.msra.mxu0 0.0
  %2991 = vmatprep.subr.mxu0 0.0
  %2992 = vmatpush1.msra.mxu0 0.0
  %2993 = vmatprep.subr.mxu0 0.0
  %2994 = vmatpush1.msra.mxu0 0.0
  %2995 = vmatprep.subr.mxu0 0.0
  %2996 = vmatpush1.msra.mxu0 0.0
  %2997 = vmatprep.subr.mxu0 0.0
  %2998 = vmatpush1.msra.mxu0 0.0
  %2999 = vmatprep.subr.mxu0 0.0
  %3000 = vmatpush1.msra.mxu0 0.0
  %3001 = vmatprep.subr.mxu0 0.0
  %3002 = vmatpush1.msra.mxu0 0.0
  %3003 = vmatprep.subr.mxu0 0.0
  %3004 = vmatpush1.msra.mxu0 0.0
  %3005 = vmatprep.subr.mxu0 0.0
  %3006 = vmatpush1.msra.mxu0 0.0
  %3007 = vmatprep.subr.mxu0 0.0
  %3008 = vmatpush1.msra.mxu0 0.0
  %3009 = vmatprep.mubr.f32.mxu0 0.0
  %3010 = vmatmul.mubr.f32.gmra.mrb[0].mxu0 %v1907
  %v3011 = vpop.f32.mrb[0].mxu0
  %v3012 = vadd.f32 0.0, %v3011
  %v3013 = vpop.f32.mrb[0].mxu0
  %3014 = vdwg.mxu0
  %vm3015 = vcmp.gt.f32.partialorder %v3012, 0.0
  %v3016 = vsel %vm3015, %v3012, 1.0
  %v3017 = vrcp.pop %v3016
  %3019 = vset.pattern.permute.xlu0 0
  %3020 = vperm.xlu0 %3019, %v3017
  %v3021 = vpop.permute.xlu0 %3020
  %v3023 = vmul.f32 %v2942, %v3021
  %vm3024 = vcmp.gt.f32.partialorder %v3023, 0.0
  %v3025 = vmin.f32 %v3023, 0.0
  %v3026 = vmul.f32 %v3025, 1.442695
  %v3027 = vpow.pop %v3026
  %v3028 = vsub.f32 %v3027, 1.0
  %v3029 = vsel %vm3024, %v3023, %v3028
  %v3030 = vsel %vm445, %v3029, %v2581
  %v3031 = vld [vmem:[%s5 + $0x280] sm:$0xff]
  %v3032 = vld [vmem:[%s5 + $0x288] sm:$0xff]
  %v3033 = vld [vmem:[%s5 + $0x290] sm:$0xff]
  %v3034 = vld [vmem:[%s5 + $0x298] sm:$0xff]
  %v3035 = vld [vmem:[%s5 + $0x2a0] sm:$0xff]
  %v3036 = vld [vmem:[%s5 + $0x2a8] sm:$0xff]
  %v3037 = vld [vmem:[%s5 + $0x2b0] sm:$0xff]
  %v3038 = vld [vmem:[%s5 + $0x2b8] sm:$0xff]
  %v3039 = vld [vmem:[%s5 + $0x278] sm:$0x1]
  %v3040 = vlaneseq
  %v3041 = vshrl.u32 %v3040, 7
  %v3042 = vsub.s32 0, %v3041
  %v3043 = vrot.slane %v3039, %v3042
  %v3045 = vsel %vm462, %v3030, 0
  %3047 = vmatprep.subr.mxu0 0.0
  %3048 = vmatpush1.msra.mxu0 %v3031
  %3049 = vmatprep.subr.mxu0 0.0
  %3050 = vmatpush1.msra.mxu0 %v3032
  %3051 = vmatprep.subr.mxu0 0.0
  %3052 = vmatpush1.msra.mxu0 %v3033
  %3053 = vmatprep.subr.mxu0 0.0
  %3054 = vmatpush1.msra.mxu0 %v3034
  %3055 = vmatprep.subr.mxu0 0.0
  %3056 = vmatpush1.msra.mxu0 %v3035
  %3057 = vmatprep.subr.mxu0 0.0
  %3058 = vmatpush1.msra.mxu0 %v3036
  %3059 = vmatprep.subr.mxu0 0.0
  %3060 = vmatpush1.msra.mxu0 %v3037
  %3061 = vmatprep.subr.mxu0 0.0
  %3062 = vmatpush1.msra.mxu0 %v3038
  %3063 = vmatprep.subr.mxu0 0.0
  %3064 = vmatpush1.msra.mxu0 0.0
  %3065 = vmatprep.subr.mxu0 0.0
  %3066 = vmatpush1.msra.mxu0 0.0
  %3067 = vmatprep.subr.mxu0 0.0
  %3068 = vmatpush1.msra.mxu0 0.0
  %3069 = vmatprep.subr.mxu0 0.0
  %3070 = vmatpush1.msra.mxu0 0.0
  %3071 = vmatprep.subr.mxu0 0.0
  %3072 = vmatpush1.msra.mxu0 0.0
  %3073 = vmatprep.subr.mxu0 0.0
  %3074 = vmatpush1.msra.mxu0 0.0
  %3075 = vmatprep.subr.mxu0 0.0
  %3076 = vmatpush1.msra.mxu0 0.0
  %3077 = vmatprep.subr.mxu0 0.0
  %3078 = vmatpush1.msra.mxu0 0.0
  %3079 = vmatprep.subr.mxu0 0.0
  %3080 = vmatpush1.msra.mxu0 0.0
  %3081 = vmatprep.subr.mxu0 0.0
  %3082 = vmatpush1.msra.mxu0 0.0
  %3083 = vmatprep.subr.mxu0 0.0
  %3084 = vmatpush1.msra.mxu0 0.0
  %3085 = vmatprep.subr.mxu0 0.0
  %3086 = vmatpush1.msra.mxu0 0.0
  %3087 = vmatprep.subr.mxu0 0.0
  %3088 = vmatpush1.msra.mxu0 0.0
  %3089 = vmatprep.subr.mxu0 0.0
  %3090 = vmatpush1.msra.mxu0 0.0
  %3091 = vmatprep.subr.mxu0 0.0
  %3092 = vmatpush1.msra.mxu0 0.0
  %3093 = vmatprep.subr.mxu0 0.0
  %3094 = vmatpush1.msra.mxu0 0.0
  %3095 = vmatprep.subr.mxu0 0.0
  %3096 = vmatpush1.msra.mxu0 0.0
  %3097 = vmatprep.subr.mxu0 0.0
  %3098 = vmatpush1.msra.mxu0 0.0
  %3099 = vmatprep.subr.mxu0 0.0
  %3100 = vmatpush1.msra.mxu0 0.0
  %3101 = vmatprep.subr.mxu0 0.0
  %3102 = vmatpush1.msra.mxu0 0.0
  %3103 = vmatprep.subr.mxu0 0.0
  %3104 = vmatpush1.msra.mxu0 0.0
  %3105 = vmatprep.subr.mxu0 0.0
  %3106 = vmatpush1.msra.mxu0 0.0
  %3107 = vmatprep.subr.mxu0 0.0
  %3108 = vmatpush1.msra.mxu0 0.0
  %3109 = vmatprep.subr.mxu0 0.0
  %3110 = vmatpush1.msra.mxu0 0.0
  %3111 = vmatprep.mubr.f32.mxu0 0.0
  %3112 = vmatmul.mubr.f32.gmra.mrb[0].mxu0 %v3045
  %v3113 = vpop.f32.mrb[0].mxu0
  %v3114 = vadd.f32 %v3043, %v3113
  %v3115 = vpop.f32.mrb[0].mxu0
  %3116 = vdwg.mxu0
  %v3117 = vxor.u32 %v3114, 2147483648
  %v3118 = vmul.f32 %v3117, 1.442695
  %v3119 = vpow.pop %v3118
  %v3120 = vadd.f32 %v3119, 1.0
  %v3121 = vrcp.pop %v3120
  %v3122 = vmul.f32 1.0, %v3121
  %3124 = vrot.lane.b32.xlu0 %v3114, 32
  %v3125 = vpop.permute.xlu0 %3124
  %v3127 = vmul.f32 %v3122, %v3125
  %3129 = vrot.lane.b32.xlu0 %v3127, 64
  %v3130 = vpop.permute.xlu0 %3129
  %v3132 = vadd.f32 %v3114, %v3130
  %v3133 = vtanh.pop %v3132
  %v3134 = vsub.f32 1.0, %v3122
  %3136 = vrot.lane.b32.xlu0 %v3133, 96
  %v3137 = vpop.permute.xlu0 %3136
  %v3139 = vmul.f32 %v3134, %v3137
  %v3140 = vmul.f32 %v3122, %v2581
  %v3141 = vadd.f32 %v3139, %v3140
  %v3142 = vmax.f32 %v3141, 0.0
  %v3143 = vld [vmem:[%s5 + $0x1a0] sm:$0xff]
  %v3144 = vld [vmem:[%s5 + $0x1a8] sm:$0xff]
  %v3145 = vld [vmem:[%s5 + $0x1b0] sm:$0xff]
  %v3146 = vld [vmem:[%s5 + $0x1b8] sm:$0xff]
  %v3147 = vld [vmem:[%s5 + $0x198] sm:$0x1]
  %v3148 = vlaneseq
  %v3149 = vshrl.u32 %v3148, 7
  %v3150 = vsub.s32 0, %v3149
  %v3151 = vrot.slane %v3147, %v3150
  %3153 = vrot.lane.b32.xlu0 %v3142, 96
  %v3154 = vpop.permute.xlu0 %3153
  %v3155 = vsel %vm445, %v3154, 0
  %3157 = vmatprep.subr.mxu0 0.0
  %3158 = vmatpush1.msra.mxu0 %v3143
  %3159 = vmatprep.subr.mxu0 0.0
  %3160 = vmatpush1.msra.mxu0 %v3144
  %3161 = vmatprep.subr.mxu0 0.0
  %3162 = vmatpush1.msra.mxu0 %v3145
  %3163 = vmatprep.subr.mxu0 0.0
  %3164 = vmatpush1.msra.mxu0 %v3146
  %3165 = vmatprep.subr.mxu0 0.0
  %3166 = vmatpush1.msra.mxu0 0.0
  %3167 = vmatprep.subr.mxu0 0.0
  %3168 = vmatpush1.msra.mxu0 0.0
  %3169 = vmatprep.subr.mxu0 0.0
  %3170 = vmatpush1.msra.mxu0 0.0
  %3171 = vmatprep.subr.mxu0 0.0
  %3172 = vmatpush1.msra.mxu0 0.0
  %3173 = vmatprep.subr.mxu0 0.0
  %3174 = vmatpush1.msra.mxu0 0.0
  %3175 = vmatprep.subr.mxu0 0.0
  %3176 = vmatpush1.msra.mxu0 0.0
  %3177 = vmatprep.subr.mxu0 0.0
  %3178 = vmatpush1.msra.mxu0 0.0
  %3179 = vmatprep.subr.mxu0 0.0
  %3180 = vmatpush1.msra.mxu0 0.0
  %3181 = vmatprep.subr.mxu0 0.0
  %3182 = vmatpush1.msra.mxu0 0.0
  %3183 = vmatprep.subr.mxu0 0.0
  %3184 = vmatpush1.msra.mxu0 0.0
  %3185 = vmatprep.subr.mxu0 0.0
  %3186 = vmatpush1.msra.mxu0 0.0
  %3187 = vmatprep.subr.mxu0 0.0
  %3188 = vmatpush1.msra.mxu0 0.0
  %3189 = vmatprep.subr.mxu0 0.0
  %3190 = vmatpush1.msra.mxu0 0.0
  %3191 = vmatprep.subr.mxu0 0.0
  %3192 = vmatpush1.msra.mxu0 0.0
  %3193 = vmatprep.subr.mxu0 0.0
  %3194 = vmatpush1.msra.mxu0 0.0
  %3195 = vmatprep.subr.mxu0 0.0
  %3196 = vmatpush1.msra.mxu0 0.0
  %3197 = vmatprep.subr.mxu0 0.0
  %3198 = vmatpush1.msra.mxu0 0.0
  %3199 = vmatprep.subr.mxu0 0.0
  %3200 = vmatpush1.msra.mxu0 0.0
  %3201 = vmatprep.subr.mxu0 0.0
  %3202 = vmatpush1.msra.mxu0 0.0
  %3203 = vmatprep.subr.mxu0 0.0
  %3204 = vmatpush1.msra.mxu0 0.0
  %3205 = vmatprep.subr.mxu0 0.0
  %3206 = vmatpush1.msra.mxu0 0.0
  %3207 = vmatprep.subr.mxu0 0.0
  %3208 = vmatpush1.msra.mxu0 0.0
  %3209 = vmatprep.subr.mxu0 0.0
  %3210 = vmatpush1.msra.mxu0 0.0
  %3211 = vmatprep.subr.mxu0 0.0
  %3212 = vmatpush1.msra.mxu0 0.0
  %3213 = vmatprep.subr.mxu0 0.0
  %3214 = vmatpush1.msra.mxu0 0.0
  %3215 = vmatprep.subr.mxu0 0.0
  %3216 = vmatpush1.msra.mxu0 0.0
  %3217 = vmatprep.subr.mxu0 0.0
  %3218 = vmatpush1.msra.mxu0 0.0
  %3219 = vmatprep.subr.mxu0 0.0
  %3220 = vmatpush1.msra.mxu0 0.0
  %3221 = vmatprep.mubr.f32.mxu0 0.0
  %3222 = vmatmul.mubr.f32.gmra.mrb[0].mxu0 %v3155
  %v3223 = vpop.f32.mrb[0].mxu0
  %v3224 = vadd.f32 %v3151, %v3223
  %v3225 = vpop.f32.mrb[0].mxu0
  %3226 = vdwg.mxu0
  %3227 = vst.msk [vmem:[%s6] sm:$0xff] %vm656, %v3224
  // Predicated region
  $region26: #{attentivefp_forward.1} parent=0 // pred_check
    _
  $region27: #{attentivefp_forward.1} parent=0 // pred_check_branch
    %3229 = sbr.rel (0) target = $region29
  $region28: #{attentivefp_forward.1} parent=0 // pred_region
    _
  $region29: #{attentivefp_forward.1} parent=0 // pred_fallthru
    _
  // Predicated region
  $region30: #{attentivefp_forward.1} parent=0 // pred_check
    _
  $region31: #{attentivefp_forward.1} parent=0 // pred_check_branch
    %3231 = sbr.rel (0) target = $region33
  $region32: #{attentivefp_forward.1} parent=0 // pred_region
    _
  $region33: #{attentivefp_forward.1} parent=0 // pred_fallthru
    _

</llo_original>
